<compile_context>
chip_gen: v7x
topology: tpu7x:2x2x1
jax: 0.10.0
libtpu: 0.0.40
codegen_flags: <defaults>
</compile_context>

<pallas_src>
import jax
import jax.numpy as jnp
from jax import lax
from jax.experimental import pallas as pl
from jax.experimental.pallas import tpu as pltpu

_LANE = 128


# ----------------------------------------------------------------------------- kernels
def _sir_kernel_shared(pb_ref, pg_ref, mob_ref, mobT_ref, sir_ref, out_ref):
    """Shared (2-D) mobility: one VMEM-resident (N, N) tile reused every step."""
    pb = pb_ref[:, 0, :]                       # (TB, N)
    pg = pg_ref[:, 0, :]
    S = sir_ref[:, 0, :]
    I = sir_ref[:, 1, :]
    R = sir_ref[:, 2, :]

    pop = S + I + R
    inv_pop = pl.reciprocal(pop)               # exact; one reciprocal, two muls
    X = I * inv_pop                            # I_i / pop_i

    f32 = jnp.float32
    hi = lax.Precision.HIGHEST
    # TODO(synk): evaluate DEFAULT / bf16 inputs (3-6x fewer MXU passes) once the
    # accuracy budget is relaxed below the rtol=1e-5 used by the test below.
    mob = mob_ref[0]                           # (N, N)
    mobT = mobT_ref[0]                         # (N, N) == mob.T, precomputed

    # term1[b, j] = sum_i mob[i, j] * I[b, i] / pop[b, i]        -> X @ mob
    term1 = lax.dot_general(X, mob, (((1,), (0,)), ((), ())),
                            precision=hi, preferred_element_type=f32)
    # term2[b, i] = (1 / pop[b, i]) * sum_j mob[i, j] * I[b, j]  -> (I @ mob^T) / pop
    term2 = lax.dot_general(I, mobT, (((1,), (0,)), ((), ())),
                            precision=hi, preferred_element_type=f32) * inv_pop

    I_new = pb * (term1 + term2)
    Ig = I * pg

    # One lane-dense (TB, 4, N) slab -> a single writeback DMA per grid step.
    out_ref[:, 0, :] = I_new
    out_ref[:, 1, :] = S - I_new
    out_ref[:, 2, :] = I + I_new - Ig
    out_ref[:, 3, :] = Ig + R


def _sir_kernel_batched(pb_ref, pg_ref, mob_ref, sir_ref, out_ref):
    """Batched (3-D) mobility: HBM-bound on mob; (TB, N, N) block per step."""
    pb = pb_ref[:, 0, :]
    pg = pg_ref[:, 0, :]
    S = sir_ref[:, 0, :]
    I = sir_ref[:, 1, :]
    R = sir_ref[:, 2, :]

    pop = S + I + R
    inv_pop = pl.reciprocal(pop)
    X = I * inv_pop

    f32 = jnp.float32
    hi = lax.Precision.HIGHEST
    mob = mob_ref[...]                         # (TB, N, N)
    # term1[b, j] = sum_i mob[b, i, j] * I[b, i] / pop[b, i]
    term1 = lax.dot_general(X, mob, (((1,), (1,)), ((0,), (0,))),
                            precision=hi, preferred_element_type=f32)
    # term2[b, i] = (1 / pop[b, i]) * sum_j mob[b, i, j] * I[b, j]
    term2 = lax.dot_general(I, mob, (((1,), (2,)), ((0,), (0,))),
                            precision=hi, preferred_element_type=f32) * inv_pop

    I_new = pb * (term1 + term2)
    Ig = I * pg

    out_ref[:, 0, :] = I_new
    out_ref[:, 1, :] = S - I_new
    out_ref[:, 2, :] = I + I_new - Ig
    out_ref[:, 3, :] = Ig + R


# ----------------------------------------------------------------------------- sizing
def _tpu_info():
    """(vmem_capacity_bytes, dual_tensorcore) with safe fallbacks."""
    vmem_cap = 128 * 1024 * 1024
    dual_tc = False
    try:
        vmem_cap = int(pltpu.get_tpu_info().vmem_capacity_bytes)
    except Exception:
        pass
    try:
        kind = jax.devices()[0].device_kind.lower()
        # Chips whose two TensorCores are presented as one device (megacore / v7x).
        dual_tc = any(t in kind for t in ("v4", "v5p", "v7"))
    except Exception:
        pass
    return vmem_cap, dual_tc


def _choose_tb(B, Np, mob_batched, vmem_cap, dual_tc):
    """Largest batch block fitting ~45% of VMEM (leaves compiler headroom)."""
    # Per-batch-row pipelined bytes (f32, double-buffered): pb + pg + SIR(3) + out(4).
    row = 4 * 9 * Np * 2
    resident = 0
    if mob_batched:
        row += 4 * Np * Np * 2                 # batched mob travels with the block
    else:
        resident = 2 * 4 * Np * Np             # mob + mob^T resident once
    budget = int(vmem_cap * 0.45) - resident
    tb = max(1, min(B, budget // max(1, row)))
    if dual_tc and B >= 2:
        # Keep >= 2 grid blocks so dimension_semantics=("parallel",) shards the
        # batch across both TensorCores. Skipped on 1-TC chips (v5e/v6e).
        tb = min(tb, pl.cdiv(B, 2))
    return int(tb)


# ----------------------------------------------------------------------------- wrapper
def sir_cell(param_b, param_g, mob, SIR, *, tb=None):
    """Pallas implementation of SIRcell.forward. Returns (B, N, 4) float32."""
    B, N, _ = SIR.shape
    mob = jnp.asarray(mob, jnp.float32)
    mob_batched = mob.ndim == 3

    vmem_cap, dual_tc = _tpu_info()

    # Pad nodes to a multiple of 128 lanes: lane-dense loads/stores, full MXU tiles.
    Np = N if N % _LANE == 0 else (N // _LANE + 1) * _LANE

    if tb is None:
        tb = _choose_tb(B, Np, mob_batched, vmem_cap, dual_tc)
    tb = max(1, min(int(tb), B))
    grid_b = pl.cdiv(B, tb)
    Bp = grid_b * tb                            # batch padded to a block multiple

    # ---- build padded, lane-major (node-minor) inputs ----------------------
    pb2 = jnp.asarray(param_b, jnp.float32).reshape(B, N)
    pg2 = jnp.asarray(param_g, jnp.float32).reshape(B, N)
    SIR_t = jnp.swapaxes(jnp.asarray(SIR, jnp.float32), 1, 2)   # (B, 3, N)
    # TODO(synk): have the upstream producer emit (B, 3, N) directly to avoid this
    # extra HBM transpose pass.

    def _pad_rows(x2):                          # (B, N) -> (Bp, 1, Np), zero fill
        if (B, N) == (Bp, Np):
            return x2[:, None, :]
        out = jnp.zeros((Bp, Np), jnp.float32).at[:B, :N].set(x2)
        return out[:, None, :]

    pb_in = _pad_rows(pb2)
    pg_in = _pad_rows(pg2)

    if (B, N) == (Bp, Np):
        sir_in = SIR_t
    else:
        # Padded positions get S=1, I=R=0 -> pop=1, X=0 -> no NaNs and zero
        # contribution to the real nodes (mob is zero-padded).
        base = jnp.zeros((Bp, 3, Np), jnp.float32).at[:, 0, :].set(1.0)
        sir_in = base.at[:B, :, :N].set(SIR_t)

    if mob_batched:
        if (B, N) == (Bp, Np):
            mob_in = mob
        else:
            mob_in = jnp.zeros((Bp, Np, Np), jnp.float32).at[:B, :N, :N].set(mob)
        mobT_in = None
    else:
        mob_p = mob if N == Np else jnp.zeros((Np, Np), jnp.float32).at[:N, :N].set(mob)
        mob_in = mob_p[None]                     # (1, Np, Np) shared tile
        mobT_in = jnp.swapaxes(mob_p, 0, 1)[None]  # precomputed transpose

    # ---- VMEM budget / limit -------------------------------------------------
    pipelined = tb * 4 * 9 * Np * 2              # pb, pg, SIR, out (double-buffered)
    if mob_batched:
        pipelined += tb * 4 * Np * Np * 2
        resident = 0
    else:
        resident = 2 * 4 * Np * Np               # mob + mob^T, resident once
    vmem_needed = pipelined + resident + (2 << 20)
    vmem_limit = int(max(16 << 20, min(vmem_needed, vmem_cap - (8 << 20))))
    # TODO(synk): K-tile the NxN mob (extra "arbitrary" grid axis + f32 accumulator
    # scratch) once 2*N^2*4 bytes exceeds the VMEM budget (N >~ 3-4k on v7x).

    row_spec = pl.BlockSpec((tb, 1, Np), lambda b: (b, 0, 0))
    sir_spec = pl.BlockSpec((tb, 3, Np), lambda b: (b, 0, 0))
    out_spec = pl.BlockSpec((tb, 4, Np), lambda b: (b, 0, 0))
    out_shape = jax.ShapeDtypeStruct((Bp, 4, Np), jnp.float32)
    cparams = pltpu.CompilerParams(dimension_semantics=("parallel",),
                                   vmem_limit_bytes=vmem_limit)

    if mob_batched:
        mob_spec = pl.BlockSpec((tb, Np, Np), lambda b: (b, 0, 0))
        out = pl.pallas_call(
            _sir_kernel_batched,
            out_shape=out_shape,
            grid_spec=pltpu.PrefetchScalarGridSpec(
                num_scalar_prefetch=0,
                grid=(grid_b,),
                in_specs=[row_spec, row_spec, mob_spec, sir_spec],
                out_specs=out_spec),
            compiler_params=cparams,
        )(pb_in, pg_in, mob_in, sir_in)
    else:
        def _run(single_buffer):
            if single_buffer:
                # Grid-invariant tile: one buffer is enough (saves N^2*4 B of VMEM).
                inv_spec = pl.BlockSpec((1, Np, Np), lambda b: (0, 0, 0),
                                        pipeline_mode=pl.Buffered(1))
            else:
                # Index map is constant either way, so the tile is DMA'd only once;
                # this path merely keeps the default double buffer.
                inv_spec = pl.BlockSpec((1, Np, Np), lambda b: (0, 0, 0))
            return pl.pallas_call(
                _sir_kernel_shared,
                out_shape=out_shape,
                grid_spec=pltpu.PrefetchScalarGridSpec(
                    num_scalar_prefetch=0,
                    grid=(grid_b,),
                    in_specs=[row_spec, row_spec, inv_spec, inv_spec, sir_spec],
                    out_specs=out_spec),
                compiler_params=cparams,
            )(pb_in, pg_in, mob_in, mobT_in, sir_in)

        try:
            out = _run(single_buffer=True)
        except Exception:
            # Fallback for Pallas versions that reject pipeline_mode=Buffered(1).
            out = _run(single_buffer=False)

    # (Bp, 4, Np) -> (B, N, 4), channel order [I_new, S_t, I_t, R_t].
    return jnp.swapaxes(out, 1, 2)[:B, :N, :]


# ----------------------------------------------------------------------------- reference
def sir_cell_ref(param_b, param_g, mob, SIR):
    """Pure-JAX reference mirroring the PyTorch code."""
    B, N, _ = SIR.shape
    if mob.ndim == 2:
        mob = jnp.broadcast_to(mob[None, :, :], (B, N, N))
    S = SIR[..., 0:1]
    I = SIR[..., 1:2]
    R = SIR[..., 2:3]
    pop = jnp.broadcast_to(S + I + R, (B, N, N))            # pop[b,i,j] = pop_i
    I_exp = jnp.broadcast_to(I, (B, N, N))                  # I_exp[b,i,j] = I_i
    prop = (mob / pop * I_exp).sum(1) + \
           (mob / pop * jnp.swapaxes(I_exp, 1, 2)).sum(2)
    prop = prop[..., None]
    I_new = param_b * prop
    R_t = I * param_g + R
    I_t = I + I_new - I * param_g
    S_t = S - I_new
    return jnp.concatenate([I_new, S_t, I_t, R_t], axis=-1)


if __name__ == "__main__":
    B, N = 2, 16
    key = jax.random.PRNGKey(0)
    k1, k2, k3, k4 = jax.random.split(key, 4)

    # SIRcell has no learned parameters; param_b / param_g come from upstream layers.
    param_b = jax.random.uniform(k1, (B, N, 1), jnp.float32, 0.05, 0.5)
    param_g = jax.random.uniform(k2, (B, N, 1), jnp.float32, 0.05, 0.3)
    mob = jax.random.uniform(k3, (N, N), jnp.float32, 0.0, 50.0)          # shared mob
    SIR = jax.random.uniform(k4, (B, N, 3), jnp.float32, 10.0, 1000.0)    # pop > 0

    out = jax.block_until_ready(sir_cell(param_b, param_g, mob, SIR))
    ref = jax.block_until_ready(sir_cell_ref(param_b, param_g, mob, SIR))
    assert out.shape == (B, N, 4), out.shape
    assert jnp.allclose(out, ref, rtol=1e-5, atol=1e-3), \
        f"max abs err {jnp.max(jnp.abs(out - ref))}"

    # Batched-mob (3-D) branch.
    mob3 = jax.random.uniform(jax.random.PRNGKey(1), (B, N, N), jnp.float32, 0.0, 50.0)
    out3 = jax.block_until_ready(sir_cell(param_b, param_g, mob3, SIR))
    ref3 = jax.block_until_ready(sir_cell_ref(param_b, param_g, mob3, SIR))
    assert jnp.allclose(out3, ref3, rtol=1e-5, atol=1e-3), \
        f"max abs err {jnp.max(jnp.abs(out3 - ref3))}"

    # Awkward shapes: B not a multiple of the block, N far from 128 -> exercises
    # the batch/node padding path (grid = cdiv, pop=1 in the pad region).
    B2, N2 = 3, 10
    kk = jax.random.split(jax.random.PRNGKey(2), 4)
    pb2 = jax.random.uniform(kk[0], (B2, N2, 1), jnp.float32, 0.05, 0.5)
    pg2 = jax.random.uniform(kk[1], (B2, N2, 1), jnp.float32, 0.05, 0.3)
    mob2 = jax.random.uniform(kk[2], (N2, N2), jnp.float32, 0.0, 50.0)
    SIR2 = jax.random.uniform(kk[3], (B2, N2, 3), jnp.float32, 10.0, 1000.0)
    out2 = jax.block_until_ready(sir_cell(pb2, pg2, mob2, SIR2, tb=2))
    ref2 = jax.block_until_ready(sir_cell_ref(pb2, pg2, mob2, SIR2))
    assert jnp.allclose(out2, ref2, rtol=1e-5, atol=1e-3), \
        f"max abs err {jnp.max(jnp.abs(out2 - ref2))}"

    print("KERNEL_OK")
</pallas_src>

<mosaic_0001>
module attributes {stable_mosaic.version = 11 : i64} {
  func.func @_sir_kernel_shared(%arg0: i32, %arg1: memref<2x1x128xf32, #tpu.memory_space<vmem>>, %arg2: memref<2x1x128xf32, #tpu.memory_space<vmem>>, %arg3: memref<1x128x128xf32, #tpu.memory_space<vmem>>, %arg4: memref<1x128x128xf32, #tpu.memory_space<vmem>>, %arg5: memref<2x3x128xf32, #tpu.memory_space<vmem>>, %arg6: memref<2x4x128xf32, #tpu.memory_space<vmem>>) attributes {dimension_semantics = [#tpu.dimension_semantics<parallel>], iteration_bounds = array<i64: 1>, scalar_prefetch = 0 : i64, scratch_operands = 0 : i64, tpu.core_type = #tpu.core_type<tc>, window_params = [{transform_indices = @transform_0, window_bounds = array<i64: 2, 1, 128>}, {transform_indices = @transform_1, window_bounds = array<i64: 2, 1, 128>}, {pipeline_mode = #tpu.pipeline_mode<synchronous>, transform_indices = @transform_2, window_bounds = array<i64: 1, 128, 128>}, {pipeline_mode = #tpu.pipeline_mode<synchronous>, transform_indices = @transform_3, window_bounds = array<i64: 1, 128, 128>}, {transform_indices = @transform_4, window_bounds = array<i64: 2, 3, 128>}, {transform_indices = @transform_5, window_bounds = array<i64: 2, 4, 128>}]} {
    %c0 = arith.constant 0 : index
    %c0_0 = arith.constant 0 : index
    %c0_1 = arith.constant 0 : index
    %0 = vector.load %arg1[%c0, %c0_0, %c0_1] : memref<2x1x128xf32, #tpu.memory_space<vmem>>, vector<2x1x128xf32>
    %1 = vector.shape_cast %0 : vector<2x1x128xf32> to vector<2x128xf32>
    %c0_2 = arith.constant 0 : index
    %c0_3 = arith.constant 0 : index
    %c0_4 = arith.constant 0 : index
    %2 = vector.load %arg2[%c0_2, %c0_3, %c0_4] : memref<2x1x128xf32, #tpu.memory_space<vmem>>, vector<2x1x128xf32>
    %3 = vector.shape_cast %2 : vector<2x1x128xf32> to vector<2x128xf32>
    %c0_5 = arith.constant 0 : index
    %c0_6 = arith.constant 0 : index
    %c0_7 = arith.constant 0 : index
    %4 = vector.load %arg5[%c0_5, %c0_6, %c0_7] : memref<2x3x128xf32, #tpu.memory_space<vmem>>, vector<2x1x128xf32>
    %5 = vector.shape_cast %4 : vector<2x1x128xf32> to vector<2x128xf32>
    %c0_8 = arith.constant 0 : index
    %c1 = arith.constant 1 : index
    %c0_9 = arith.constant 0 : index
    %6 = vector.load %arg5[%c0_8, %c1, %c0_9] : memref<2x3x128xf32, #tpu.memory_space<vmem>>, vector<2x1x128xf32>
    %7 = vector.shape_cast %6 : vector<2x1x128xf32> to vector<2x128xf32>
    %c0_10 = arith.constant 0 : index
    %c2 = arith.constant 2 : index
    %c0_11 = arith.constant 0 : index
    %8 = vector.load %arg5[%c0_10, %c2, %c0_11] : memref<2x3x128xf32, #tpu.memory_space<vmem>>, vector<2x1x128xf32>
    %9 = vector.shape_cast %8 : vector<2x1x128xf32> to vector<2x128xf32>
    %10 = arith.addf %5, %7 : vector<2x128xf32>
    %11 = arith.addf %10, %9 : vector<2x128xf32>
    %12 = tpu.reciprocal %11 : vector<2x128xf32> -> vector<2x128xf32>
    %13 = arith.mulf %7, %12 : vector<2x128xf32>
    %c0_12 = arith.constant 0 : index
    %c0_13 = arith.constant 0 : index
    %c0_14 = arith.constant 0 : index
    %14 = vector.load %arg3[%c0_12, %c0_13, %c0_14] : memref<1x128x128xf32, #tpu.memory_space<vmem>>, vector<1x128x128xf32>
    %15 = vector.shape_cast %14 : vector<1x128x128xf32> to vector<128x128xf32>
    %c0_15 = arith.constant 0 : index
    %c0_16 = arith.constant 0 : index
    %c0_17 = arith.constant 0 : index
    %16 = vector.load %arg4[%c0_15, %c0_16, %c0_17] : memref<1x128x128xf32, #tpu.memory_space<vmem>>, vector<1x128x128xf32>
    %17 = vector.shape_cast %16 : vector<1x128x128xf32> to vector<128x128xf32>
    %cst = arith.constant dense<0.000000e+00> : vector<2x128xf32>
    %18 = tpu.matmul %13, %15, %cst {dimension_numbers = #tpu.dot_dimension_numbers<[1], [0], [0], [1], [0, 0, 1, 1], [], []>, precision = #tpu.contract_precision<fp32>} : vector<2x128xf32>, vector<128x128xf32>, vector<2x128xf32> -> vector<2x128xf32>
    %cst_18 = arith.constant dense<0.000000e+00> : vector<2x128xf32>
    %19 = tpu.matmul %7, %17, %cst_18 {dimension_numbers = #tpu.dot_dimension_numbers<[1], [0], [0], [1], [0, 0, 1, 1], [], []>, precision = #tpu.contract_precision<fp32>} : vector<2x128xf32>, vector<128x128xf32>, vector<2x128xf32> -> vector<2x128xf32>
    %20 = arith.mulf %19, %12 : vector<2x128xf32>
    %21 = arith.addf %18, %20 : vector<2x128xf32>
    %22 = arith.mulf %1, %21 : vector<2x128xf32>
    %23 = arith.mulf %7, %3 : vector<2x128xf32>
    %c0_19 = arith.constant 0 : index
    %c0_20 = arith.constant 0 : index
    %c0_21 = arith.constant 0 : index
    %24 = vector.load %arg6[%c0_19, %c0_20, %c0_21] : memref<2x4x128xf32, #tpu.memory_space<vmem>>, vector<2x1x128xf32>
    %25 = vector.shape_cast %24 : vector<2x1x128xf32> to vector<2x128xf32>
    %26 = vector.shape_cast %22 : vector<2x128xf32> to vector<2x1x128xf32>
    tpu.vector_store %arg6[%c0_19, %c0_20, %c0_21], %26 {strides = array<i32>} : memref<2x4x128xf32, #tpu.memory_space<vmem>>, vector<2x1x128xf32>,
    %27 = arith.subf %5, %22 : vector<2x128xf32>
    %c0_22 = arith.constant 0 : index
    %c1_23 = arith.constant 1 : index
    %c0_24 = arith.constant 0 : index
    %28 = vector.load %arg6[%c0_22, %c1_23, %c0_24] : memref<2x4x128xf32, #tpu.memory_space<vmem>>, vector<2x1x128xf32>
    %29 = vector.shape_cast %28 : vector<2x1x128xf32> to vector<2x128xf32>
    %30 = vector.shape_cast %27 : vector<2x128xf32> to vector<2x1x128xf32>
    tpu.vector_store %arg6[%c0_22, %c1_23, %c0_24], %30 {strides = array<i32>} : memref<2x4x128xf32, #tpu.memory_space<vmem>>, vector<2x1x128xf32>,
    %31 = arith.addf %7, %22 : vector<2x128xf32>
    %32 = arith.subf %31, %23 : vector<2x128xf32>
    %c0_25 = arith.constant 0 : index
    %c2_26 = arith.constant 2 : index
    %c0_27 = arith.constant 0 : index
    %33 = vector.load %arg6[%c0_25, %c2_26, %c0_27] : memref<2x4x128xf32, #tpu.memory_space<vmem>>, vector<2x1x128xf32>
    %34 = vector.shape_cast %33 : vector<2x1x128xf32> to vector<2x128xf32>
    %35 = vector.shape_cast %32 : vector<2x128xf32> to vector<2x1x128xf32>
    tpu.vector_store %arg6[%c0_25, %c2_26, %c0_27], %35 {strides = array<i32>} : memref<2x4x128xf32, #tpu.memory_space<vmem>>, vector<2x1x128xf32>,
    %36 = arith.addf %23, %9 : vector<2x128xf32>
    %c0_28 = arith.constant 0 : index
    %c3 = arith.constant 3 : index
    %c0_29 = arith.constant 0 : index
    %37 = vector.load %arg6[%c0_28, %c3, %c0_29] : memref<2x4x128xf32, #tpu.memory_space<vmem>>, vector<2x1x128xf32>
    %38 = vector.shape_cast %37 : vector<2x1x128xf32> to vector<2x128xf32>
    %39 = vector.shape_cast %36 : vector<2x128xf32> to vector<2x1x128xf32>
    tpu.vector_store %arg6[%c0_28, %c3, %c0_29], %39 {strides = array<i32>} : memref<2x4x128xf32, #tpu.memory_space<vmem>>, vector<2x1x128xf32>,
    return
  }
  func.func @transform_0(%arg0: i32) -> (i32, i32, i32) {
    %c0_i32 = arith.constant 0 : i32
    %c0_i32_0 = arith.constant 0 : i32
    %c0_i32_1 = arith.constant 0 : i32
    return %arg0, %c0_i32, %c0_i32_0 : i32, i32, i32
  }
  func.func @transform_1(%arg0: i32) -> (i32, i32, i32) {
    %c0_i32 = arith.constant 0 : i32
    %c0_i32_0 = arith.constant 0 : i32
    %c0_i32_1 = arith.constant 0 : i32
    return %arg0, %c0_i32, %c0_i32_0 : i32, i32, i32
  }
  func.func @transform_2(%arg0: i32) -> (i32, i32, i32) {
    %c0_i32 = arith.constant 0 : i32
    %c0_i32_0 = arith.constant 0 : i32
    %c0_i32_1 = arith.constant 0 : i32
    %c0_i32_2 = arith.constant 0 : i32
    return %c0_i32, %c0_i32_0, %c0_i32_1 : i32, i32, i32
  }
  func.func @transform_3(%arg0: i32) -> (i32, i32, i32) {
    %c0_i32 = arith.constant 0 : i32
    %c0_i32_0 = arith.constant 0 : i32
    %c0_i32_1 = arith.constant 0 : i32
    %c0_i32_2 = arith.constant 0 : i32
    return %c0_i32, %c0_i32_0, %c0_i32_1 : i32, i32, i32
  }
  func.func @transform_4(%arg0: i32) -> (i32, i32, i32) {
    %c0_i32 = arith.constant 0 : i32
    %c0_i32_0 = arith.constant 0 : i32
    %c0_i32_1 = arith.constant 0 : i32
    return %arg0, %c0_i32, %c0_i32_0 : i32, i32, i32
  }
  func.func @transform_5(%arg0: i32) -> (i32, i32, i32) {
    %c0_i32 = arith.constant 0 : i32
    %c0_i32_0 = arith.constant 0 : i32
    %c0_i32_1 = arith.constant 0 : i32
    return %arg0, %c0_i32, %c0_i32_0 : i32, i32, i32
  }
}

module attributes {stable_mosaic.version = 11 : i64} {
  func.func @_sir_kernel_shared(%arg0: i32, %arg1: memref<2x1x128xf32, #tpu.memory_space<vmem>>, %arg2: memref<2x1x128xf32, #tpu.memory_space<vmem>>, %arg3: memref<1x128x128xf32, #tpu.memory_space<vmem>>, %arg4: memref<1x128x128xf32, #tpu.memory_space<vmem>>, %arg5: memref<2x3x128xf32, #tpu.memory_space<vmem>>, %arg6: memref<2x4x128xf32, #tpu.memory_space<vmem>>) attributes {dimension_semantics = [#tpu.dimension_semantics<parallel>], iteration_bounds = array<i64: 1>, scalar_prefetch = 0 : i64, scratch_operands = 0 : i64, tpu.core_type = #tpu.core_type<tc>, window_params = [{transform_indices = @transform_0, window_bounds = array<i64: 2, 1, 128>}, {transform_indices = @transform_1, window_bounds = array<i64: 2, 1, 128>}, {pipeline_mode = #tpu.pipeline_mode<synchronous>, transform_indices = @transform_2, window_bounds = array<i64: 1, 128, 128>}, {pipeline_mode = #tpu.pipeline_mode<synchronous>, transform_indices = @transform_3, window_bounds = array<i64: 1, 128, 128>}, {transform_indices = @transform_4, window_bounds = array<i64: 2, 3, 128>}, {transform_indices = @transform_5, window_bounds = array<i64: 2, 4, 128>}]} {
    %c0 = arith.constant 0 : index
    %c0_0 = arith.constant 0 : index
    %c0_1 = arith.constant 0 : index
    %0 = vector.load %arg1[%c0, %c0_0, %c0_1] : memref<2x1x128xf32, #tpu.memory_space<vmem>>, vector<2x1x128xf32>
    %1 = vector.shape_cast %0 : vector<2x1x128xf32> to vector<2x128xf32>
    %c0_2 = arith.constant 0 : index
    %c0_3 = arith.constant 0 : index
    %c0_4 = arith.constant 0 : index
    %2 = vector.load %arg2[%c0_2, %c0_3, %c0_4] : memref<2x1x128xf32, #tpu.memory_space<vmem>>, vector<2x1x128xf32>
    %3 = vector.shape_cast %2 : vector<2x1x128xf32> to vector<2x128xf32>
    %c0_5 = arith.constant 0 : index
    %c0_6 = arith.constant 0 : index
    %c0_7 = arith.constant 0 : index
    %4 = vector.load %arg5[%c0_5, %c0_6, %c0_7] : memref<2x3x128xf32, #tpu.memory_space<vmem>>, vector<2x1x128xf32>
    %5 = vector.shape_cast %4 : vector<2x1x128xf32> to vector<2x128xf32>
    %c0_8 = arith.constant 0 : index
    %c1 = arith.constant 1 : index
    %c0_9 = arith.constant 0 : index
    %6 = vector.load %arg5[%c0_8, %c1, %c0_9] : memref<2x3x128xf32, #tpu.memory_space<vmem>>, vector<2x1x128xf32>
    %7 = vector.shape_cast %6 : vector<2x1x128xf32> to vector<2x128xf32>
    %c0_10 = arith.constant 0 : index
    %c2 = arith.constant 2 : index
    %c0_11 = arith.constant 0 : index
    %8 = vector.load %arg5[%c0_10, %c2, %c0_11] : memref<2x3x128xf32, #tpu.memory_space<vmem>>, vector<2x1x128xf32>
    %9 = vector.shape_cast %8 : vector<2x1x128xf32> to vector<2x128xf32>
    %10 = arith.addf %5, %7 : vector<2x128xf32>
    %11 = arith.addf %10, %9 : vector<2x128xf32>
    %12 = tpu.reciprocal %11 : vector<2x128xf32> -> vector<2x128xf32>
    %13 = arith.mulf %7, %12 : vector<2x128xf32>
    %c0_12 = arith.constant 0 : index
    %c0_13 = arith.constant 0 : index
    %c0_14 = arith.constant 0 : index
    %14 = vector.load %arg3[%c0_12, %c0_13, %c0_14] : memref<1x128x128xf32, #tpu.memory_space<vmem>>, vector<1x128x128xf32>
    %15 = vector.shape_cast %14 : vector<1x128x128xf32> to vector<128x128xf32>
    %c0_15 = arith.constant 0 : index
    %c0_16 = arith.constant 0 : index
    %c0_17 = arith.constant 0 : index
    %16 = vector.load %arg4[%c0_15, %c0_16, %c0_17] : memref<1x128x128xf32, #tpu.memory_space<vmem>>, vector<1x128x128xf32>
    %17 = vector.shape_cast %16 : vector<1x128x128xf32> to vector<128x128xf32>
    %cst = arith.constant dense<0.000000e+00> : vector<2x128xf32>
    %18 = tpu.matmul %13, %15, %cst {dimension_numbers = #tpu.dot_dimension_numbers<[1], [0], [0], [1], [0, 0, 1, 1], [], []>, precision = #tpu.contract_precision<fp32>} : vector<2x128xf32>, vector<128x128xf32>, vector<2x128xf32> -> vector<2x128xf32>
    %cst_18 = arith.constant dense<0.000000e+00> : vector<2x128xf32>
    %19 = tpu.matmul %7, %17, %cst_18 {dimension_numbers = #tpu.dot_dimension_numbers<[1], [0], [0], [1], [0, 0, 1, 1], [], []>, precision = #tpu.contract_precision<fp32>} : vector<2x128xf32>, vector<128x128xf32>, vector<2x128xf32> -> vector<2x128xf32>
    %20 = arith.mulf %19, %12 : vector<2x128xf32>
    %21 = arith.addf %18, %20 : vector<2x128xf32>
    %22 = arith.mulf %1, %21 : vector<2x128xf32>
    %23 = arith.mulf %7, %3 : vector<2x128xf32>
    %c0_19 = arith.constant 0 : index
    %c0_20 = arith.constant 0 : index
    %c0_21 = arith.constant 0 : index
    %24 = vector.load %arg6[%c0_19, %c0_20, %c0_21] : memref<2x4x128xf32, #tpu.memory_space<vmem>>, vector<2x1x128xf32>
    %25 = vector.shape_cast %24 : vector<2x1x128xf32> to vector<2x128xf32>
    %26 = vector.shape_cast %22 : vector<2x128xf32> to vector<2x1x128xf32>
    tpu.vector_store %arg6[%c0_19, %c0_20, %c0_21], %26 {strides = array<i32>} : memref<2x4x128xf32, #tpu.memory_space<vmem>>, vector<2x1x128xf32>,
    %27 = arith.subf %5, %22 : vector<2x128xf32>
    %c0_22 = arith.constant 0 : index
    %c1_23 = arith.constant 1 : index
    %c0_24 = arith.constant 0 : index
    %28 = vector.load %arg6[%c0_22, %c1_23, %c0_24] : memref<2x4x128xf32, #tpu.memory_space<vmem>>, vector<2x1x128xf32>
    %29 = vector.shape_cast %28 : vector<2x1x128xf32> to vector<2x128xf32>
    %30 = vector.shape_cast %27 : vector<2x128xf32> to vector<2x1x128xf32>
    tpu.vector_store %arg6[%c0_22, %c1_23, %c0_24], %30 {strides = array<i32>} : memref<2x4x128xf32, #tpu.memory_space<vmem>>, vector<2x1x128xf32>,
    %31 = arith.addf %7, %22 : vector<2x128xf32>
    %32 = arith.subf %31, %23 : vector<2x128xf32>
    %c0_25 = arith.constant 0 : index
    %c2_26 = arith.constant 2 : index
    %c0_27 = arith.constant 0 : index
    %33 = vector.load %arg6[%c0_25, %c2_26, %c0_27] : memref<2x4x128xf32, #tpu.memory_space<vmem>>, vector<2x1x128xf32>
    %34 = vector.shape_cast %33 : vector<2x1x128xf32> to vector<2x128xf32>
    %35 = vector.shape_cast %32 : vector<2x128xf32> to vector<2x1x128xf32>
    tpu.vector_store %arg6[%c0_25, %c2_26, %c0_27], %35 {strides = array<i32>} : memref<2x4x128xf32, #tpu.memory_space<vmem>>, vector<2x1x128xf32>,
    %36 = arith.addf %23, %9 : vector<2x128xf32>
    %c0_28 = arith.constant 0 : index
    %c3 = arith.constant 3 : index
    %c0_29 = arith.constant 0 : index
    %37 = vector.load %arg6[%c0_28, %c3, %c0_29] : memref<2x4x128xf32, #tpu.memory_space<vmem>>, vector<2x1x128xf32>
    %38 = vector.shape_cast %37 : vector<2x1x128xf32> to vector<2x128xf32>
    %39 = vector.shape_cast %36 : vector<2x128xf32> to vector<2x1x128xf32>
    tpu.vector_store %arg6[%c0_28, %c3, %c0_29], %39 {strides = array<i32>} : memref<2x4x128xf32, #tpu.memory_space<vmem>>, vector<2x1x128xf32>,
    return
  }
  func.func @transform_0(%arg0: i32) -> (i32, i32, i32) {
    %c0_i32 = arith.constant 0 : i32
    %c0_i32_0 = arith.constant 0 : i32
    %c0_i32_1 = arith.constant 0 : i32
    return %arg0, %c0_i32, %c0_i32_0 : i32, i32, i32
  }
  func.func @transform_1(%arg0: i32) -> (i32, i32, i32) {
    %c0_i32 = arith.constant 0 : i32
    %c0_i32_0 = arith.constant 0 : i32
    %c0_i32_1 = arith.constant 0 : i32
    return %arg0, %c0_i32, %c0_i32_0 : i32, i32, i32
  }
  func.func @transform_2(%arg0: i32) -> (i32, i32, i32) {
    %c0_i32 = arith.constant 0 : i32
    %c0_i32_0 = arith.constant 0 : i32
    %c0_i32_1 = arith.constant 0 : i32
    %c0_i32_2 = arith.constant 0 : i32
    return %c0_i32, %c0_i32_0, %c0_i32_1 : i32, i32, i32
  }
  func.func @transform_3(%arg0: i32) -> (i32, i32, i32) {
    %c0_i32 = arith.constant 0 : i32
    %c0_i32_0 = arith.constant 0 : i32
    %c0_i32_1 = arith.constant 0 : i32
    %c0_i32_2 = arith.constant 0 : i32
    return %c0_i32, %c0_i32_0, %c0_i32_1 : i32, i32, i32
  }
  func.func @transform_4(%arg0: i32) -> (i32, i32, i32) {
    %c0_i32 = arith.constant 0 : i32
    %c0_i32_0 = arith.constant 0 : i32
    %c0_i32_1 = arith.constant 0 : i32
    return %arg0, %c0_i32, %c0_i32_0 : i32, i32, i32
  }
  func.func @transform_5(%arg0: i32) -> (i32, i32, i32) {
    %c0_i32 = arith.constant 0 : i32
    %c0_i32_0 = arith.constant 0 : i32
    %c0_i32_1 = arith.constant 0 : i32
    return %arg0, %c0_i32, %c0_i32_0 : i32, i32, i32
  }
}

</mosaic_0001>

<llo_original>
// kernel: tpu_custom_call.1
$region0: #{tpu_custom_call.1}
  #allocation0 [shape = 'u32[]', space=smem, size = 0x4, offset = 0x4, fixed_abs, tag = 'smem constant byte address 0x4 - core index']
  #allocation1 [shape = 'u32[144,128]{1,0:T(1,128)}', space=vmem, size = 0x12000, scoped, tag = 'internal scratch']
  %s0 = inlined_call_operand.vmem [shape: f32[2,1,128], index: 0, kind: input, shape index: {}]
  %s1 = inlined_call_operand.vmem [shape: f32[2,1,128], index: 1, kind: input, shape index: {}]
  %s2 = inlined_call_operand.hbm [shape: f32[1,128,128], index: 2, kind: input, shape index: {}]
  %s3 = inlined_call_operand.hbm [shape: f32[1,128,128], index: 3, kind: input, shape index: {}]
  %s4 = inlined_call_operand.vmem [shape: f32[2,3,128], index: 4, kind: input, shape index: {}]
  %s5 = inlined_call_operand.hbm [shape: f32[2,4,128], index: 5, kind: output, shape index: {}]
  %s6 = sld [smem:[#allocation0]]
  $region38: #{tpu_custom_call.1} parent=0
    _
  %s8 = ssub.s32 1, %s6
  %s9 = scalar_select 0, %s8, %s6
  $region1: #{tpu_custom_call.1} parent=0
    #allocation2 [shape = 'u8[65536]{0}', space=vmem, size = 0x10000, scoped, tag = 'input window, operand 2, single buffered']
    #allocation3 [shape = 's32[1]{0}', space=sflag, size = 0x4, scoped, tag = 'scoped memory for tpu_custom_call.1']
    #allocation4 [shape = 's32[1]{0}', space=sflag, size = 0x4, scoped, tag = 'scoped memory for tpu_custom_call.1']
    #allocation5 [shape = 'u8[65536]{0}', space=vmem, size = 0x10000, scoped, tag = 'input window, operand 3, single buffered']
    #allocation6 [shape = 's32[1]{0}', space=sflag, size = 0x4, scoped, tag = 'scoped memory for tpu_custom_call.1']
    #allocation7 [shape = 'u8[4096]{0}', space=vmem, size = 0x1000, scoped, tag = 'output window, operand 0, single buffered']
    %10 = vsyncpa [#allocation3], 0
    %11 = vsyncpa [#allocation6], 0
    %12 = vsyncpa [#allocation4], 0
    // Predicated region
    $region2: #{tpu_custom_call.1} parent=1 // pred_check
      _
    $region3: #{tpu_custom_call.1} parent=1 // pred_check_branch
      %14 = sbr.rel (0) target = $region5
    $region4: #{tpu_custom_call.1} parent=1 // pred_region
      _
    $region5: #{tpu_custom_call.1} parent=1 // pred_fallthru
      _
    // Predicated region
    $region6: #{tpu_custom_call.1} parent=1 // pred_check
      _
    $region7: #{tpu_custom_call.1} parent=1 // pred_check_branch
      %16 = sbr.rel (0) target = $region9
    $region8: #{tpu_custom_call.1} parent=1 // pred_region
      _
    $region9: #{tpu_custom_call.1} parent=1 // pred_fallthru
      _
    // Predicated region
    $region10: #{tpu_custom_call.1} parent=1 // pred_check
      _
    $region11: #{tpu_custom_call.1} parent=1 // pred_check_branch
      %18 = sbr.rel (0) target = $region13
    $region12: #{tpu_custom_call.1} parent=1 // pred_region
      %s20 = ssub.s32 2048, 2048
      %21 = vsyncadd [#allocation3], %s20
      %s22 = sshll.u32 [#allocation2], 4
      %s23 = int_to_ptr.vmem [resolvable:$true] %s22
      %28 = dma.hbm_to_vmem [thread:$0]  %s2, 2048, %s23, [#allocation3], 128, 128, 8
    $region13: #{tpu_custom_call.1} parent=1 // pred_fallthru
      _
    // Predicated region
    $region14: #{tpu_custom_call.1} parent=1 // pred_check
      _
    $region15: #{tpu_custom_call.1} parent=1 // pred_check_branch
      %30 = sbr.rel (0) target = $region17
    $region16: #{tpu_custom_call.1} parent=1 // pred_region
      %s32 = ssub.s32 2048, 2048
      %33 = vsyncadd [#allocation6], %s32
      %s34 = sshll.u32 [#allocation5], 4
      %s35 = int_to_ptr.vmem [resolvable:$true] %s34
      %40 = dma.hbm_to_vmem [thread:$0]  %s3, 2048, %s35, [#allocation6], 128, 128, 8
    $region17: #{tpu_custom_call.1} parent=1 // pred_fallthru
      _
    // Predicated region
    $region18: #{tpu_custom_call.1} parent=1 // pred_check
      _
    $region19: #{tpu_custom_call.1} parent=1 // pred_check_branch
      %42 = sbr.rel (0) target = $region21
    $region20: #{tpu_custom_call.1} parent=1 // pred_region
      _
    $region21: #{tpu_custom_call.1} parent=1 // pred_fallthru
      _
    // Predicated region
    $region22: #{tpu_custom_call.1} parent=1 // pred_check
      _
    $region23: #{tpu_custom_call.1} parent=1 // pred_check_branch
      %44 = sbr.rel (0) target = $region25
    $region24: #{tpu_custom_call.1} parent=1 // pred_region
      %45 = dma.done [#allocation3], 2048
    $region25: #{tpu_custom_call.1} parent=1 // pred_fallthru
      _
    // Predicated region
    $region26: #{tpu_custom_call.1} parent=1 // pred_check
      _
    $region27: #{tpu_custom_call.1} parent=1 // pred_check_branch
      %47 = sbr.rel (0) target = $region29
    $region28: #{tpu_custom_call.1} parent=1 // pred_region
      %48 = dma.done [#allocation6], 2048
    $region29: #{tpu_custom_call.1} parent=1 // pred_fallthru
      _
    %v49 = vld [vmem:[%s0] sm:$0x1]
    %v50 = vld [vmem:[%s0 + $0x1] sm:$0x1]
    %v51 = vld [vmem:[%s1] sm:$0x1]
    %v52 = vld [vmem:[%s1 + $0x1] sm:$0x1]
    %v53 = vld [vmem:[%s4] sm:$0x1]
    %v54 = vld [vmem:[%s4 + $0x4] sm:$0x1]
    %v55 = vld [vmem:[%s4 + $0x1] sm:$0x1]
    %v56 = vld [vmem:[%s4 + $0x5] sm:$0x1]
    %v57 = vld [vmem:[%s4 + $0x2] sm:$0x1]
    %v58 = vld [vmem:[%s4 + $0x6] sm:$0x1]
    %v59 = vadd.f32 %v53, %v55
    %v60 = vadd.f32 %v54, %v56
    %v61 = vadd.f32 %v59, %v57
    %v62 = vadd.f32 %v60, %v58
    %v63 = vrcp.pop %v61
    %v64 = vrcp.pop %v62
    %v65 = vmul.f32 %v55, %v63
    %v66 = vmul.f32 %v56, %v64
    %v67 = vld [vmem:[#allocation2] sm:$0xff]
    %v68 = vld [vmem:[#allocation2 + $0x8] sm:$0xff]
    %v69 = vld [vmem:[#allocation2 + $0x10] sm:$0xff]
    %v70 = vld [vmem:[#allocation2 + $0x18] sm:$0xff]
    %v71 = vld [vmem:[#allocation2 + $0x20] sm:$0xff]
    %v72 = vld [vmem:[#allocation2 + $0x28] sm:$0xff]
    %v73 = vld [vmem:[#allocation2 + $0x30] sm:$0xff]
    %v74 = vld [vmem:[#allocation2 + $0x38] sm:$0xff]
    %v75 = vld [vmem:[#allocation2 + $0x40] sm:$0xff]
    %v76 = vld [vmem:[#allocation2 + $0x48] sm:$0xff]
    %v77 = vld [vmem:[#allocation2 + $0x50] sm:$0xff]
    %v78 = vld [vmem:[#allocation2 + $0x58] sm:$0xff]
    %v79 = vld [vmem:[#allocation2 + $0x60] sm:$0xff]
    %v80 = vld [vmem:[#allocation2 + $0x68] sm:$0xff]
    %v81 = vld [vmem:[#allocation2 + $0x70] sm:$0xff]
    %v82 = vld [vmem:[#allocation2 + $0x78] sm:$0xff]
    %v83 = vld [vmem:[#allocation5] sm:$0xff]
    %v84 = vld [vmem:[#allocation5 + $0x8] sm:$0xff]
    %v85 = vld [vmem:[#allocation5 + $0x10] sm:$0xff]
    %v86 = vld [vmem:[#allocation5 + $0x18] sm:$0xff]
    %v87 = vld [vmem:[#allocation5 + $0x20] sm:$0xff]
    %v88 = vld [vmem:[#allocation5 + $0x28] sm:$0xff]
    %v89 = vld [vmem:[#allocation5 + $0x30] sm:$0xff]
    %v90 = vld [vmem:[#allocation5 + $0x38] sm:$0xff]
    %v91 = vld [vmem:[#allocation5 + $0x40] sm:$0xff]
    %v92 = vld [vmem:[#allocation5 + $0x48] sm:$0xff]
    %v93 = vld [vmem:[#allocation5 + $0x50] sm:$0xff]
    %v94 = vld [vmem:[#allocation5 + $0x58] sm:$0xff]
    %v95 = vld [vmem:[#allocation5 + $0x60] sm:$0xff]
    %v96 = vld [vmem:[#allocation5 + $0x68] sm:$0xff]
    %v97 = vld [vmem:[#allocation5 + $0x70] sm:$0xff]
    %v98 = vld [vmem:[#allocation5 + $0x78] sm:$0xff]
    %v101 = vrot.slane %v56, 7
    %vm102 = vcmask 1041409
    %v103 = vsel %vm102, %v101, %v55
    %105 = vmatprep.subr.mxu0 0.0
    %v106 = vand.u32 %v83, 4294901760
    %107 = vmatpush1.msra.mxu0 %v106
    %108 = vmatprep.subr.mxu0 0.0
    %v109 = vand.u32 %v84, 4294901760
    %110 = vmatpush1.msra.mxu0 %v109
    %111 = vmatprep.subr.mxu0 0.0
    %v112 = vand.u32 %v85, 4294901760
    %113 = vmatpush1.msra.mxu0 %v112
    %114 = vmatprep.subr.mxu0 0.0
    %v115 = vand.u32 %v86, 4294901760
    %116 = vmatpush1.msra.mxu0 %v115
    %117 = vmatprep.subr.mxu0 0.0
    %v118 = vand.u32 %v87, 4294901760
    %119 = vmatpush1.msra.mxu0 %v118
    %120 = vmatprep.subr.mxu0 0.0
    %v121 = vand.u32 %v88, 4294901760
    %122 = vmatpush1.msra.mxu0 %v121
    %123 = vmatprep.subr.mxu0 0.0
    %v124 = vand.u32 %v89, 4294901760
    %125 = vmatpush1.msra.mxu0 %v124
    %126 = vmatprep.subr.mxu0 0.0
    %v127 = vand.u32 %v90, 4294901760
    %128 = vmatpush1.msra.mxu0 %v127
    %129 = vmatprep.subr.mxu0 0.0
    %v130 = vand.u32 %v91, 4294901760
    %131 = vmatpush1.msra.mxu0 %v130
    %132 = vmatprep.subr.mxu0 0.0
    %v133 = vand.u32 %v92, 4294901760
    %134 = vmatpush1.msra.mxu0 %v133
    %135 = vmatprep.subr.mxu0 0.0
    %v136 = vand.u32 %v93, 4294901760
    %137 = vmatpush1.msra.mxu0 %v136
    %138 = vmatprep.subr.mxu0 0.0
    %v139 = vand.u32 %v94, 4294901760
    %140 = vmatpush1.msra.mxu0 %v139
    %141 = vmatprep.subr.mxu0 0.0
    %v142 = vand.u32 %v95, 4294901760
    %143 = vmatpush1.msra.mxu0 %v142
    %144 = vmatprep.subr.mxu0 0.0
    %v145 = vand.u32 %v96, 4294901760
    %146 = vmatpush1.msra.mxu0 %v145
    %147 = vmatprep.subr.mxu0 0.0
    %v148 = vand.u32 %v97, 4294901760
    %149 = vmatpush1.msra.mxu0 %v148
    %150 = vmatprep.subr.mxu0 0.0
    %v151 = vand.u32 %v98, 4294901760
    %152 = vmatpush1.msra.mxu0 %v151
    %153 = vmatprep.subr.mxu0 0.0
    %154 = vmatpush1.msra.mxu0 0.0
    %155 = vmatprep.subr.mxu0 0.0
    %156 = vmatpush1.msra.mxu0 0.0
    %157 = vmatprep.subr.mxu0 0.0
    %158 = vmatpush1.msra.mxu0 0.0
    %159 = vmatprep.subr.mxu0 0.0
    %160 = vmatpush1.msra.mxu0 0.0
    %161 = vmatprep.subr.mxu0 0.0
    %162 = vmatpush1.msra.mxu0 0.0
    %163 = vmatprep.subr.mxu0 0.0
    %164 = vmatpush1.msra.mxu0 0.0
    %165 = vmatprep.subr.mxu0 0.0
    %166 = vmatpush1.msra.mxu0 0.0
    %167 = vmatprep.subr.mxu0 0.0
    %168 = vmatpush1.msra.mxu0 0.0
    %169 = vmatprep.subr.mxu0 0.0
    %170 = vmatpush1.msra.mxu0 0.0
    %171 = vmatprep.subr.mxu0 0.0
    %172 = vmatpush1.msra.mxu0 0.0
    %173 = vmatprep.subr.mxu0 0.0
    %174 = vmatpush1.msra.mxu0 0.0
    %175 = vmatprep.subr.mxu0 0.0
    %176 = vmatpush1.msra.mxu0 0.0
    %177 = vmatprep.subr.mxu0 0.0
    %178 = vmatpush1.msra.mxu0 0.0
    %179 = vmatprep.subr.mxu0 0.0
    %180 = vmatpush1.msra.mxu0 0.0
    %181 = vmatprep.subr.mxu0 0.0
    %182 = vmatpush1.msra.mxu0 0.0
    %183 = vmatprep.subr.mxu0 0.0
    %184 = vmatpush1.msra.mxu0 0.0
    %185 = vmatprep.mubr.f32.mxu0 0.0
    %v186 = vand.u32 %v103, 4294901760
    %v187 = vsub.f32 %v103, %v186
    %v188 = vand.u32 %v187, 4294901760
    %v189 = vsub.f32 %v187, %v188
    %v190 = vand.u32 %v189, 4294901760
    %191 = vmatmul.mubr.f32.gmra.mrb[0].mxu0 %v190
    %v192 = vpop.f32.mrb[0].mxu0
    %v193 = vadd.f32 0.0, %v192
    %v194 = vpop.f32.mrb[0].mxu0
    %195 = vdwg.mxu0
    %196 = vmatprep.subr.mxu0 0.0
    %v197 = vand.u32 %v83, 4294901760
    %v198 = vsub.f32 %v83, %v197
    %v199 = vand.u32 %v198, 4294901760
    %v200 = vsub.f32 %v198, %v199
    %v201 = vand.u32 %v200, 4294901760
    %202 = vmatpush1.msra.mxu0 %v201
    %203 = vmatprep.subr.mxu0 0.0
    %v204 = vand.u32 %v84, 4294901760
    %v205 = vsub.f32 %v84, %v204
    %v206 = vand.u32 %v205, 4294901760
    %v207 = vsub.f32 %v205, %v206
    %v208 = vand.u32 %v207, 4294901760
    %209 = vmatpush1.msra.mxu0 %v208
    %210 = vmatprep.subr.mxu0 0.0
    %v211 = vand.u32 %v85, 4294901760
    %v212 = vsub.f32 %v85, %v211
    %v213 = vand.u32 %v212, 4294901760
    %v214 = vsub.f32 %v212, %v213
    %v215 = vand.u32 %v214, 4294901760
    %216 = vmatpush1.msra.mxu0 %v215
    %217 = vmatprep.subr.mxu0 0.0
    %v218 = vand.u32 %v86, 4294901760
    %v219 = vsub.f32 %v86, %v218
    %v220 = vand.u32 %v219, 4294901760
    %v221 = vsub.f32 %v219, %v220
    %v222 = vand.u32 %v221, 4294901760
    %223 = vmatpush1.msra.mxu0 %v222
    %224 = vmatprep.subr.mxu0 0.0
    %v225 = vand.u32 %v87, 4294901760
    %v226 = vsub.f32 %v87, %v225
    %v227 = vand.u32 %v226, 4294901760
    %v228 = vsub.f32 %v226, %v227
    %v229 = vand.u32 %v228, 4294901760
    %230 = vmatpush1.msra.mxu0 %v229
    %231 = vmatprep.subr.mxu0 0.0
    %v232 = vand.u32 %v88, 4294901760
    %v233 = vsub.f32 %v88, %v232
    %v234 = vand.u32 %v233, 4294901760
    %v235 = vsub.f32 %v233, %v234
    %v236 = vand.u32 %v235, 4294901760
    %237 = vmatpush1.msra.mxu0 %v236
    %238 = vmatprep.subr.mxu0 0.0
    %v239 = vand.u32 %v89, 4294901760
    %v240 = vsub.f32 %v89, %v239
    %v241 = vand.u32 %v240, 4294901760
    %v242 = vsub.f32 %v240, %v241
    %v243 = vand.u32 %v242, 4294901760
    %244 = vmatpush1.msra.mxu0 %v243
    %245 = vmatprep.subr.mxu0 0.0
    %v246 = vand.u32 %v90, 4294901760
    %v247 = vsub.f32 %v90, %v246
    %v248 = vand.u32 %v247, 4294901760
    %v249 = vsub.f32 %v247, %v248
    %v250 = vand.u32 %v249, 4294901760
    %251 = vmatpush1.msra.mxu0 %v250
    %252 = vmatprep.subr.mxu0 0.0
    %v253 = vand.u32 %v91, 4294901760
    %v254 = vsub.f32 %v91, %v253
    %v255 = vand.u32 %v254, 4294901760
    %v256 = vsub.f32 %v254, %v255
    %v257 = vand.u32 %v256, 4294901760
    %258 = vmatpush1.msra.mxu0 %v257
    %259 = vmatprep.subr.mxu0 0.0
    %v260 = vand.u32 %v92, 4294901760
    %v261 = vsub.f32 %v92, %v260
    %v262 = vand.u32 %v261, 4294901760
    %v263 = vsub.f32 %v261, %v262
    %v264 = vand.u32 %v263, 4294901760
    %265 = vmatpush1.msra.mxu0 %v264
    %266 = vmatprep.subr.mxu0 0.0
    %v267 = vand.u32 %v93, 4294901760
    %v268 = vsub.f32 %v93, %v267
    %v269 = vand.u32 %v268, 4294901760
    %v270 = vsub.f32 %v268, %v269
    %v271 = vand.u32 %v270, 4294901760
    %272 = vmatpush1.msra.mxu0 %v271
    %273 = vmatprep.subr.mxu0 0.0
    %v274 = vand.u32 %v94, 4294901760
    %v275 = vsub.f32 %v94, %v274
    %v276 = vand.u32 %v275, 4294901760
    %v277 = vsub.f32 %v275, %v276
    %v278 = vand.u32 %v277, 4294901760
    %279 = vmatpush1.msra.mxu0 %v278
    %280 = vmatprep.subr.mxu0 0.0
    %v281 = vand.u32 %v95, 4294901760
    %v282 = vsub.f32 %v95, %v281
    %v283 = vand.u32 %v282, 4294901760
    %v284 = vsub.f32 %v282, %v283
    %v285 = vand.u32 %v284, 4294901760
    %286 = vmatpush1.msra.mxu0 %v285
    %287 = vmatprep.subr.mxu0 0.0
    %v288 = vand.u32 %v96, 4294901760
    %v289 = vsub.f32 %v96, %v288
    %v290 = vand.u32 %v289, 4294901760
    %v291 = vsub.f32 %v289, %v290
    %v292 = vand.u32 %v291, 4294901760
    %293 = vmatpush1.msra.mxu0 %v292
    %294 = vmatprep.subr.mxu0 0.0
    %v295 = vand.u32 %v97, 4294901760
    %v296 = vsub.f32 %v97, %v295
    %v297 = vand.u32 %v296, 4294901760
    %v298 = vsub.f32 %v296, %v297
    %v299 = vand.u32 %v298, 4294901760
    %300 = vmatpush1.msra.mxu0 %v299
    %301 = vmatprep.subr.mxu0 0.0
    %v302 = vand.u32 %v98, 4294901760
    %v303 = vsub.f32 %v98, %v302
    %v304 = vand.u32 %v303, 4294901760
    %v305 = vsub.f32 %v303, %v304
    %v306 = vand.u32 %v305, 4294901760
    %307 = vmatpush1.msra.mxu0 %v306
    %308 = vmatprep.subr.mxu0 0.0
    %309 = vmatpush1.msra.mxu0 0.0
    %310 = vmatprep.subr.mxu0 0.0
    %311 = vmatpush1.msra.mxu0 0.0
    %312 = vmatprep.subr.mxu0 0.0
    %313 = vmatpush1.msra.mxu0 0.0
    %314 = vmatprep.subr.mxu0 0.0
    %315 = vmatpush1.msra.mxu0 0.0
    %316 = vmatprep.subr.mxu0 0.0
    %317 = vmatpush1.msra.mxu0 0.0
    %318 = vmatprep.subr.mxu0 0.0
    %319 = vmatpush1.msra.mxu0 0.0
    %320 = vmatprep.subr.mxu0 0.0
    %321 = vmatpush1.msra.mxu0 0.0
    %322 = vmatprep.subr.mxu0 0.0
    %323 = vmatpush1.msra.mxu0 0.0
    %324 = vmatprep.subr.mxu0 0.0
    %325 = vmatpush1.msra.mxu0 0.0
    %326 = vmatprep.subr.mxu0 0.0
    %327 = vmatpush1.msra.mxu0 0.0
    %328 = vmatprep.subr.mxu0 0.0
    %329 = vmatpush1.msra.mxu0 0.0
    %330 = vmatprep.subr.mxu0 0.0
    %331 = vmatpush1.msra.mxu0 0.0
    %332 = vmatprep.subr.mxu0 0.0
    %333 = vmatpush1.msra.mxu0 0.0
    %334 = vmatprep.subr.mxu0 0.0
    %335 = vmatpush1.msra.mxu0 0.0
    %336 = vmatprep.subr.mxu0 0.0
    %337 = vmatpush1.msra.mxu0 0.0
    %338 = vmatprep.subr.mxu0 0.0
    %339 = vmatpush1.msra.mxu0 0.0
    %340 = vmatprep.mubr.f32.mxu0 0.0
    %v341 = vand.u32 %v103, 4294901760
    %342 = vmatmul.mubr.f32.gmra.mrb[0].mxu0 %v341
    %v343 = vpop.f32.mrb[0].mxu0
    %v344 = vadd.f32 %v193, %v343
    %v345 = vpop.f32.mrb[0].mxu0
    %346 = vdwg.mxu0
    %347 = vmatprep.subr.mxu0 0.0
    %v348 = vand.u32 %v83, 4294901760
    %v349 = vsub.f32 %v83, %v348
    %350 = vmatpush1.msra.mxu0 %v349
    %351 = vmatprep.subr.mxu0 0.0
    %v352 = vand.u32 %v84, 4294901760
    %v353 = vsub.f32 %v84, %v352
    %354 = vmatpush1.msra.mxu0 %v353
    %355 = vmatprep.subr.mxu0 0.0
    %v356 = vand.u32 %v85, 4294901760
    %v357 = vsub.f32 %v85, %v356
    %358 = vmatpush1.msra.mxu0 %v357
    %359 = vmatprep.subr.mxu0 0.0
    %v360 = vand.u32 %v86, 4294901760
    %v361 = vsub.f32 %v86, %v360
    %362 = vmatpush1.msra.mxu0 %v361
    %363 = vmatprep.subr.mxu0 0.0
    %v364 = vand.u32 %v87, 4294901760
    %v365 = vsub.f32 %v87, %v364
    %366 = vmatpush1.msra.mxu0 %v365
    %367 = vmatprep.subr.mxu0 0.0
    %v368 = vand.u32 %v88, 4294901760
    %v369 = vsub.f32 %v88, %v368
    %370 = vmatpush1.msra.mxu0 %v369
    %371 = vmatprep.subr.mxu0 0.0
    %v372 = vand.u32 %v89, 4294901760
    %v373 = vsub.f32 %v89, %v372
    %374 = vmatpush1.msra.mxu0 %v373
    %375 = vmatprep.subr.mxu0 0.0
    %v376 = vand.u32 %v90, 4294901760
    %v377 = vsub.f32 %v90, %v376
    %378 = vmatpush1.msra.mxu0 %v377
    %379 = vmatprep.subr.mxu0 0.0
    %v380 = vand.u32 %v91, 4294901760
    %v381 = vsub.f32 %v91, %v380
    %382 = vmatpush1.msra.mxu0 %v381
    %383 = vmatprep.subr.mxu0 0.0
    %v384 = vand.u32 %v92, 4294901760
    %v385 = vsub.f32 %v92, %v384
    %386 = vmatpush1.msra.mxu0 %v385
    %387 = vmatprep.subr.mxu0 0.0
    %v388 = vand.u32 %v93, 4294901760
    %v389 = vsub.f32 %v93, %v388
    %390 = vmatpush1.msra.mxu0 %v389
    %391 = vmatprep.subr.mxu0 0.0
    %v392 = vand.u32 %v94, 4294901760
    %v393 = vsub.f32 %v94, %v392
    %394 = vmatpush1.msra.mxu0 %v393
    %395 = vmatprep.subr.mxu0 0.0
    %v396 = vand.u32 %v95, 4294901760
    %v397 = vsub.f32 %v95, %v396
    %398 = vmatpush1.msra.mxu0 %v397
    %399 = vmatprep.subr.mxu0 0.0
    %v400 = vand.u32 %v96, 4294901760
    %v401 = vsub.f32 %v96, %v400
    %402 = vmatpush1.msra.mxu0 %v401
    %403 = vmatprep.subr.mxu0 0.0
    %v404 = vand.u32 %v97, 4294901760
    %v405 = vsub.f32 %v97, %v404
    %406 = vmatpush1.msra.mxu0 %v405
    %407 = vmatprep.subr.mxu0 0.0
    %v408 = vand.u32 %v98, 4294901760
    %v409 = vsub.f32 %v98, %v408
    %410 = vmatpush1.msra.mxu0 %v409
    %411 = vmatprep.subr.mxu0 0.0
    %412 = vmatpush1.msra.mxu0 0.0
    %413 = vmatprep.subr.mxu0 0.0
    %414 = vmatpush1.msra.mxu0 0.0
    %415 = vmatprep.subr.mxu0 0.0
    %416 = vmatpush1.msra.mxu0 0.0
    %417 = vmatprep.subr.mxu0 0.0
    %418 = vmatpush1.msra.mxu0 0.0
    %419 = vmatprep.subr.mxu0 0.0
    %420 = vmatpush1.msra.mxu0 0.0
    %421 = vmatprep.subr.mxu0 0.0
    %422 = vmatpush1.msra.mxu0 0.0
    %423 = vmatprep.subr.mxu0 0.0
    %424 = vmatpush1.msra.mxu0 0.0
    %425 = vmatprep.subr.mxu0 0.0
    %426 = vmatpush1.msra.mxu0 0.0
    %427 = vmatprep.subr.mxu0 0.0
    %428 = vmatpush1.msra.mxu0 0.0
    %429 = vmatprep.subr.mxu0 0.0
    %430 = vmatpush1.msra.mxu0 0.0
    %431 = vmatprep.subr.mxu0 0.0
    %432 = vmatpush1.msra.mxu0 0.0
    %433 = vmatprep.subr.mxu0 0.0
    %434 = vmatpush1.msra.mxu0 0.0
    %435 = vmatprep.subr.mxu0 0.0
    %436 = vmatpush1.msra.mxu0 0.0
    %437 = vmatprep.subr.mxu0 0.0
    %438 = vmatpush1.msra.mxu0 0.0
    %439 = vmatprep.subr.mxu0 0.0
    %440 = vmatpush1.msra.mxu0 0.0
    %441 = vmatprep.subr.mxu0 0.0
    %442 = vmatpush1.msra.mxu0 0.0
    %443 = vmatprep.mubr.f32.mxu0 0.0
    %v444 = vand.u32 %v103, 4294901760
    %v445 = vsub.f32 %v103, %v444
    %446 = vmatmul.mubr.f32.gmra.mrb[0].mxu0 %v445
    %v447 = vpop.f32.mrb[0].mxu0
    %v448 = vadd.f32 %v344, %v447
    %v449 = vpop.f32.mrb[0].mxu0
    %450 = vdwg.mxu0
    %451 = vmatprep.subr.mxu0 0.0
    %v452 = vand.u32 %v83, 4294901760
    %453 = vmatpush1.msra.mxu0 %v452
    %454 = vmatprep.subr.mxu0 0.0
    %v455 = vand.u32 %v84, 4294901760
    %456 = vmatpush1.msra.mxu0 %v455
    %457 = vmatprep.subr.mxu0 0.0
    %v458 = vand.u32 %v85, 4294901760
    %459 = vmatpush1.msra.mxu0 %v458
    %460 = vmatprep.subr.mxu0 0.0
    %v461 = vand.u32 %v86, 4294901760
    %462 = vmatpush1.msra.mxu0 %v461
    %463 = vmatprep.subr.mxu0 0.0
    %v464 = vand.u32 %v87, 4294901760
    %465 = vmatpush1.msra.mxu0 %v464
    %466 = vmatprep.subr.mxu0 0.0
    %v467 = vand.u32 %v88, 4294901760
    %468 = vmatpush1.msra.mxu0 %v467
    %469 = vmatprep.subr.mxu0 0.0
    %v470 = vand.u32 %v89, 4294901760
    %471 = vmatpush1.msra.mxu0 %v470
    %472 = vmatprep.subr.mxu0 0.0
    %v473 = vand.u32 %v90, 4294901760
    %474 = vmatpush1.msra.mxu0 %v473
    %475 = vmatprep.subr.mxu0 0.0
    %v476 = vand.u32 %v91, 4294901760
    %477 = vmatpush1.msra.mxu0 %v476
    %478 = vmatprep.subr.mxu0 0.0
    %v479 = vand.u32 %v92, 4294901760
    %480 = vmatpush1.msra.mxu0 %v479
    %481 = vmatprep.subr.mxu0 0.0
    %v482 = vand.u32 %v93, 4294901760
    %483 = vmatpush1.msra.mxu0 %v482
    %484 = vmatprep.subr.mxu0 0.0
    %v485 = vand.u32 %v94, 4294901760
    %486 = vmatpush1.msra.mxu0 %v485
    %487 = vmatprep.subr.mxu0 0.0
    %v488 = vand.u32 %v95, 4294901760
    %489 = vmatpush1.msra.mxu0 %v488
    %490 = vmatprep.subr.mxu0 0.0
    %v491 = vand.u32 %v96, 4294901760
    %492 = vmatpush1.msra.mxu0 %v491
    %493 = vmatprep.subr.mxu0 0.0
    %v494 = vand.u32 %v97, 4294901760
    %495 = vmatpush1.msra.mxu0 %v494
    %496 = vmatprep.subr.mxu0 0.0
    %v497 = vand.u32 %v98, 4294901760
    %498 = vmatpush1.msra.mxu0 %v497
    %499 = vmatprep.subr.mxu0 0.0
    %500 = vmatpush1.msra.mxu0 0.0
    %501 = vmatprep.subr.mxu0 0.0
    %502 = vmatpush1.msra.mxu0 0.0
    %503 = vmatprep.subr.mxu0 0.0
    %504 = vmatpush1.msra.mxu0 0.0
    %505 = vmatprep.subr.mxu0 0.0
    %506 = vmatpush1.msra.mxu0 0.0
    %507 = vmatprep.subr.mxu0 0.0
    %508 = vmatpush1.msra.mxu0 0.0
    %509 = vmatprep.subr.mxu0 0.0
    %510 = vmatpush1.msra.mxu0 0.0
    %511 = vmatprep.subr.mxu0 0.0
    %512 = vmatpush1.msra.mxu0 0.0
    %513 = vmatprep.subr.mxu0 0.0
    %514 = vmatpush1.msra.mxu0 0.0
    %515 = vmatprep.subr.mxu0 0.0
    %516 = vmatpush1.msra.mxu0 0.0
    %517 = vmatprep.subr.mxu0 0.0
    %518 = vmatpush1.msra.mxu0 0.0
    %519 = vmatprep.subr.mxu0 0.0
    %520 = vmatpush1.msra.mxu0 0.0
    %521 = vmatprep.subr.mxu0 0.0
    %522 = vmatpush1.msra.mxu0 0.0
    %523 = vmatprep.subr.mxu0 0.0
    %524 = vmatpush1.msra.mxu0 0.0
    %525 = vmatprep.subr.mxu0 0.0
    %526 = vmatpush1.msra.mxu0 0.0
    %527 = vmatprep.subr.mxu0 0.0
    %528 = vmatpush1.msra.mxu0 0.0
    %529 = vmatprep.subr.mxu0 0.0
    %530 = vmatpush1.msra.mxu0 0.0
    %531 = vmatprep.mubr.f32.mxu0 0.0
    %v532 = vand.u32 %v103, 4294901760
    %v533 = vsub.f32 %v103, %v532
    %v534 = vand.u32 %v533, 4294901760
    %535 = vmatmul.mubr.f32.gmra.mrb[0].mxu0 %v534
    %v536 = vpop.f32.mrb[0].mxu0
    %v537 = vadd.f32 %v448, %v536
    %v538 = vpop.f32.mrb[0].mxu0
    %539 = vdwg.mxu0
    %540 = vmatprep.subr.mxu0 0.0
    %v541 = vand.u32 %v83, 4294901760
    %v542 = vsub.f32 %v83, %v541
    %v543 = vand.u32 %v542, 4294901760
    %544 = vmatpush1.msra.mxu0 %v543
    %545 = vmatprep.subr.mxu0 0.0
    %v546 = vand.u32 %v84, 4294901760
    %v547 = vsub.f32 %v84, %v546
    %v548 = vand.u32 %v547, 4294901760
    %549 = vmatpush1.msra.mxu0 %v548
    %550 = vmatprep.subr.mxu0 0.0
    %v551 = vand.u32 %v85, 4294901760
    %v552 = vsub.f32 %v85, %v551
    %v553 = vand.u32 %v552, 4294901760
    %554 = vmatpush1.msra.mxu0 %v553
    %555 = vmatprep.subr.mxu0 0.0
    %v556 = vand.u32 %v86, 4294901760
    %v557 = vsub.f32 %v86, %v556
    %v558 = vand.u32 %v557, 4294901760
    %559 = vmatpush1.msra.mxu0 %v558
    %560 = vmatprep.subr.mxu0 0.0
    %v561 = vand.u32 %v87, 4294901760
    %v562 = vsub.f32 %v87, %v561
    %v563 = vand.u32 %v562, 4294901760
    %564 = vmatpush1.msra.mxu0 %v563
    %565 = vmatprep.subr.mxu0 0.0
    %v566 = vand.u32 %v88, 4294901760
    %v567 = vsub.f32 %v88, %v566
    %v568 = vand.u32 %v567, 4294901760
    %569 = vmatpush1.msra.mxu0 %v568
    %570 = vmatprep.subr.mxu0 0.0
    %v571 = vand.u32 %v89, 4294901760
    %v572 = vsub.f32 %v89, %v571
    %v573 = vand.u32 %v572, 4294901760
    %574 = vmatpush1.msra.mxu0 %v573
    %575 = vmatprep.subr.mxu0 0.0
    %v576 = vand.u32 %v90, 4294901760
    %v577 = vsub.f32 %v90, %v576
    %v578 = vand.u32 %v577, 4294901760
    %579 = vmatpush1.msra.mxu0 %v578
    %580 = vmatprep.subr.mxu0 0.0
    %v581 = vand.u32 %v91, 4294901760
    %v582 = vsub.f32 %v91, %v581
    %v583 = vand.u32 %v582, 4294901760
    %584 = vmatpush1.msra.mxu0 %v583
    %585 = vmatprep.subr.mxu0 0.0
    %v586 = vand.u32 %v92, 4294901760
    %v587 = vsub.f32 %v92, %v586
    %v588 = vand.u32 %v587, 4294901760
    %589 = vmatpush1.msra.mxu0 %v588
    %590 = vmatprep.subr.mxu0 0.0
    %v591 = vand.u32 %v93, 4294901760
    %v592 = vsub.f32 %v93, %v591
    %v593 = vand.u32 %v592, 4294901760
    %594 = vmatpush1.msra.mxu0 %v593
    %595 = vmatprep.subr.mxu0 0.0
    %v596 = vand.u32 %v94, 4294901760
    %v597 = vsub.f32 %v94, %v596
    %v598 = vand.u32 %v597, 4294901760
    %599 = vmatpush1.msra.mxu0 %v598
    %600 = vmatprep.subr.mxu0 0.0
    %v601 = vand.u32 %v95, 4294901760
    %v602 = vsub.f32 %v95, %v601
    %v603 = vand.u32 %v602, 4294901760
    %604 = vmatpush1.msra.mxu0 %v603
    %605 = vmatprep.subr.mxu0 0.0
    %v606 = vand.u32 %v96, 4294901760
    %v607 = vsub.f32 %v96, %v606
    %v608 = vand.u32 %v607, 4294901760
    %609 = vmatpush1.msra.mxu0 %v608
    %610 = vmatprep.subr.mxu0 0.0
    %v611 = vand.u32 %v97, 4294901760
    %v612 = vsub.f32 %v97, %v611
    %v613 = vand.u32 %v612, 4294901760
    %614 = vmatpush1.msra.mxu0 %v613
    %615 = vmatprep.subr.mxu0 0.0
    %v616 = vand.u32 %v98, 4294901760
    %v617 = vsub.f32 %v98, %v616
    %v618 = vand.u32 %v617, 4294901760
    %619 = vmatpush1.msra.mxu0 %v618
    %620 = vmatprep.subr.mxu0 0.0
    %621 = vmatpush1.msra.mxu0 0.0
    %622 = vmatprep.subr.mxu0 0.0
    %623 = vmatpush1.msra.mxu0 0.0
    %624 = vmatprep.subr.mxu0 0.0
    %625 = vmatpush1.msra.mxu0 0.0
    %626 = vmatprep.subr.mxu0 0.0
    %627 = vmatpush1.msra.mxu0 0.0
    %628 = vmatprep.subr.mxu0 0.0
    %629 = vmatpush1.msra.mxu0 0.0
    %630 = vmatprep.subr.mxu0 0.0
    %631 = vmatpush1.msra.mxu0 0.0
    %632 = vmatprep.subr.mxu0 0.0
    %633 = vmatpush1.msra.mxu0 0.0
    %634 = vmatprep.subr.mxu0 0.0
    %635 = vmatpush1.msra.mxu0 0.0
    %636 = vmatprep.subr.mxu0 0.0
    %637 = vmatpush1.msra.mxu0 0.0
    %638 = vmatprep.subr.mxu0 0.0
    %639 = vmatpush1.msra.mxu0 0.0
    %640 = vmatprep.subr.mxu0 0.0
    %641 = vmatpush1.msra.mxu0 0.0
    %642 = vmatprep.subr.mxu0 0.0
    %643 = vmatpush1.msra.mxu0 0.0
    %644 = vmatprep.subr.mxu0 0.0
    %645 = vmatpush1.msra.mxu0 0.0
    %646 = vmatprep.subr.mxu0 0.0
    %647 = vmatpush1.msra.mxu0 0.0
    %648 = vmatprep.subr.mxu0 0.0
    %649 = vmatpush1.msra.mxu0 0.0
    %650 = vmatprep.subr.mxu0 0.0
    %651 = vmatpush1.msra.mxu0 0.0
    %652 = vmatprep.mubr.f32.mxu0 0.0
    %v653 = vand.u32 %v103, 4294901760
    %654 = vmatmul.mubr.f32.gmra.mrb[0].mxu0 %v653
    %v655 = vpop.f32.mrb[0].mxu0
    %v656 = vadd.f32 %v537, %v655
    %v657 = vpop.f32.mrb[0].mxu0
    %658 = vdwg.mxu0
    %659 = vmatprep.subr.mxu0 0.0
    %v660 = vand.u32 %v83, 4294901760
    %661 = vmatpush1.msra.mxu0 %v660
    %662 = vmatprep.subr.mxu0 0.0
    %v663 = vand.u32 %v84, 4294901760
    %664 = vmatpush1.msra.mxu0 %v663
    %665 = vmatprep.subr.mxu0 0.0
    %v666 = vand.u32 %v85, 4294901760
    %667 = vmatpush1.msra.mxu0 %v666
    %668 = vmatprep.subr.mxu0 0.0
    %v669 = vand.u32 %v86, 4294901760
    %670 = vmatpush1.msra.mxu0 %v669
    %671 = vmatprep.subr.mxu0 0.0
    %v672 = vand.u32 %v87, 4294901760
    %673 = vmatpush1.msra.mxu0 %v672
    %674 = vmatprep.subr.mxu0 0.0
    %v675 = vand.u32 %v88, 4294901760
    %676 = vmatpush1.msra.mxu0 %v675
    %677 = vmatprep.subr.mxu0 0.0
    %v678 = vand.u32 %v89, 4294901760
    %679 = vmatpush1.msra.mxu0 %v678
    %680 = vmatprep.subr.mxu0 0.0
    %v681 = vand.u32 %v90, 4294901760
    %682 = vmatpush1.msra.mxu0 %v681
    %683 = vmatprep.subr.mxu0 0.0
    %v684 = vand.u32 %v91, 4294901760
    %685 = vmatpush1.msra.mxu0 %v684
    %686 = vmatprep.subr.mxu0 0.0
    %v687 = vand.u32 %v92, 4294901760
    %688 = vmatpush1.msra.mxu0 %v687
    %689 = vmatprep.subr.mxu0 0.0
    %v690 = vand.u32 %v93, 4294901760
    %691 = vmatpush1.msra.mxu0 %v690
    %692 = vmatprep.subr.mxu0 0.0
    %v693 = vand.u32 %v94, 4294901760
    %694 = vmatpush1.msra.mxu0 %v693
    %695 = vmatprep.subr.mxu0 0.0
    %v696 = vand.u32 %v95, 4294901760
    %697 = vmatpush1.msra.mxu0 %v696
    %698 = vmatprep.subr.mxu0 0.0
    %v699 = vand.u32 %v96, 4294901760
    %700 = vmatpush1.msra.mxu0 %v699
    %701 = vmatprep.subr.mxu0 0.0
    %v702 = vand.u32 %v97, 4294901760
    %703 = vmatpush1.msra.mxu0 %v702
    %704 = vmatprep.subr.mxu0 0.0
    %v705 = vand.u32 %v98, 4294901760
    %706 = vmatpush1.msra.mxu0 %v705
    %707 = vmatprep.subr.mxu0 0.0
    %708 = vmatpush1.msra.mxu0 0.0
    %709 = vmatprep.subr.mxu0 0.0
    %710 = vmatpush1.msra.mxu0 0.0
    %711 = vmatprep.subr.mxu0 0.0
    %712 = vmatpush1.msra.mxu0 0.0
    %713 = vmatprep.subr.mxu0 0.0
    %714 = vmatpush1.msra.mxu0 0.0
    %715 = vmatprep.subr.mxu0 0.0
    %716 = vmatpush1.msra.mxu0 0.0
    %717 = vmatprep.subr.mxu0 0.0
    %718 = vmatpush1.msra.mxu0 0.0
    %719 = vmatprep.subr.mxu0 0.0
    %720 = vmatpush1.msra.mxu0 0.0
    %721 = vmatprep.subr.mxu0 0.0
    %722 = vmatpush1.msra.mxu0 0.0
    %723 = vmatprep.subr.mxu0 0.0
    %724 = vmatpush1.msra.mxu0 0.0
    %725 = vmatprep.subr.mxu0 0.0
    %726 = vmatpush1.msra.mxu0 0.0
    %727 = vmatprep.subr.mxu0 0.0
    %728 = vmatpush1.msra.mxu0 0.0
    %729 = vmatprep.subr.mxu0 0.0
    %730 = vmatpush1.msra.mxu0 0.0
    %731 = vmatprep.subr.mxu0 0.0
    %732 = vmatpush1.msra.mxu0 0.0
    %733 = vmatprep.subr.mxu0 0.0
    %734 = vmatpush1.msra.mxu0 0.0
    %735 = vmatprep.subr.mxu0 0.0
    %736 = vmatpush1.msra.mxu0 0.0
    %737 = vmatprep.subr.mxu0 0.0
    %738 = vmatpush1.msra.mxu0 0.0
    %739 = vmatprep.mubr.f32.mxu0 0.0
    %v740 = vand.u32 %v103, 4294901760
    %741 = vmatmul.mubr.f32.gmra.mrb[0].mxu0 %v740
    %v742 = vpop.f32.mrb[0].mxu0
    %v743 = vadd.f32 %v656, %v742
    %v744 = vpop.f32.mrb[0].mxu0
    %745 = vdwg.mxu0
    %v748 = vrot.slane %v64, 7
    %v749 = vsel %vm102, %v748, %v63
    %v751 = vmul.f32 %v743, %v749
    %v754 = vrot.slane %v66, 7
    %v755 = vsel %vm102, %v754, %v65
    %757 = vmatprep.subr.mxu0 0.0
    %v758 = vand.u32 %v67, 4294901760
    %759 = vmatpush1.msra.mxu0 %v758
    %760 = vmatprep.subr.mxu0 0.0
    %v761 = vand.u32 %v68, 4294901760
    %762 = vmatpush1.msra.mxu0 %v761
    %763 = vmatprep.subr.mxu0 0.0
    %v764 = vand.u32 %v69, 4294901760
    %765 = vmatpush1.msra.mxu0 %v764
    %766 = vmatprep.subr.mxu0 0.0
    %v767 = vand.u32 %v70, 4294901760
    %768 = vmatpush1.msra.mxu0 %v767
    %769 = vmatprep.subr.mxu0 0.0
    %v770 = vand.u32 %v71, 4294901760
    %771 = vmatpush1.msra.mxu0 %v770
    %772 = vmatprep.subr.mxu0 0.0
    %v773 = vand.u32 %v72, 4294901760
    %774 = vmatpush1.msra.mxu0 %v773
    %775 = vmatprep.subr.mxu0 0.0
    %v776 = vand.u32 %v73, 4294901760
    %777 = vmatpush1.msra.mxu0 %v776
    %778 = vmatprep.subr.mxu0 0.0
    %v779 = vand.u32 %v74, 4294901760
    %780 = vmatpush1.msra.mxu0 %v779
    %781 = vmatprep.subr.mxu0 0.0
    %v782 = vand.u32 %v75, 4294901760
    %783 = vmatpush1.msra.mxu0 %v782
    %784 = vmatprep.subr.mxu0 0.0
    %v785 = vand.u32 %v76, 4294901760
    %786 = vmatpush1.msra.mxu0 %v785
    %787 = vmatprep.subr.mxu0 0.0
    %v788 = vand.u32 %v77, 4294901760
    %789 = vmatpush1.msra.mxu0 %v788
    %790 = vmatprep.subr.mxu0 0.0
    %v791 = vand.u32 %v78, 4294901760
    %792 = vmatpush1.msra.mxu0 %v791
    %793 = vmatprep.subr.mxu0 0.0
    %v794 = vand.u32 %v79, 4294901760
    %795 = vmatpush1.msra.mxu0 %v794
    %796 = vmatprep.subr.mxu0 0.0
    %v797 = vand.u32 %v80, 4294901760
    %798 = vmatpush1.msra.mxu0 %v797
    %799 = vmatprep.subr.mxu0 0.0
    %v800 = vand.u32 %v81, 4294901760
    %801 = vmatpush1.msra.mxu0 %v800
    %802 = vmatprep.subr.mxu0 0.0
    %v803 = vand.u32 %v82, 4294901760
    %804 = vmatpush1.msra.mxu0 %v803
    %805 = vmatprep.subr.mxu0 0.0
    %806 = vmatpush1.msra.mxu0 0.0
    %807 = vmatprep.subr.mxu0 0.0
    %808 = vmatpush1.msra.mxu0 0.0
    %809 = vmatprep.subr.mxu0 0.0
    %810 = vmatpush1.msra.mxu0 0.0
    %811 = vmatprep.subr.mxu0 0.0
    %812 = vmatpush1.msra.mxu0 0.0
    %813 = vmatprep.subr.mxu0 0.0
    %814 = vmatpush1.msra.mxu0 0.0
    %815 = vmatprep.subr.mxu0 0.0
    %816 = vmatpush1.msra.mxu0 0.0
    %817 = vmatprep.subr.mxu0 0.0
    %818 = vmatpush1.msra.mxu0 0.0
    %819 = vmatprep.subr.mxu0 0.0
    %820 = vmatpush1.msra.mxu0 0.0
    %821 = vmatprep.subr.mxu0 0.0
    %822 = vmatpush1.msra.mxu0 0.0
    %823 = vmatprep.subr.mxu0 0.0
    %824 = vmatpush1.msra.mxu0 0.0
    %825 = vmatprep.subr.mxu0 0.0
    %826 = vmatpush1.msra.mxu0 0.0
    %827 = vmatprep.subr.mxu0 0.0
    %828 = vmatpush1.msra.mxu0 0.0
    %829 = vmatprep.subr.mxu0 0.0
    %830 = vmatpush1.msra.mxu0 0.0
    %831 = vmatprep.subr.mxu0 0.0
    %832 = vmatpush1.msra.mxu0 0.0
    %833 = vmatprep.subr.mxu0 0.0
    %834 = vmatpush1.msra.mxu0 0.0
    %835 = vmatprep.subr.mxu0 0.0
    %836 = vmatpush1.msra.mxu0 0.0
    %837 = vmatprep.mubr.f32.mxu0 0.0
    %v838 = vand.u32 %v755, 4294901760
    %v839 = vsub.f32 %v755, %v838
    %v840 = vand.u32 %v839, 4294901760
    %v841 = vsub.f32 %v839, %v840
    %v842 = vand.u32 %v841, 4294901760
    %843 = vmatmul.mubr.f32.gmra.mrb[0].mxu0 %v842
    %v844 = vpop.f32.mrb[0].mxu0
    %v845 = vadd.f32 %v751, %v844
    %v846 = vpop.f32.mrb[0].mxu0
    %847 = vdwg.mxu0
    %848 = vmatprep.subr.mxu0 0.0
    %v849 = vand.u32 %v67, 4294901760
    %v850 = vsub.f32 %v67, %v849
    %v851 = vand.u32 %v850, 4294901760
    %v852 = vsub.f32 %v850, %v851
    %v853 = vand.u32 %v852, 4294901760
    %854 = vmatpush1.msra.mxu0 %v853
    %855 = vmatprep.subr.mxu0 0.0
    %v856 = vand.u32 %v68, 4294901760
    %v857 = vsub.f32 %v68, %v856
    %v858 = vand.u32 %v857, 4294901760
    %v859 = vsub.f32 %v857, %v858
    %v860 = vand.u32 %v859, 4294901760
    %861 = vmatpush1.msra.mxu0 %v860
    %862 = vmatprep.subr.mxu0 0.0
    %v863 = vand.u32 %v69, 4294901760
    %v864 = vsub.f32 %v69, %v863
    %v865 = vand.u32 %v864, 4294901760
    %v866 = vsub.f32 %v864, %v865
    %v867 = vand.u32 %v866, 4294901760
    %868 = vmatpush1.msra.mxu0 %v867
    %869 = vmatprep.subr.mxu0 0.0
    %v870 = vand.u32 %v70, 4294901760
    %v871 = vsub.f32 %v70, %v870
    %v872 = vand.u32 %v871, 4294901760
    %v873 = vsub.f32 %v871, %v872
    %v874 = vand.u32 %v873, 4294901760
    %875 = vmatpush1.msra.mxu0 %v874
    %876 = vmatprep.subr.mxu0 0.0
    %v877 = vand.u32 %v71, 4294901760
    %v878 = vsub.f32 %v71, %v877
    %v879 = vand.u32 %v878, 4294901760
    %v880 = vsub.f32 %v878, %v879
    %v881 = vand.u32 %v880, 4294901760
    %882 = vmatpush1.msra.mxu0 %v881
    %883 = vmatprep.subr.mxu0 0.0
    %v884 = vand.u32 %v72, 4294901760
    %v885 = vsub.f32 %v72, %v884
    %v886 = vand.u32 %v885, 4294901760
    %v887 = vsub.f32 %v885, %v886
    %v888 = vand.u32 %v887, 4294901760
    %889 = vmatpush1.msra.mxu0 %v888
    %890 = vmatprep.subr.mxu0 0.0
    %v891 = vand.u32 %v73, 4294901760
    %v892 = vsub.f32 %v73, %v891
    %v893 = vand.u32 %v892, 4294901760
    %v894 = vsub.f32 %v892, %v893
    %v895 = vand.u32 %v894, 4294901760
    %896 = vmatpush1.msra.mxu0 %v895
    %897 = vmatprep.subr.mxu0 0.0
    %v898 = vand.u32 %v74, 4294901760
    %v899 = vsub.f32 %v74, %v898
    %v900 = vand.u32 %v899, 4294901760
    %v901 = vsub.f32 %v899, %v900
    %v902 = vand.u32 %v901, 4294901760
    %903 = vmatpush1.msra.mxu0 %v902
    %904 = vmatprep.subr.mxu0 0.0
    %v905 = vand.u32 %v75, 4294901760
    %v906 = vsub.f32 %v75, %v905
    %v907 = vand.u32 %v906, 4294901760
    %v908 = vsub.f32 %v906, %v907
    %v909 = vand.u32 %v908, 4294901760
    %910 = vmatpush1.msra.mxu0 %v909
    %911 = vmatprep.subr.mxu0 0.0
    %v912 = vand.u32 %v76, 4294901760
    %v913 = vsub.f32 %v76, %v912
    %v914 = vand.u32 %v913, 4294901760
    %v915 = vsub.f32 %v913, %v914
    %v916 = vand.u32 %v915, 4294901760
    %917 = vmatpush1.msra.mxu0 %v916
    %918 = vmatprep.subr.mxu0 0.0
    %v919 = vand.u32 %v77, 4294901760
    %v920 = vsub.f32 %v77, %v919
    %v921 = vand.u32 %v920, 4294901760
    %v922 = vsub.f32 %v920, %v921
    %v923 = vand.u32 %v922, 4294901760
    %924 = vmatpush1.msra.mxu0 %v923
    %925 = vmatprep.subr.mxu0 0.0
    %v926 = vand.u32 %v78, 4294901760
    %v927 = vsub.f32 %v78, %v926
    %v928 = vand.u32 %v927, 4294901760
    %v929 = vsub.f32 %v927, %v928
    %v930 = vand.u32 %v929, 4294901760
    %931 = vmatpush1.msra.mxu0 %v930
    %932 = vmatprep.subr.mxu0 0.0
    %v933 = vand.u32 %v79, 4294901760
    %v934 = vsub.f32 %v79, %v933
    %v935 = vand.u32 %v934, 4294901760
    %v936 = vsub.f32 %v934, %v935
    %v937 = vand.u32 %v936, 4294901760
    %938 = vmatpush1.msra.mxu0 %v937
    %939 = vmatprep.subr.mxu0 0.0
    %v940 = vand.u32 %v80, 4294901760
    %v941 = vsub.f32 %v80, %v940
    %v942 = vand.u32 %v941, 4294901760
    %v943 = vsub.f32 %v941, %v942
    %v944 = vand.u32 %v943, 4294901760
    %945 = vmatpush1.msra.mxu0 %v944
    %946 = vmatprep.subr.mxu0 0.0
    %v947 = vand.u32 %v81, 4294901760
    %v948 = vsub.f32 %v81, %v947
    %v949 = vand.u32 %v948, 4294901760
    %v950 = vsub.f32 %v948, %v949
    %v951 = vand.u32 %v950, 4294901760
    %952 = vmatpush1.msra.mxu0 %v951
    %953 = vmatprep.subr.mxu0 0.0
    %v954 = vand.u32 %v82, 4294901760
    %v955 = vsub.f32 %v82, %v954
    %v956 = vand.u32 %v955, 4294901760
    %v957 = vsub.f32 %v955, %v956
    %v958 = vand.u32 %v957, 4294901760
    %959 = vmatpush1.msra.mxu0 %v958
    %960 = vmatprep.subr.mxu0 0.0
    %961 = vmatpush1.msra.mxu0 0.0
    %962 = vmatprep.subr.mxu0 0.0
    %963 = vmatpush1.msra.mxu0 0.0
    %964 = vmatprep.subr.mxu0 0.0
    %965 = vmatpush1.msra.mxu0 0.0
    %966 = vmatprep.subr.mxu0 0.0
    %967 = vmatpush1.msra.mxu0 0.0
    %968 = vmatprep.subr.mxu0 0.0
    %969 = vmatpush1.msra.mxu0 0.0
    %970 = vmatprep.subr.mxu0 0.0
    %971 = vmatpush1.msra.mxu0 0.0
    %972 = vmatprep.subr.mxu0 0.0
    %973 = vmatpush1.msra.mxu0 0.0
    %974 = vmatprep.subr.mxu0 0.0
    %975 = vmatpush1.msra.mxu0 0.0
    %976 = vmatprep.subr.mxu0 0.0
    %977 = vmatpush1.msra.mxu0 0.0
    %978 = vmatprep.subr.mxu0 0.0
    %979 = vmatpush1.msra.mxu0 0.0
    %980 = vmatprep.subr.mxu0 0.0
    %981 = vmatpush1.msra.mxu0 0.0
    %982 = vmatprep.subr.mxu0 0.0
    %983 = vmatpush1.msra.mxu0 0.0
    %984 = vmatprep.subr.mxu0 0.0
    %985 = vmatpush1.msra.mxu0 0.0
    %986 = vmatprep.subr.mxu0 0.0
    %987 = vmatpush1.msra.mxu0 0.0
    %988 = vmatprep.subr.mxu0 0.0
    %989 = vmatpush1.msra.mxu0 0.0
    %990 = vmatprep.subr.mxu0 0.0
    %991 = vmatpush1.msra.mxu0 0.0
    %992 = vmatprep.mubr.f32.mxu0 0.0
    %v993 = vand.u32 %v755, 4294901760
    %994 = vmatmul.mubr.f32.gmra.mrb[0].mxu0 %v993
    %v995 = vpop.f32.mrb[0].mxu0
    %v996 = vadd.f32 %v845, %v995
    %v997 = vpop.f32.mrb[0].mxu0
    %998 = vdwg.mxu0
    %999 = vmatprep.subr.mxu0 0.0
    %v1000 = vand.u32 %v67, 4294901760
    %v1001 = vsub.f32 %v67, %v1000
    %1002 = vmatpush1.msra.mxu0 %v1001
    %1003 = vmatprep.subr.mxu0 0.0
    %v1004 = vand.u32 %v68, 4294901760
    %v1005 = vsub.f32 %v68, %v1004
    %1006 = vmatpush1.msra.mxu0 %v1005
    %1007 = vmatprep.subr.mxu0 0.0
    %v1008 = vand.u32 %v69, 4294901760
    %v1009 = vsub.f32 %v69, %v1008
    %1010 = vmatpush1.msra.mxu0 %v1009
    %1011 = vmatprep.subr.mxu0 0.0
    %v1012 = vand.u32 %v70, 4294901760
    %v1013 = vsub.f32 %v70, %v1012
    %1014 = vmatpush1.msra.mxu0 %v1013
    %1015 = vmatprep.subr.mxu0 0.0
    %v1016 = vand.u32 %v71, 4294901760
    %v1017 = vsub.f32 %v71, %v1016
    %1018 = vmatpush1.msra.mxu0 %v1017
    %1019 = vmatprep.subr.mxu0 0.0
    %v1020 = vand.u32 %v72, 4294901760
    %v1021 = vsub.f32 %v72, %v1020
    %1022 = vmatpush1.msra.mxu0 %v1021
    %1023 = vmatprep.subr.mxu0 0.0
    %v1024 = vand.u32 %v73, 4294901760
    %v1025 = vsub.f32 %v73, %v1024
    %1026 = vmatpush1.msra.mxu0 %v1025
    %1027 = vmatprep.subr.mxu0 0.0
    %v1028 = vand.u32 %v74, 4294901760
    %v1029 = vsub.f32 %v74, %v1028
    %1030 = vmatpush1.msra.mxu0 %v1029
    %1031 = vmatprep.subr.mxu0 0.0
    %v1032 = vand.u32 %v75, 4294901760
    %v1033 = vsub.f32 %v75, %v1032
    %1034 = vmatpush1.msra.mxu0 %v1033
    %1035 = vmatprep.subr.mxu0 0.0
    %v1036 = vand.u32 %v76, 4294901760
    %v1037 = vsub.f32 %v76, %v1036
    %1038 = vmatpush1.msra.mxu0 %v1037
    %1039 = vmatprep.subr.mxu0 0.0
    %v1040 = vand.u32 %v77, 4294901760
    %v1041 = vsub.f32 %v77, %v1040
    %1042 = vmatpush1.msra.mxu0 %v1041
    %1043 = vmatprep.subr.mxu0 0.0
    %v1044 = vand.u32 %v78, 4294901760
    %v1045 = vsub.f32 %v78, %v1044
    %1046 = vmatpush1.msra.mxu0 %v1045
    %1047 = vmatprep.subr.mxu0 0.0
    %v1048 = vand.u32 %v79, 4294901760
    %v1049 = vsub.f32 %v79, %v1048
    %1050 = vmatpush1.msra.mxu0 %v1049
    %1051 = vmatprep.subr.mxu0 0.0
    %v1052 = vand.u32 %v80, 4294901760
    %v1053 = vsub.f32 %v80, %v1052
    %1054 = vmatpush1.msra.mxu0 %v1053
    %1055 = vmatprep.subr.mxu0 0.0
    %v1056 = vand.u32 %v81, 4294901760
    %v1057 = vsub.f32 %v81, %v1056
    %1058 = vmatpush1.msra.mxu0 %v1057
    %1059 = vmatprep.subr.mxu0 0.0
    %v1060 = vand.u32 %v82, 4294901760
    %v1061 = vsub.f32 %v82, %v1060
    %1062 = vmatpush1.msra.mxu0 %v1061
    %1063 = vmatprep.subr.mxu0 0.0
    %1064 = vmatpush1.msra.mxu0 0.0
    %1065 = vmatprep.subr.mxu0 0.0
    %1066 = vmatpush1.msra.mxu0 0.0
    %1067 = vmatprep.subr.mxu0 0.0
    %1068 = vmatpush1.msra.mxu0 0.0
    %1069 = vmatprep.subr.mxu0 0.0
    %1070 = vmatpush1.msra.mxu0 0.0
    %1071 = vmatprep.subr.mxu0 0.0
    %1072 = vmatpush1.msra.mxu0 0.0
    %1073 = vmatprep.subr.mxu0 0.0
    %1074 = vmatpush1.msra.mxu0 0.0
    %1075 = vmatprep.subr.mxu0 0.0
    %1076 = vmatpush1.msra.mxu0 0.0
    %1077 = vmatprep.subr.mxu0 0.0
    %1078 = vmatpush1.msra.mxu0 0.0
    %1079 = vmatprep.subr.mxu0 0.0
    %1080 = vmatpush1.msra.mxu0 0.0
    %1081 = vmatprep.subr.mxu0 0.0
    %1082 = vmatpush1.msra.mxu0 0.0
    %1083 = vmatprep.subr.mxu0 0.0
    %1084 = vmatpush1.msra.mxu0 0.0
    %1085 = vmatprep.subr.mxu0 0.0
    %1086 = vmatpush1.msra.mxu0 0.0
    %1087 = vmatprep.subr.mxu0 0.0
    %1088 = vmatpush1.msra.mxu0 0.0
    %1089 = vmatprep.subr.mxu0 0.0
    %1090 = vmatpush1.msra.mxu0 0.0
    %1091 = vmatprep.subr.mxu0 0.0
    %1092 = vmatpush1.msra.mxu0 0.0
    %1093 = vmatprep.subr.mxu0 0.0
    %1094 = vmatpush1.msra.mxu0 0.0
    %1095 = vmatprep.mubr.f32.mxu0 0.0
    %v1096 = vand.u32 %v755, 4294901760
    %v1097 = vsub.f32 %v755, %v1096
    %1098 = vmatmul.mubr.f32.gmra.mrb[0].mxu0 %v1097
    %v1099 = vpop.f32.mrb[0].mxu0
    %v1100 = vadd.f32 %v996, %v1099
    %v1101 = vpop.f32.mrb[0].mxu0
    %1102 = vdwg.mxu0
    %1103 = vmatprep.subr.mxu0 0.0
    %v1104 = vand.u32 %v67, 4294901760
    %1105 = vmatpush1.msra.mxu0 %v1104
    %1106 = vmatprep.subr.mxu0 0.0
    %v1107 = vand.u32 %v68, 4294901760
    %1108 = vmatpush1.msra.mxu0 %v1107
    %1109 = vmatprep.subr.mxu0 0.0
    %v1110 = vand.u32 %v69, 4294901760
    %1111 = vmatpush1.msra.mxu0 %v1110
    %1112 = vmatprep.subr.mxu0 0.0
    %v1113 = vand.u32 %v70, 4294901760
    %1114 = vmatpush1.msra.mxu0 %v1113
    %1115 = vmatprep.subr.mxu0 0.0
    %v1116 = vand.u32 %v71, 4294901760
    %1117 = vmatpush1.msra.mxu0 %v1116
    %1118 = vmatprep.subr.mxu0 0.0
    %v1119 = vand.u32 %v72, 4294901760
    %1120 = vmatpush1.msra.mxu0 %v1119
    %1121 = vmatprep.subr.mxu0 0.0
    %v1122 = vand.u32 %v73, 4294901760
    %1123 = vmatpush1.msra.mxu0 %v1122
    %1124 = vmatprep.subr.mxu0 0.0
    %v1125 = vand.u32 %v74, 4294901760
    %1126 = vmatpush1.msra.mxu0 %v1125
    %1127 = vmatprep.subr.mxu0 0.0
    %v1128 = vand.u32 %v75, 4294901760
    %1129 = vmatpush1.msra.mxu0 %v1128
    %1130 = vmatprep.subr.mxu0 0.0
    %v1131 = vand.u32 %v76, 4294901760
    %1132 = vmatpush1.msra.mxu0 %v1131
    %1133 = vmatprep.subr.mxu0 0.0
    %v1134 = vand.u32 %v77, 4294901760
    %1135 = vmatpush1.msra.mxu0 %v1134
    %1136 = vmatprep.subr.mxu0 0.0
    %v1137 = vand.u32 %v78, 4294901760
    %1138 = vmatpush1.msra.mxu0 %v1137
    %1139 = vmatprep.subr.mxu0 0.0
    %v1140 = vand.u32 %v79, 4294901760
    %1141 = vmatpush1.msra.mxu0 %v1140
    %1142 = vmatprep.subr.mxu0 0.0
    %v1143 = vand.u32 %v80, 4294901760
    %1144 = vmatpush1.msra.mxu0 %v1143
    %1145 = vmatprep.subr.mxu0 0.0
    %v1146 = vand.u32 %v81, 4294901760
    %1147 = vmatpush1.msra.mxu0 %v1146
    %1148 = vmatprep.subr.mxu0 0.0
    %v1149 = vand.u32 %v82, 4294901760
    %1150 = vmatpush1.msra.mxu0 %v1149
    %1151 = vmatprep.subr.mxu0 0.0
    %1152 = vmatpush1.msra.mxu0 0.0
    %1153 = vmatprep.subr.mxu0 0.0
    %1154 = vmatpush1.msra.mxu0 0.0
    %1155 = vmatprep.subr.mxu0 0.0
    %1156 = vmatpush1.msra.mxu0 0.0
    %1157 = vmatprep.subr.mxu0 0.0
    %1158 = vmatpush1.msra.mxu0 0.0
    %1159 = vmatprep.subr.mxu0 0.0
    %1160 = vmatpush1.msra.mxu0 0.0
    %1161 = vmatprep.subr.mxu0 0.0
    %1162 = vmatpush1.msra.mxu0 0.0
    %1163 = vmatprep.subr.mxu0 0.0
    %1164 = vmatpush1.msra.mxu0 0.0
    %1165 = vmatprep.subr.mxu0 0.0
    %1166 = vmatpush1.msra.mxu0 0.0
    %1167 = vmatprep.subr.mxu0 0.0
    %1168 = vmatpush1.msra.mxu0 0.0
    %1169 = vmatprep.subr.mxu0 0.0
    %1170 = vmatpush1.msra.mxu0 0.0
    %1171 = vmatprep.subr.mxu0 0.0
    %1172 = vmatpush1.msra.mxu0 0.0
    %1173 = vmatprep.subr.mxu0 0.0
    %1174 = vmatpush1.msra.mxu0 0.0
    %1175 = vmatprep.subr.mxu0 0.0
    %1176 = vmatpush1.msra.mxu0 0.0
    %1177 = vmatprep.subr.mxu0 0.0
    %1178 = vmatpush1.msra.mxu0 0.0
    %1179 = vmatprep.subr.mxu0 0.0
    %1180 = vmatpush1.msra.mxu0 0.0
    %1181 = vmatprep.subr.mxu0 0.0
    %1182 = vmatpush1.msra.mxu0 0.0
    %1183 = vmatprep.mubr.f32.mxu0 0.0
    %v1184 = vand.u32 %v755, 4294901760
    %v1185 = vsub.f32 %v755, %v1184
    %v1186 = vand.u32 %v1185, 4294901760
    %1187 = vmatmul.mubr.f32.gmra.mrb[0].mxu0 %v1186
    %v1188 = vpop.f32.mrb[0].mxu0
    %v1189 = vadd.f32 %v1100, %v1188
    %v1190 = vpop.f32.mrb[0].mxu0
    %1191 = vdwg.mxu0
    %1192 = vmatprep.subr.mxu0 0.0
    %v1193 = vand.u32 %v67, 4294901760
    %v1194 = vsub.f32 %v67, %v1193
    %v1195 = vand.u32 %v1194, 4294901760
    %1196 = vmatpush1.msra.mxu0 %v1195
    %1197 = vmatprep.subr.mxu0 0.0
    %v1198 = vand.u32 %v68, 4294901760
    %v1199 = vsub.f32 %v68, %v1198
    %v1200 = vand.u32 %v1199, 4294901760
    %1201 = vmatpush1.msra.mxu0 %v1200
    %1202 = vmatprep.subr.mxu0 0.0
    %v1203 = vand.u32 %v69, 4294901760
    %v1204 = vsub.f32 %v69, %v1203
    %v1205 = vand.u32 %v1204, 4294901760
    %1206 = vmatpush1.msra.mxu0 %v1205
    %1207 = vmatprep.subr.mxu0 0.0
    %v1208 = vand.u32 %v70, 4294901760
    %v1209 = vsub.f32 %v70, %v1208
    %v1210 = vand.u32 %v1209, 4294901760
    %1211 = vmatpush1.msra.mxu0 %v1210
    %1212 = vmatprep.subr.mxu0 0.0
    %v1213 = vand.u32 %v71, 4294901760
    %v1214 = vsub.f32 %v71, %v1213
    %v1215 = vand.u32 %v1214, 4294901760
    %1216 = vmatpush1.msra.mxu0 %v1215
    %1217 = vmatprep.subr.mxu0 0.0
    %v1218 = vand.u32 %v72, 4294901760
    %v1219 = vsub.f32 %v72, %v1218
    %v1220 = vand.u32 %v1219, 4294901760
    %1221 = vmatpush1.msra.mxu0 %v1220
    %1222 = vmatprep.subr.mxu0 0.0
    %v1223 = vand.u32 %v73, 4294901760
    %v1224 = vsub.f32 %v73, %v1223
    %v1225 = vand.u32 %v1224, 4294901760
    %1226 = vmatpush1.msra.mxu0 %v1225
    %1227 = vmatprep.subr.mxu0 0.0
    %v1228 = vand.u32 %v74, 4294901760
    %v1229 = vsub.f32 %v74, %v1228
    %v1230 = vand.u32 %v1229, 4294901760
    %1231 = vmatpush1.msra.mxu0 %v1230
    %1232 = vmatprep.subr.mxu0 0.0
    %v1233 = vand.u32 %v75, 4294901760
    %v1234 = vsub.f32 %v75, %v1233
    %v1235 = vand.u32 %v1234, 4294901760
    %1236 = vmatpush1.msra.mxu0 %v1235
    %1237 = vmatprep.subr.mxu0 0.0
    %v1238 = vand.u32 %v76, 4294901760
    %v1239 = vsub.f32 %v76, %v1238
    %v1240 = vand.u32 %v1239, 4294901760
    %1241 = vmatpush1.msra.mxu0 %v1240
    %1242 = vmatprep.subr.mxu0 0.0
    %v1243 = vand.u32 %v77, 4294901760
    %v1244 = vsub.f32 %v77, %v1243
    %v1245 = vand.u32 %v1244, 4294901760
    %1246 = vmatpush1.msra.mxu0 %v1245
    %1247 = vmatprep.subr.mxu0 0.0
    %v1248 = vand.u32 %v78, 4294901760
    %v1249 = vsub.f32 %v78, %v1248
    %v1250 = vand.u32 %v1249, 4294901760
    %1251 = vmatpush1.msra.mxu0 %v1250
    %1252 = vmatprep.subr.mxu0 0.0
    %v1253 = vand.u32 %v79, 4294901760
    %v1254 = vsub.f32 %v79, %v1253
    %v1255 = vand.u32 %v1254, 4294901760
    %1256 = vmatpush1.msra.mxu0 %v1255
    %1257 = vmatprep.subr.mxu0 0.0
    %v1258 = vand.u32 %v80, 4294901760
    %v1259 = vsub.f32 %v80, %v1258
    %v1260 = vand.u32 %v1259, 4294901760
    %1261 = vmatpush1.msra.mxu0 %v1260
    %1262 = vmatprep.subr.mxu0 0.0
    %v1263 = vand.u32 %v81, 4294901760
    %v1264 = vsub.f32 %v81, %v1263
    %v1265 = vand.u32 %v1264, 4294901760
    %1266 = vmatpush1.msra.mxu0 %v1265
    %1267 = vmatprep.subr.mxu0 0.0
    %v1268 = vand.u32 %v82, 4294901760
    %v1269 = vsub.f32 %v82, %v1268
    %v1270 = vand.u32 %v1269, 4294901760
    %1271 = vmatpush1.msra.mxu0 %v1270
    %1272 = vmatprep.subr.mxu0 0.0
    %1273 = vmatpush1.msra.mxu0 0.0
    %1274 = vmatprep.subr.mxu0 0.0
    %1275 = vmatpush1.msra.mxu0 0.0
    %1276 = vmatprep.subr.mxu0 0.0
    %1277 = vmatpush1.msra.mxu0 0.0
    %1278 = vmatprep.subr.mxu0 0.0
    %1279 = vmatpush1.msra.mxu0 0.0
    %1280 = vmatprep.subr.mxu0 0.0
    %1281 = vmatpush1.msra.mxu0 0.0
    %1282 = vmatprep.subr.mxu0 0.0
    %1283 = vmatpush1.msra.mxu0 0.0
    %1284 = vmatprep.subr.mxu0 0.0
    %1285 = vmatpush1.msra.mxu0 0.0
    %1286 = vmatprep.subr.mxu0 0.0
    %1287 = vmatpush1.msra.mxu0 0.0
    %1288 = vmatprep.subr.mxu0 0.0
    %1289 = vmatpush1.msra.mxu0 0.0
    %1290 = vmatprep.subr.mxu0 0.0
    %1291 = vmatpush1.msra.mxu0 0.0
    %1292 = vmatprep.subr.mxu0 0.0
    %1293 = vmatpush1.msra.mxu0 0.0
    %1294 = vmatprep.subr.mxu0 0.0
    %1295 = vmatpush1.msra.mxu0 0.0
    %1296 = vmatprep.subr.mxu0 0.0
    %1297 = vmatpush1.msra.mxu0 0.0
    %1298 = vmatprep.subr.mxu0 0.0
    %1299 = vmatpush1.msra.mxu0 0.0
    %1300 = vmatprep.subr.mxu0 0.0
    %1301 = vmatpush1.msra.mxu0 0.0
    %1302 = vmatprep.subr.mxu0 0.0
    %1303 = vmatpush1.msra.mxu0 0.0
    %1304 = vmatprep.mubr.f32.mxu0 0.0
    %v1305 = vand.u32 %v755, 4294901760
    %1306 = vmatmul.mubr.f32.gmra.mrb[0].mxu0 %v1305
    %v1307 = vpop.f32.mrb[0].mxu0
    %v1308 = vadd.f32 %v1189, %v1307
    %v1309 = vpop.f32.mrb[0].mxu0
    %1310 = vdwg.mxu0
    %1311 = vmatprep.subr.mxu0 0.0
    %v1312 = vand.u32 %v67, 4294901760
    %1313 = vmatpush1.msra.mxu0 %v1312
    %1314 = vmatprep.subr.mxu0 0.0
    %v1315 = vand.u32 %v68, 4294901760
    %1316 = vmatpush1.msra.mxu0 %v1315
    %1317 = vmatprep.subr.mxu0 0.0
    %v1318 = vand.u32 %v69, 4294901760
    %1319 = vmatpush1.msra.mxu0 %v1318
    %1320 = vmatprep.subr.mxu0 0.0
    %v1321 = vand.u32 %v70, 4294901760
    %1322 = vmatpush1.msra.mxu0 %v1321
    %1323 = vmatprep.subr.mxu0 0.0
    %v1324 = vand.u32 %v71, 4294901760
    %1325 = vmatpush1.msra.mxu0 %v1324
    %1326 = vmatprep.subr.mxu0 0.0
    %v1327 = vand.u32 %v72, 4294901760
    %1328 = vmatpush1.msra.mxu0 %v1327
    %1329 = vmatprep.subr.mxu0 0.0
    %v1330 = vand.u32 %v73, 4294901760
    %1331 = vmatpush1.msra.mxu0 %v1330
    %1332 = vmatprep.subr.mxu0 0.0
    %v1333 = vand.u32 %v74, 4294901760
    %1334 = vmatpush1.msra.mxu0 %v1333
    %1335 = vmatprep.subr.mxu0 0.0
    %v1336 = vand.u32 %v75, 4294901760
    %1337 = vmatpush1.msra.mxu0 %v1336
    %1338 = vmatprep.subr.mxu0 0.0
    %v1339 = vand.u32 %v76, 4294901760
    %1340 = vmatpush1.msra.mxu0 %v1339
    %1341 = vmatprep.subr.mxu0 0.0
    %v1342 = vand.u32 %v77, 4294901760
    %1343 = vmatpush1.msra.mxu0 %v1342
    %1344 = vmatprep.subr.mxu0 0.0
    %v1345 = vand.u32 %v78, 4294901760
    %1346 = vmatpush1.msra.mxu0 %v1345
    %1347 = vmatprep.subr.mxu0 0.0
    %v1348 = vand.u32 %v79, 4294901760
    %1349 = vmatpush1.msra.mxu0 %v1348
    %1350 = vmatprep.subr.mxu0 0.0
    %v1351 = vand.u32 %v80, 4294901760
    %1352 = vmatpush1.msra.mxu0 %v1351
    %1353 = vmatprep.subr.mxu0 0.0
    %v1354 = vand.u32 %v81, 4294901760
    %1355 = vmatpush1.msra.mxu0 %v1354
    %1356 = vmatprep.subr.mxu0 0.0
    %v1357 = vand.u32 %v82, 4294901760
    %1358 = vmatpush1.msra.mxu0 %v1357
    %1359 = vmatprep.subr.mxu0 0.0
    %1360 = vmatpush1.msra.mxu0 0.0
    %1361 = vmatprep.subr.mxu0 0.0
    %1362 = vmatpush1.msra.mxu0 0.0
    %1363 = vmatprep.subr.mxu0 0.0
    %1364 = vmatpush1.msra.mxu0 0.0
    %1365 = vmatprep.subr.mxu0 0.0
    %1366 = vmatpush1.msra.mxu0 0.0
    %1367 = vmatprep.subr.mxu0 0.0
    %1368 = vmatpush1.msra.mxu0 0.0
    %1369 = vmatprep.subr.mxu0 0.0
    %1370 = vmatpush1.msra.mxu0 0.0
    %1371 = vmatprep.subr.mxu0 0.0
    %1372 = vmatpush1.msra.mxu0 0.0
    %1373 = vmatprep.subr.mxu0 0.0
    %1374 = vmatpush1.msra.mxu0 0.0
    %1375 = vmatprep.subr.mxu0 0.0
    %1376 = vmatpush1.msra.mxu0 0.0
    %1377 = vmatprep.subr.mxu0 0.0
    %1378 = vmatpush1.msra.mxu0 0.0
    %1379 = vmatprep.subr.mxu0 0.0
    %1380 = vmatpush1.msra.mxu0 0.0
    %1381 = vmatprep.subr.mxu0 0.0
    %1382 = vmatpush1.msra.mxu0 0.0
    %1383 = vmatprep.subr.mxu0 0.0
    %1384 = vmatpush1.msra.mxu0 0.0
    %1385 = vmatprep.subr.mxu0 0.0
    %1386 = vmatpush1.msra.mxu0 0.0
    %1387 = vmatprep.subr.mxu0 0.0
    %1388 = vmatpush1.msra.mxu0 0.0
    %1389 = vmatprep.subr.mxu0 0.0
    %1390 = vmatpush1.msra.mxu0 0.0
    %1391 = vmatprep.mubr.f32.mxu0 0.0
    %v1392 = vand.u32 %v755, 4294901760
    %1393 = vmatmul.mubr.f32.gmra.mrb[0].mxu0 %v1392
    %v1394 = vpop.f32.mrb[0].mxu0
    %v1395 = vadd.f32 %v1308, %v1394
    %v1396 = vpop.f32.mrb[0].mxu0
    %1397 = vdwg.mxu0
    %v1400 = vunpack.c.l.s4 1966171168
    %v1401 = vunpack.c.0.s8 %v1400
    %v1402 = vlaneseq
    %v1403 = vshrl.u32 %v1402, 7
    %v1404 = vsub.s32 %v1401, %v1403
    %v1405 = vrot.slane %v1395, %v1404
    %v1406 = vcombine.high %v1405, %v1405
    %v1408 = vunpack.c.l.s4 1966171168
    %v1409 = vunpack.c.0.s8 %v1408
    %v1410 = vlaneseq
    %v1411 = vshrl.u32 %v1410, 7
    %v1412 = vsub.s32 %v1409, %v1411
    %v1413 = vrot.slane %v1405, %v1412
    %v1415 = vunpack.c.l.s4 1966171168
    %v1416 = vunpack.c.0.s8 %v1415
    %v1417 = vlaneseq
    %v1418 = vshrl.u32 %v1417, 7
    %v1419 = vsub.s32 %v1416, %v1418
    %v1420 = vrot.slane %v1406, %v1419
    %v1423 = vmul.f32 %v49, %v1413
    %v1424 = vmul.f32 %v50, %v1420
    %v1425 = vmul.f32 %v55, %v51
    %v1426 = vmul.f32 %v56, %v52
    %1427 = vst [vmem:[#allocation7] sm:$0x1] %v1423
    %1428 = vst [vmem:[#allocation7 + $0x4] sm:$0x1] %v1424
    %v1429 = vsub.f32 %v53, %v1423
    %v1430 = vsub.f32 %v54, %v1424
    %1431 = vst [vmem:[#allocation7 + $0x1] sm:$0x1] %v1429
    %1432 = vst [vmem:[#allocation7 + $0x5] sm:$0x1] %v1430
    %v1433 = vadd.f32 %v55, %v1423
    %v1434 = vadd.f32 %v56, %v1424
    %v1435 = vsub.f32 %v1433, %v1425
    %v1436 = vsub.f32 %v1434, %v1426
    %1437 = vst [vmem:[#allocation7 + $0x2] sm:$0x1] %v1435
    %1438 = vst [vmem:[#allocation7 + $0x6] sm:$0x1] %v1436
    %v1439 = vadd.f32 %v1425, %v57
    %v1440 = vadd.f32 %v1426, %v58
    %1441 = vst [vmem:[#allocation7 + $0x3] sm:$0x1] %v1439
    %1442 = vst [vmem:[#allocation7 + $0x7] sm:$0x1] %v1440
    // Predicated region
    $region30: #{tpu_custom_call.1} parent=1 // pred_check
      _
    $region31: #{tpu_custom_call.1} parent=1 // pred_check_branch
      %1444 = sbr.rel (0) target = $region33
    $region32: #{tpu_custom_call.1} parent=1 // pred_region
      %s1446 = ssub.s32 128, 128
      %1447 = vsyncadd [#allocation4], %s1446
      %s1448 = sshll.u32 [#allocation7], 4
      %s1449 = int_to_ptr.vmem [resolvable:$true] %s1448
      %1454 = dma.vmem_to_hbm [thread:$0]  %s1449, 128, %s5, [#allocation4], 64, 64, 4
    $region33: #{tpu_custom_call.1} parent=1 // pred_fallthru
      _
    // Predicated region
    $region34: #{tpu_custom_call.1} parent=1 // pred_check
      _
    $region35: #{tpu_custom_call.1} parent=1 // pred_check_branch
      %1456 = sbr.rel (0) target = $region37
    $region36: #{tpu_custom_call.1} parent=1 // pred_region
      %1457 = dma.done [#allocation4], 128
    $region37: #{tpu_custom_call.1} parent=1 // pred_fallthru
      _
    %1458 = vsyncpa [#allocation3], 1
    %1459 = vsyncpa [#allocation6], 1
    %1460 = vsyncpa [#allocation4], 1

// kernel: tpu_custom_call.1
$region0: #{tpu_custom_call.1}
  #allocation0 [shape = 'u32[]', space=smem, size = 0x4, offset = 0x4, fixed_abs, tag = 'smem constant byte address 0x4 - core index']
  #allocation1 [shape = 'u32[144,128]{1,0:T(1,128)}', space=vmem, size = 0x12000, scoped, tag = 'internal scratch']
  %s0 = inlined_call_operand.vmem [shape: f32[2,1,128], index: 0, kind: input, shape index: {}]
  %s1 = inlined_call_operand.vmem [shape: f32[2,1,128], index: 1, kind: input, shape index: {}]
  %s2 = inlined_call_operand.hbm [shape: f32[1,128,128], index: 2, kind: input, shape index: {}]
  %s3 = inlined_call_operand.hbm [shape: f32[1,128,128], index: 3, kind: input, shape index: {}]
  %s4 = inlined_call_operand.vmem [shape: f32[2,3,128], index: 4, kind: input, shape index: {}]
  %s5 = inlined_call_operand.hbm [shape: f32[2,4,128], index: 5, kind: output, shape index: {}]
  %s6 = sld [smem:[#allocation0]]
  $region38: #{tpu_custom_call.1} parent=0
    _
  %s8 = ssub.s32 1, %s6
  %s9 = scalar_select 0, %s8, %s6
  $region1: #{tpu_custom_call.1} parent=0
    #allocation2 [shape = 'u8[65536]{0}', space=vmem, size = 0x10000, scoped, tag = 'input window, operand 2, single buffered']
    #allocation3 [shape = 's32[1]{0}', space=sflag, size = 0x4, scoped, tag = 'scoped memory for tpu_custom_call.1']
    #allocation4 [shape = 's32[1]{0}', space=sflag, size = 0x4, scoped, tag = 'scoped memory for tpu_custom_call.1']
    #allocation5 [shape = 'u8[65536]{0}', space=vmem, size = 0x10000, scoped, tag = 'input window, operand 3, single buffered']
    #allocation6 [shape = 's32[1]{0}', space=sflag, size = 0x4, scoped, tag = 'scoped memory for tpu_custom_call.1']
    #allocation7 [shape = 'u8[4096]{0}', space=vmem, size = 0x1000, scoped, tag = 'output window, operand 0, single buffered']
    %10 = vsyncpa [#allocation3], 0
    %11 = vsyncpa [#allocation6], 0
    %12 = vsyncpa [#allocation4], 0
    // Predicated region
    $region2: #{tpu_custom_call.1} parent=1 // pred_check
      _
    $region3: #{tpu_custom_call.1} parent=1 // pred_check_branch
      %14 = sbr.rel (0) target = $region5
    $region4: #{tpu_custom_call.1} parent=1 // pred_region
      _
    $region5: #{tpu_custom_call.1} parent=1 // pred_fallthru
      _
    // Predicated region
    $region6: #{tpu_custom_call.1} parent=1 // pred_check
      _
    $region7: #{tpu_custom_call.1} parent=1 // pred_check_branch
      %16 = sbr.rel (0) target = $region9
    $region8: #{tpu_custom_call.1} parent=1 // pred_region
      _
    $region9: #{tpu_custom_call.1} parent=1 // pred_fallthru
      _
    // Predicated region
    $region10: #{tpu_custom_call.1} parent=1 // pred_check
      _
    $region11: #{tpu_custom_call.1} parent=1 // pred_check_branch
      %18 = sbr.rel (0) target = $region13
    $region12: #{tpu_custom_call.1} parent=1 // pred_region
      %s20 = ssub.s32 2048, 2048
      %21 = vsyncadd [#allocation3], %s20
      %s22 = sshll.u32 [#allocation2], 4
      %s23 = int_to_ptr.vmem [resolvable:$true] %s22
      %28 = dma.hbm_to_vmem [thread:$0]  %s2, 2048, %s23, [#allocation3], 128, 128, 8
    $region13: #{tpu_custom_call.1} parent=1 // pred_fallthru
      _
    // Predicated region
    $region14: #{tpu_custom_call.1} parent=1 // pred_check
      _
    $region15: #{tpu_custom_call.1} parent=1 // pred_check_branch
      %30 = sbr.rel (0) target = $region17
    $region16: #{tpu_custom_call.1} parent=1 // pred_region
      %s32 = ssub.s32 2048, 2048
      %33 = vsyncadd [#allocation6], %s32
      %s34 = sshll.u32 [#allocation5], 4
      %s35 = int_to_ptr.vmem [resolvable:$true] %s34
      %40 = dma.hbm_to_vmem [thread:$0]  %s3, 2048, %s35, [#allocation6], 128, 128, 8
    $region17: #{tpu_custom_call.1} parent=1 // pred_fallthru
      _
    // Predicated region
    $region18: #{tpu_custom_call.1} parent=1 // pred_check
      _
    $region19: #{tpu_custom_call.1} parent=1 // pred_check_branch
      %42 = sbr.rel (0) target = $region21
    $region20: #{tpu_custom_call.1} parent=1 // pred_region
      _
    $region21: #{tpu_custom_call.1} parent=1 // pred_fallthru
      _
    // Predicated region
    $region22: #{tpu_custom_call.1} parent=1 // pred_check
      _
    $region23: #{tpu_custom_call.1} parent=1 // pred_check_branch
      %44 = sbr.rel (0) target = $region25
    $region24: #{tpu_custom_call.1} parent=1 // pred_region
      %45 = dma.done [#allocation3], 2048
    $region25: #{tpu_custom_call.1} parent=1 // pred_fallthru
      _
    // Predicated region
    $region26: #{tpu_custom_call.1} parent=1 // pred_check
      _
    $region27: #{tpu_custom_call.1} parent=1 // pred_check_branch
      %47 = sbr.rel (0) target = $region29
    $region28: #{tpu_custom_call.1} parent=1 // pred_region
      %48 = dma.done [#allocation6], 2048
    $region29: #{tpu_custom_call.1} parent=1 // pred_fallthru
      _
    %v49 = vld [vmem:[%s0] sm:$0x1]
    %v50 = vld [vmem:[%s0 + $0x1] sm:$0x1]
    %v51 = vld [vmem:[%s1] sm:$0x1]
    %v52 = vld [vmem:[%s1 + $0x1] sm:$0x1]
    %v53 = vld [vmem:[%s4] sm:$0x1]
    %v54 = vld [vmem:[%s4 + $0x4] sm:$0x1]
    %v55 = vld [vmem:[%s4 + $0x1] sm:$0x1]
    %v56 = vld [vmem:[%s4 + $0x5] sm:$0x1]
    %v57 = vld [vmem:[%s4 + $0x2] sm:$0x1]
    %v58 = vld [vmem:[%s4 + $0x6] sm:$0x1]
    %v59 = vadd.f32 %v53, %v55
    %v60 = vadd.f32 %v54, %v56
    %v61 = vadd.f32 %v59, %v57
    %v62 = vadd.f32 %v60, %v58
    %v63 = vrcp.pop %v61
    %v64 = vrcp.pop %v62
    %v65 = vmul.f32 %v55, %v63
    %v66 = vmul.f32 %v56, %v64
    %v67 = vld [vmem:[#allocation2] sm:$0xff]
    %v68 = vld [vmem:[#allocation2 + $0x8] sm:$0xff]
    %v69 = vld [vmem:[#allocation2 + $0x10] sm:$0xff]
    %v70 = vld [vmem:[#allocation2 + $0x18] sm:$0xff]
    %v71 = vld [vmem:[#allocation2 + $0x20] sm:$0xff]
    %v72 = vld [vmem:[#allocation2 + $0x28] sm:$0xff]
    %v73 = vld [vmem:[#allocation2 + $0x30] sm:$0xff]
    %v74 = vld [vmem:[#allocation2 + $0x38] sm:$0xff]
    %v75 = vld [vmem:[#allocation2 + $0x40] sm:$0xff]
    %v76 = vld [vmem:[#allocation2 + $0x48] sm:$0xff]
    %v77 = vld [vmem:[#allocation2 + $0x50] sm:$0xff]
    %v78 = vld [vmem:[#allocation2 + $0x58] sm:$0xff]
    %v79 = vld [vmem:[#allocation2 + $0x60] sm:$0xff]
    %v80 = vld [vmem:[#allocation2 + $0x68] sm:$0xff]
    %v81 = vld [vmem:[#allocation2 + $0x70] sm:$0xff]
    %v82 = vld [vmem:[#allocation2 + $0x78] sm:$0xff]
    %v83 = vld [vmem:[#allocation5] sm:$0xff]
    %v84 = vld [vmem:[#allocation5 + $0x8] sm:$0xff]
    %v85 = vld [vmem:[#allocation5 + $0x10] sm:$0xff]
    %v86 = vld [vmem:[#allocation5 + $0x18] sm:$0xff]
    %v87 = vld [vmem:[#allocation5 + $0x20] sm:$0xff]
    %v88 = vld [vmem:[#allocation5 + $0x28] sm:$0xff]
    %v89 = vld [vmem:[#allocation5 + $0x30] sm:$0xff]
    %v90 = vld [vmem:[#allocation5 + $0x38] sm:$0xff]
    %v91 = vld [vmem:[#allocation5 + $0x40] sm:$0xff]
    %v92 = vld [vmem:[#allocation5 + $0x48] sm:$0xff]
    %v93 = vld [vmem:[#allocation5 + $0x50] sm:$0xff]
    %v94 = vld [vmem:[#allocation5 + $0x58] sm:$0xff]
    %v95 = vld [vmem:[#allocation5 + $0x60] sm:$0xff]
    %v96 = vld [vmem:[#allocation5 + $0x68] sm:$0xff]
    %v97 = vld [vmem:[#allocation5 + $0x70] sm:$0xff]
    %v98 = vld [vmem:[#allocation5 + $0x78] sm:$0xff]
    %v101 = vrot.slane %v56, 7
    %vm102 = vcmask 1041409
    %v103 = vsel %vm102, %v101, %v55
    %105 = vmatprep.subr.mxu0 0.0
    %v106 = vand.u32 %v83, 4294901760
    %107 = vmatpush1.msra.mxu0 %v106
    %108 = vmatprep.subr.mxu0 0.0
    %v109 = vand.u32 %v84, 4294901760
    %110 = vmatpush1.msra.mxu0 %v109
    %111 = vmatprep.subr.mxu0 0.0
    %v112 = vand.u32 %v85, 4294901760
    %113 = vmatpush1.msra.mxu0 %v112
    %114 = vmatprep.subr.mxu0 0.0
    %v115 = vand.u32 %v86, 4294901760
    %116 = vmatpush1.msra.mxu0 %v115
    %117 = vmatprep.subr.mxu0 0.0
    %v118 = vand.u32 %v87, 4294901760
    %119 = vmatpush1.msra.mxu0 %v118
    %120 = vmatprep.subr.mxu0 0.0
    %v121 = vand.u32 %v88, 4294901760
    %122 = vmatpush1.msra.mxu0 %v121
    %123 = vmatprep.subr.mxu0 0.0
    %v124 = vand.u32 %v89, 4294901760
    %125 = vmatpush1.msra.mxu0 %v124
    %126 = vmatprep.subr.mxu0 0.0
    %v127 = vand.u32 %v90, 4294901760
    %128 = vmatpush1.msra.mxu0 %v127
    %129 = vmatprep.subr.mxu0 0.0
    %v130 = vand.u32 %v91, 4294901760
    %131 = vmatpush1.msra.mxu0 %v130
    %132 = vmatprep.subr.mxu0 0.0
    %v133 = vand.u32 %v92, 4294901760
    %134 = vmatpush1.msra.mxu0 %v133
    %135 = vmatprep.subr.mxu0 0.0
    %v136 = vand.u32 %v93, 4294901760
    %137 = vmatpush1.msra.mxu0 %v136
    %138 = vmatprep.subr.mxu0 0.0
    %v139 = vand.u32 %v94, 4294901760
    %140 = vmatpush1.msra.mxu0 %v139
    %141 = vmatprep.subr.mxu0 0.0
    %v142 = vand.u32 %v95, 4294901760
    %143 = vmatpush1.msra.mxu0 %v142
    %144 = vmatprep.subr.mxu0 0.0
    %v145 = vand.u32 %v96, 4294901760
    %146 = vmatpush1.msra.mxu0 %v145
    %147 = vmatprep.subr.mxu0 0.0
    %v148 = vand.u32 %v97, 4294901760
    %149 = vmatpush1.msra.mxu0 %v148
    %150 = vmatprep.subr.mxu0 0.0
    %v151 = vand.u32 %v98, 4294901760
    %152 = vmatpush1.msra.mxu0 %v151
    %153 = vmatprep.subr.mxu0 0.0
    %154 = vmatpush1.msra.mxu0 0.0
    %155 = vmatprep.subr.mxu0 0.0
    %156 = vmatpush1.msra.mxu0 0.0
    %157 = vmatprep.subr.mxu0 0.0
    %158 = vmatpush1.msra.mxu0 0.0
    %159 = vmatprep.subr.mxu0 0.0
    %160 = vmatpush1.msra.mxu0 0.0
    %161 = vmatprep.subr.mxu0 0.0
    %162 = vmatpush1.msra.mxu0 0.0
    %163 = vmatprep.subr.mxu0 0.0
    %164 = vmatpush1.msra.mxu0 0.0
    %165 = vmatprep.subr.mxu0 0.0
    %166 = vmatpush1.msra.mxu0 0.0
    %167 = vmatprep.subr.mxu0 0.0
    %168 = vmatpush1.msra.mxu0 0.0
    %169 = vmatprep.subr.mxu0 0.0
    %170 = vmatpush1.msra.mxu0 0.0
    %171 = vmatprep.subr.mxu0 0.0
    %172 = vmatpush1.msra.mxu0 0.0
    %173 = vmatprep.subr.mxu0 0.0
    %174 = vmatpush1.msra.mxu0 0.0
    %175 = vmatprep.subr.mxu0 0.0
    %176 = vmatpush1.msra.mxu0 0.0
    %177 = vmatprep.subr.mxu0 0.0
    %178 = vmatpush1.msra.mxu0 0.0
    %179 = vmatprep.subr.mxu0 0.0
    %180 = vmatpush1.msra.mxu0 0.0
    %181 = vmatprep.subr.mxu0 0.0
    %182 = vmatpush1.msra.mxu0 0.0
    %183 = vmatprep.subr.mxu0 0.0
    %184 = vmatpush1.msra.mxu0 0.0
    %185 = vmatprep.mubr.f32.mxu0 0.0
    %v186 = vand.u32 %v103, 4294901760
    %v187 = vsub.f32 %v103, %v186
    %v188 = vand.u32 %v187, 4294901760
    %v189 = vsub.f32 %v187, %v188
    %v190 = vand.u32 %v189, 4294901760
    %191 = vmatmul.mubr.f32.gmra.mrb[0].mxu0 %v190
    %v192 = vpop.f32.mrb[0].mxu0
    %v193 = vadd.f32 0.0, %v192
    %v194 = vpop.f32.mrb[0].mxu0
    %195 = vdwg.mxu0
    %196 = vmatprep.subr.mxu0 0.0
    %v197 = vand.u32 %v83, 4294901760
    %v198 = vsub.f32 %v83, %v197
    %v199 = vand.u32 %v198, 4294901760
    %v200 = vsub.f32 %v198, %v199
    %v201 = vand.u32 %v200, 4294901760
    %202 = vmatpush1.msra.mxu0 %v201
    %203 = vmatprep.subr.mxu0 0.0
    %v204 = vand.u32 %v84, 4294901760
    %v205 = vsub.f32 %v84, %v204
    %v206 = vand.u32 %v205, 4294901760
    %v207 = vsub.f32 %v205, %v206
    %v208 = vand.u32 %v207, 4294901760
    %209 = vmatpush1.msra.mxu0 %v208
    %210 = vmatprep.subr.mxu0 0.0
    %v211 = vand.u32 %v85, 4294901760
    %v212 = vsub.f32 %v85, %v211
    %v213 = vand.u32 %v212, 4294901760
    %v214 = vsub.f32 %v212, %v213
    %v215 = vand.u32 %v214, 4294901760
    %216 = vmatpush1.msra.mxu0 %v215
    %217 = vmatprep.subr.mxu0 0.0
    %v218 = vand.u32 %v86, 4294901760
    %v219 = vsub.f32 %v86, %v218
    %v220 = vand.u32 %v219, 4294901760
    %v221 = vsub.f32 %v219, %v220
    %v222 = vand.u32 %v221, 4294901760
    %223 = vmatpush1.msra.mxu0 %v222
    %224 = vmatprep.subr.mxu0 0.0
    %v225 = vand.u32 %v87, 4294901760
    %v226 = vsub.f32 %v87, %v225
    %v227 = vand.u32 %v226, 4294901760
    %v228 = vsub.f32 %v226, %v227
    %v229 = vand.u32 %v228, 4294901760
    %230 = vmatpush1.msra.mxu0 %v229
    %231 = vmatprep.subr.mxu0 0.0
    %v232 = vand.u32 %v88, 4294901760
    %v233 = vsub.f32 %v88, %v232
    %v234 = vand.u32 %v233, 4294901760
    %v235 = vsub.f32 %v233, %v234
    %v236 = vand.u32 %v235, 4294901760
    %237 = vmatpush1.msra.mxu0 %v236
    %238 = vmatprep.subr.mxu0 0.0
    %v239 = vand.u32 %v89, 4294901760
    %v240 = vsub.f32 %v89, %v239
    %v241 = vand.u32 %v240, 4294901760
    %v242 = vsub.f32 %v240, %v241
    %v243 = vand.u32 %v242, 4294901760
    %244 = vmatpush1.msra.mxu0 %v243
    %245 = vmatprep.subr.mxu0 0.0
    %v246 = vand.u32 %v90, 4294901760
    %v247 = vsub.f32 %v90, %v246
    %v248 = vand.u32 %v247, 4294901760
    %v249 = vsub.f32 %v247, %v248
    %v250 = vand.u32 %v249, 4294901760
    %251 = vmatpush1.msra.mxu0 %v250
    %252 = vmatprep.subr.mxu0 0.0
    %v253 = vand.u32 %v91, 4294901760
    %v254 = vsub.f32 %v91, %v253
    %v255 = vand.u32 %v254, 4294901760
    %v256 = vsub.f32 %v254, %v255
    %v257 = vand.u32 %v256, 4294901760
    %258 = vmatpush1.msra.mxu0 %v257
    %259 = vmatprep.subr.mxu0 0.0
    %v260 = vand.u32 %v92, 4294901760
    %v261 = vsub.f32 %v92, %v260
    %v262 = vand.u32 %v261, 4294901760
    %v263 = vsub.f32 %v261, %v262
    %v264 = vand.u32 %v263, 4294901760
    %265 = vmatpush1.msra.mxu0 %v264
    %266 = vmatprep.subr.mxu0 0.0
    %v267 = vand.u32 %v93, 4294901760
    %v268 = vsub.f32 %v93, %v267
    %v269 = vand.u32 %v268, 4294901760
    %v270 = vsub.f32 %v268, %v269
    %v271 = vand.u32 %v270, 4294901760
    %272 = vmatpush1.msra.mxu0 %v271
    %273 = vmatprep.subr.mxu0 0.0
    %v274 = vand.u32 %v94, 4294901760
    %v275 = vsub.f32 %v94, %v274
    %v276 = vand.u32 %v275, 4294901760
    %v277 = vsub.f32 %v275, %v276
    %v278 = vand.u32 %v277, 4294901760
    %279 = vmatpush1.msra.mxu0 %v278
    %280 = vmatprep.subr.mxu0 0.0
    %v281 = vand.u32 %v95, 4294901760
    %v282 = vsub.f32 %v95, %v281
    %v283 = vand.u32 %v282, 4294901760
    %v284 = vsub.f32 %v282, %v283
    %v285 = vand.u32 %v284, 4294901760
    %286 = vmatpush1.msra.mxu0 %v285
    %287 = vmatprep.subr.mxu0 0.0
    %v288 = vand.u32 %v96, 4294901760
    %v289 = vsub.f32 %v96, %v288
    %v290 = vand.u32 %v289, 4294901760
    %v291 = vsub.f32 %v289, %v290
    %v292 = vand.u32 %v291, 4294901760
    %293 = vmatpush1.msra.mxu0 %v292
    %294 = vmatprep.subr.mxu0 0.0
    %v295 = vand.u32 %v97, 4294901760
    %v296 = vsub.f32 %v97, %v295
    %v297 = vand.u32 %v296, 4294901760
    %v298 = vsub.f32 %v296, %v297
    %v299 = vand.u32 %v298, 4294901760
    %300 = vmatpush1.msra.mxu0 %v299
    %301 = vmatprep.subr.mxu0 0.0
    %v302 = vand.u32 %v98, 4294901760
    %v303 = vsub.f32 %v98, %v302
    %v304 = vand.u32 %v303, 4294901760
    %v305 = vsub.f32 %v303, %v304
    %v306 = vand.u32 %v305, 4294901760
    %307 = vmatpush1.msra.mxu0 %v306
    %308 = vmatprep.subr.mxu0 0.0
    %309 = vmatpush1.msra.mxu0 0.0
    %310 = vmatprep.subr.mxu0 0.0
    %311 = vmatpush1.msra.mxu0 0.0
    %312 = vmatprep.subr.mxu0 0.0
    %313 = vmatpush1.msra.mxu0 0.0
    %314 = vmatprep.subr.mxu0 0.0
    %315 = vmatpush1.msra.mxu0 0.0
    %316 = vmatprep.subr.mxu0 0.0
    %317 = vmatpush1.msra.mxu0 0.0
    %318 = vmatprep.subr.mxu0 0.0
    %319 = vmatpush1.msra.mxu0 0.0
    %320 = vmatprep.subr.mxu0 0.0
    %321 = vmatpush1.msra.mxu0 0.0
    %322 = vmatprep.subr.mxu0 0.0
    %323 = vmatpush1.msra.mxu0 0.0
    %324 = vmatprep.subr.mxu0 0.0
    %325 = vmatpush1.msra.mxu0 0.0
    %326 = vmatprep.subr.mxu0 0.0
    %327 = vmatpush1.msra.mxu0 0.0
    %328 = vmatprep.subr.mxu0 0.0
    %329 = vmatpush1.msra.mxu0 0.0
    %330 = vmatprep.subr.mxu0 0.0
    %331 = vmatpush1.msra.mxu0 0.0
    %332 = vmatprep.subr.mxu0 0.0
    %333 = vmatpush1.msra.mxu0 0.0
    %334 = vmatprep.subr.mxu0 0.0
    %335 = vmatpush1.msra.mxu0 0.0
    %336 = vmatprep.subr.mxu0 0.0
    %337 = vmatpush1.msra.mxu0 0.0
    %338 = vmatprep.subr.mxu0 0.0
    %339 = vmatpush1.msra.mxu0 0.0
    %340 = vmatprep.mubr.f32.mxu0 0.0
    %v341 = vand.u32 %v103, 4294901760
    %342 = vmatmul.mubr.f32.gmra.mrb[0].mxu0 %v341
    %v343 = vpop.f32.mrb[0].mxu0
    %v344 = vadd.f32 %v193, %v343
    %v345 = vpop.f32.mrb[0].mxu0
    %346 = vdwg.mxu0
    %347 = vmatprep.subr.mxu0 0.0
    %v348 = vand.u32 %v83, 4294901760
    %v349 = vsub.f32 %v83, %v348
    %350 = vmatpush1.msra.mxu0 %v349
    %351 = vmatprep.subr.mxu0 0.0
    %v352 = vand.u32 %v84, 4294901760
    %v353 = vsub.f32 %v84, %v352
    %354 = vmatpush1.msra.mxu0 %v353
    %355 = vmatprep.subr.mxu0 0.0
    %v356 = vand.u32 %v85, 4294901760
    %v357 = vsub.f32 %v85, %v356
    %358 = vmatpush1.msra.mxu0 %v357
    %359 = vmatprep.subr.mxu0 0.0
    %v360 = vand.u32 %v86, 4294901760
    %v361 = vsub.f32 %v86, %v360
    %362 = vmatpush1.msra.mxu0 %v361
    %363 = vmatprep.subr.mxu0 0.0
    %v364 = vand.u32 %v87, 4294901760
    %v365 = vsub.f32 %v87, %v364
    %366 = vmatpush1.msra.mxu0 %v365
    %367 = vmatprep.subr.mxu0 0.0
    %v368 = vand.u32 %v88, 4294901760
    %v369 = vsub.f32 %v88, %v368
    %370 = vmatpush1.msra.mxu0 %v369
    %371 = vmatprep.subr.mxu0 0.0
    %v372 = vand.u32 %v89, 4294901760
    %v373 = vsub.f32 %v89, %v372
    %374 = vmatpush1.msra.mxu0 %v373
    %375 = vmatprep.subr.mxu0 0.0
    %v376 = vand.u32 %v90, 4294901760
    %v377 = vsub.f32 %v90, %v376
    %378 = vmatpush1.msra.mxu0 %v377
    %379 = vmatprep.subr.mxu0 0.0
    %v380 = vand.u32 %v91, 4294901760
    %v381 = vsub.f32 %v91, %v380
    %382 = vmatpush1.msra.mxu0 %v381
    %383 = vmatprep.subr.mxu0 0.0
    %v384 = vand.u32 %v92, 4294901760
    %v385 = vsub.f32 %v92, %v384
    %386 = vmatpush1.msra.mxu0 %v385
    %387 = vmatprep.subr.mxu0 0.0
    %v388 = vand.u32 %v93, 4294901760
    %v389 = vsub.f32 %v93, %v388
    %390 = vmatpush1.msra.mxu0 %v389
    %391 = vmatprep.subr.mxu0 0.0
    %v392 = vand.u32 %v94, 4294901760
    %v393 = vsub.f32 %v94, %v392
    %394 = vmatpush1.msra.mxu0 %v393
    %395 = vmatprep.subr.mxu0 0.0
    %v396 = vand.u32 %v95, 4294901760
    %v397 = vsub.f32 %v95, %v396
    %398 = vmatpush1.msra.mxu0 %v397
    %399 = vmatprep.subr.mxu0 0.0
    %v400 = vand.u32 %v96, 4294901760
    %v401 = vsub.f32 %v96, %v400
    %402 = vmatpush1.msra.mxu0 %v401
    %403 = vmatprep.subr.mxu0 0.0
    %v404 = vand.u32 %v97, 4294901760
    %v405 = vsub.f32 %v97, %v404
    %406 = vmatpush1.msra.mxu0 %v405
    %407 = vmatprep.subr.mxu0 0.0
    %v408 = vand.u32 %v98, 4294901760
    %v409 = vsub.f32 %v98, %v408
    %410 = vmatpush1.msra.mxu0 %v409
    %411 = vmatprep.subr.mxu0 0.0
    %412 = vmatpush1.msra.mxu0 0.0
    %413 = vmatprep.subr.mxu0 0.0
    %414 = vmatpush1.msra.mxu0 0.0
    %415 = vmatprep.subr.mxu0 0.0
    %416 = vmatpush1.msra.mxu0 0.0
    %417 = vmatprep.subr.mxu0 0.0
    %418 = vmatpush1.msra.mxu0 0.0
    %419 = vmatprep.subr.mxu0 0.0
    %420 = vmatpush1.msra.mxu0 0.0
    %421 = vmatprep.subr.mxu0 0.0
    %422 = vmatpush1.msra.mxu0 0.0
    %423 = vmatprep.subr.mxu0 0.0
    %424 = vmatpush1.msra.mxu0 0.0
    %425 = vmatprep.subr.mxu0 0.0
    %426 = vmatpush1.msra.mxu0 0.0
    %427 = vmatprep.subr.mxu0 0.0
    %428 = vmatpush1.msra.mxu0 0.0
    %429 = vmatprep.subr.mxu0 0.0
    %430 = vmatpush1.msra.mxu0 0.0
    %431 = vmatprep.subr.mxu0 0.0
    %432 = vmatpush1.msra.mxu0 0.0
    %433 = vmatprep.subr.mxu0 0.0
    %434 = vmatpush1.msra.mxu0 0.0
    %435 = vmatprep.subr.mxu0 0.0
    %436 = vmatpush1.msra.mxu0 0.0
    %437 = vmatprep.subr.mxu0 0.0
    %438 = vmatpush1.msra.mxu0 0.0
    %439 = vmatprep.subr.mxu0 0.0
    %440 = vmatpush1.msra.mxu0 0.0
    %441 = vmatprep.subr.mxu0 0.0
    %442 = vmatpush1.msra.mxu0 0.0
    %443 = vmatprep.mubr.f32.mxu0 0.0
    %v444 = vand.u32 %v103, 4294901760
    %v445 = vsub.f32 %v103, %v444
    %446 = vmatmul.mubr.f32.gmra.mrb[0].mxu0 %v445
    %v447 = vpop.f32.mrb[0].mxu0
    %v448 = vadd.f32 %v344, %v447
    %v449 = vpop.f32.mrb[0].mxu0
    %450 = vdwg.mxu0
    %451 = vmatprep.subr.mxu0 0.0
    %v452 = vand.u32 %v83, 4294901760
    %453 = vmatpush1.msra.mxu0 %v452
    %454 = vmatprep.subr.mxu0 0.0
    %v455 = vand.u32 %v84, 4294901760
    %456 = vmatpush1.msra.mxu0 %v455
    %457 = vmatprep.subr.mxu0 0.0
    %v458 = vand.u32 %v85, 4294901760
    %459 = vmatpush1.msra.mxu0 %v458
    %460 = vmatprep.subr.mxu0 0.0
    %v461 = vand.u32 %v86, 4294901760
    %462 = vmatpush1.msra.mxu0 %v461
    %463 = vmatprep.subr.mxu0 0.0
    %v464 = vand.u32 %v87, 4294901760
    %465 = vmatpush1.msra.mxu0 %v464
    %466 = vmatprep.subr.mxu0 0.0
    %v467 = vand.u32 %v88, 4294901760
    %468 = vmatpush1.msra.mxu0 %v467
    %469 = vmatprep.subr.mxu0 0.0
    %v470 = vand.u32 %v89, 4294901760
    %471 = vmatpush1.msra.mxu0 %v470
    %472 = vmatprep.subr.mxu0 0.0
    %v473 = vand.u32 %v90, 4294901760
    %474 = vmatpush1.msra.mxu0 %v473
    %475 = vmatprep.subr.mxu0 0.0
    %v476 = vand.u32 %v91, 4294901760
    %477 = vmatpush1.msra.mxu0 %v476
    %478 = vmatprep.subr.mxu0 0.0
    %v479 = vand.u32 %v92, 4294901760
    %480 = vmatpush1.msra.mxu0 %v479
    %481 = vmatprep.subr.mxu0 0.0
    %v482 = vand.u32 %v93, 4294901760
    %483 = vmatpush1.msra.mxu0 %v482
    %484 = vmatprep.subr.mxu0 0.0
    %v485 = vand.u32 %v94, 4294901760
    %486 = vmatpush1.msra.mxu0 %v485
    %487 = vmatprep.subr.mxu0 0.0
    %v488 = vand.u32 %v95, 4294901760
    %489 = vmatpush1.msra.mxu0 %v488
    %490 = vmatprep.subr.mxu0 0.0
    %v491 = vand.u32 %v96, 4294901760
    %492 = vmatpush1.msra.mxu0 %v491
    %493 = vmatprep.subr.mxu0 0.0
    %v494 = vand.u32 %v97, 4294901760
    %495 = vmatpush1.msra.mxu0 %v494
    %496 = vmatprep.subr.mxu0 0.0
    %v497 = vand.u32 %v98, 4294901760
    %498 = vmatpush1.msra.mxu0 %v497
    %499 = vmatprep.subr.mxu0 0.0
    %500 = vmatpush1.msra.mxu0 0.0
    %501 = vmatprep.subr.mxu0 0.0
    %502 = vmatpush1.msra.mxu0 0.0
    %503 = vmatprep.subr.mxu0 0.0
    %504 = vmatpush1.msra.mxu0 0.0
    %505 = vmatprep.subr.mxu0 0.0
    %506 = vmatpush1.msra.mxu0 0.0
    %507 = vmatprep.subr.mxu0 0.0
    %508 = vmatpush1.msra.mxu0 0.0
    %509 = vmatprep.subr.mxu0 0.0
    %510 = vmatpush1.msra.mxu0 0.0
    %511 = vmatprep.subr.mxu0 0.0
    %512 = vmatpush1.msra.mxu0 0.0
    %513 = vmatprep.subr.mxu0 0.0
    %514 = vmatpush1.msra.mxu0 0.0
    %515 = vmatprep.subr.mxu0 0.0
    %516 = vmatpush1.msra.mxu0 0.0
    %517 = vmatprep.subr.mxu0 0.0
    %518 = vmatpush1.msra.mxu0 0.0
    %519 = vmatprep.subr.mxu0 0.0
    %520 = vmatpush1.msra.mxu0 0.0
    %521 = vmatprep.subr.mxu0 0.0
    %522 = vmatpush1.msra.mxu0 0.0
    %523 = vmatprep.subr.mxu0 0.0
    %524 = vmatpush1.msra.mxu0 0.0
    %525 = vmatprep.subr.mxu0 0.0
    %526 = vmatpush1.msra.mxu0 0.0
    %527 = vmatprep.subr.mxu0 0.0
    %528 = vmatpush1.msra.mxu0 0.0
    %529 = vmatprep.subr.mxu0 0.0
    %530 = vmatpush1.msra.mxu0 0.0
    %531 = vmatprep.mubr.f32.mxu0 0.0
    %v532 = vand.u32 %v103, 4294901760
    %v533 = vsub.f32 %v103, %v532
    %v534 = vand.u32 %v533, 4294901760
    %535 = vmatmul.mubr.f32.gmra.mrb[0].mxu0 %v534
    %v536 = vpop.f32.mrb[0].mxu0
    %v537 = vadd.f32 %v448, %v536
    %v538 = vpop.f32.mrb[0].mxu0
    %539 = vdwg.mxu0
    %540 = vmatprep.subr.mxu0 0.0
    %v541 = vand.u32 %v83, 4294901760
    %v542 = vsub.f32 %v83, %v541
    %v543 = vand.u32 %v542, 4294901760
    %544 = vmatpush1.msra.mxu0 %v543
    %545 = vmatprep.subr.mxu0 0.0
    %v546 = vand.u32 %v84, 4294901760
    %v547 = vsub.f32 %v84, %v546
    %v548 = vand.u32 %v547, 4294901760
    %549 = vmatpush1.msra.mxu0 %v548
    %550 = vmatprep.subr.mxu0 0.0
    %v551 = vand.u32 %v85, 4294901760
    %v552 = vsub.f32 %v85, %v551
    %v553 = vand.u32 %v552, 4294901760
    %554 = vmatpush1.msra.mxu0 %v553
    %555 = vmatprep.subr.mxu0 0.0
    %v556 = vand.u32 %v86, 4294901760
    %v557 = vsub.f32 %v86, %v556
    %v558 = vand.u32 %v557, 4294901760
    %559 = vmatpush1.msra.mxu0 %v558
    %560 = vmatprep.subr.mxu0 0.0
    %v561 = vand.u32 %v87, 4294901760
    %v562 = vsub.f32 %v87, %v561
    %v563 = vand.u32 %v562, 4294901760
    %564 = vmatpush1.msra.mxu0 %v563
    %565 = vmatprep.subr.mxu0 0.0
    %v566 = vand.u32 %v88, 4294901760
    %v567 = vsub.f32 %v88, %v566
    %v568 = vand.u32 %v567, 4294901760
    %569 = vmatpush1.msra.mxu0 %v568
    %570 = vmatprep.subr.mxu0 0.0
    %v571 = vand.u32 %v89, 4294901760
    %v572 = vsub.f32 %v89, %v571
    %v573 = vand.u32 %v572, 4294901760
    %574 = vmatpush1.msra.mxu0 %v573
    %575 = vmatprep.subr.mxu0 0.0
    %v576 = vand.u32 %v90, 4294901760
    %v577 = vsub.f32 %v90, %v576
    %v578 = vand.u32 %v577, 4294901760
    %579 = vmatpush1.msra.mxu0 %v578
    %580 = vmatprep.subr.mxu0 0.0
    %v581 = vand.u32 %v91, 4294901760
    %v582 = vsub.f32 %v91, %v581
    %v583 = vand.u32 %v582, 4294901760
    %584 = vmatpush1.msra.mxu0 %v583
    %585 = vmatprep.subr.mxu0 0.0
    %v586 = vand.u32 %v92, 4294901760
    %v587 = vsub.f32 %v92, %v586
    %v588 = vand.u32 %v587, 4294901760
    %589 = vmatpush1.msra.mxu0 %v588
    %590 = vmatprep.subr.mxu0 0.0
    %v591 = vand.u32 %v93, 4294901760
    %v592 = vsub.f32 %v93, %v591
    %v593 = vand.u32 %v592, 4294901760
    %594 = vmatpush1.msra.mxu0 %v593
    %595 = vmatprep.subr.mxu0 0.0
    %v596 = vand.u32 %v94, 4294901760
    %v597 = vsub.f32 %v94, %v596
    %v598 = vand.u32 %v597, 4294901760
    %599 = vmatpush1.msra.mxu0 %v598
    %600 = vmatprep.subr.mxu0 0.0
    %v601 = vand.u32 %v95, 4294901760
    %v602 = vsub.f32 %v95, %v601
    %v603 = vand.u32 %v602, 4294901760
    %604 = vmatpush1.msra.mxu0 %v603
    %605 = vmatprep.subr.mxu0 0.0
    %v606 = vand.u32 %v96, 4294901760
    %v607 = vsub.f32 %v96, %v606
    %v608 = vand.u32 %v607, 4294901760
    %609 = vmatpush1.msra.mxu0 %v608
    %610 = vmatprep.subr.mxu0 0.0
    %v611 = vand.u32 %v97, 4294901760
    %v612 = vsub.f32 %v97, %v611
    %v613 = vand.u32 %v612, 4294901760
    %614 = vmatpush1.msra.mxu0 %v613
    %615 = vmatprep.subr.mxu0 0.0
    %v616 = vand.u32 %v98, 4294901760
    %v617 = vsub.f32 %v98, %v616
    %v618 = vand.u32 %v617, 4294901760
    %619 = vmatpush1.msra.mxu0 %v618
    %620 = vmatprep.subr.mxu0 0.0
    %621 = vmatpush1.msra.mxu0 0.0
    %622 = vmatprep.subr.mxu0 0.0
    %623 = vmatpush1.msra.mxu0 0.0
    %624 = vmatprep.subr.mxu0 0.0
    %625 = vmatpush1.msra.mxu0 0.0
    %626 = vmatprep.subr.mxu0 0.0
    %627 = vmatpush1.msra.mxu0 0.0
    %628 = vmatprep.subr.mxu0 0.0
    %629 = vmatpush1.msra.mxu0 0.0
    %630 = vmatprep.subr.mxu0 0.0
    %631 = vmatpush1.msra.mxu0 0.0
    %632 = vmatprep.subr.mxu0 0.0
    %633 = vmatpush1.msra.mxu0 0.0
    %634 = vmatprep.subr.mxu0 0.0
    %635 = vmatpush1.msra.mxu0 0.0
    %636 = vmatprep.subr.mxu0 0.0
    %637 = vmatpush1.msra.mxu0 0.0
    %638 = vmatprep.subr.mxu0 0.0
    %639 = vmatpush1.msra.mxu0 0.0
    %640 = vmatprep.subr.mxu0 0.0
    %641 = vmatpush1.msra.mxu0 0.0
    %642 = vmatprep.subr.mxu0 0.0
    %643 = vmatpush1.msra.mxu0 0.0
    %644 = vmatprep.subr.mxu0 0.0
    %645 = vmatpush1.msra.mxu0 0.0
    %646 = vmatprep.subr.mxu0 0.0
    %647 = vmatpush1.msra.mxu0 0.0
    %648 = vmatprep.subr.mxu0 0.0
    %649 = vmatpush1.msra.mxu0 0.0
    %650 = vmatprep.subr.mxu0 0.0
    %651 = vmatpush1.msra.mxu0 0.0
    %652 = vmatprep.mubr.f32.mxu0 0.0
    %v653 = vand.u32 %v103, 4294901760
    %654 = vmatmul.mubr.f32.gmra.mrb[0].mxu0 %v653
    %v655 = vpop.f32.mrb[0].mxu0
    %v656 = vadd.f32 %v537, %v655
    %v657 = vpop.f32.mrb[0].mxu0
    %658 = vdwg.mxu0
    %659 = vmatprep.subr.mxu0 0.0
    %v660 = vand.u32 %v83, 4294901760
    %661 = vmatpush1.msra.mxu0 %v660
    %662 = vmatprep.subr.mxu0 0.0
    %v663 = vand.u32 %v84, 4294901760
    %664 = vmatpush1.msra.mxu0 %v663
    %665 = vmatprep.subr.mxu0 0.0
    %v666 = vand.u32 %v85, 4294901760
    %667 = vmatpush1.msra.mxu0 %v666
    %668 = vmatprep.subr.mxu0 0.0
    %v669 = vand.u32 %v86, 4294901760
    %670 = vmatpush1.msra.mxu0 %v669
    %671 = vmatprep.subr.mxu0 0.0
    %v672 = vand.u32 %v87, 4294901760
    %673 = vmatpush1.msra.mxu0 %v672
    %674 = vmatprep.subr.mxu0 0.0
    %v675 = vand.u32 %v88, 4294901760
    %676 = vmatpush1.msra.mxu0 %v675
    %677 = vmatprep.subr.mxu0 0.0
    %v678 = vand.u32 %v89, 4294901760
    %679 = vmatpush1.msra.mxu0 %v678
    %680 = vmatprep.subr.mxu0 0.0
    %v681 = vand.u32 %v90, 4294901760
    %682 = vmatpush1.msra.mxu0 %v681
    %683 = vmatprep.subr.mxu0 0.0
    %v684 = vand.u32 %v91, 4294901760
    %685 = vmatpush1.msra.mxu0 %v684
    %686 = vmatprep.subr.mxu0 0.0
    %v687 = vand.u32 %v92, 4294901760
    %688 = vmatpush1.msra.mxu0 %v687
    %689 = vmatprep.subr.mxu0 0.0
    %v690 = vand.u32 %v93, 4294901760
    %691 = vmatpush1.msra.mxu0 %v690
    %692 = vmatprep.subr.mxu0 0.0
    %v693 = vand.u32 %v94, 4294901760
    %694 = vmatpush1.msra.mxu0 %v693
    %695 = vmatprep.subr.mxu0 0.0
    %v696 = vand.u32 %v95, 4294901760
    %697 = vmatpush1.msra.mxu0 %v696
    %698 = vmatprep.subr.mxu0 0.0
    %v699 = vand.u32 %v96, 4294901760
    %700 = vmatpush1.msra.mxu0 %v699
    %701 = vmatprep.subr.mxu0 0.0
    %v702 = vand.u32 %v97, 4294901760
    %703 = vmatpush1.msra.mxu0 %v702
    %704 = vmatprep.subr.mxu0 0.0
    %v705 = vand.u32 %v98, 4294901760
    %706 = vmatpush1.msra.mxu0 %v705
    %707 = vmatprep.subr.mxu0 0.0
    %708 = vmatpush1.msra.mxu0 0.0
    %709 = vmatprep.subr.mxu0 0.0
    %710 = vmatpush1.msra.mxu0 0.0
    %711 = vmatprep.subr.mxu0 0.0
    %712 = vmatpush1.msra.mxu0 0.0
    %713 = vmatprep.subr.mxu0 0.0
    %714 = vmatpush1.msra.mxu0 0.0
    %715 = vmatprep.subr.mxu0 0.0
    %716 = vmatpush1.msra.mxu0 0.0
    %717 = vmatprep.subr.mxu0 0.0
    %718 = vmatpush1.msra.mxu0 0.0
    %719 = vmatprep.subr.mxu0 0.0
    %720 = vmatpush1.msra.mxu0 0.0
    %721 = vmatprep.subr.mxu0 0.0
    %722 = vmatpush1.msra.mxu0 0.0
    %723 = vmatprep.subr.mxu0 0.0
    %724 = vmatpush1.msra.mxu0 0.0
    %725 = vmatprep.subr.mxu0 0.0
    %726 = vmatpush1.msra.mxu0 0.0
    %727 = vmatprep.subr.mxu0 0.0
    %728 = vmatpush1.msra.mxu0 0.0
    %729 = vmatprep.subr.mxu0 0.0
    %730 = vmatpush1.msra.mxu0 0.0
    %731 = vmatprep.subr.mxu0 0.0
    %732 = vmatpush1.msra.mxu0 0.0
    %733 = vmatprep.subr.mxu0 0.0
    %734 = vmatpush1.msra.mxu0 0.0
    %735 = vmatprep.subr.mxu0 0.0
    %736 = vmatpush1.msra.mxu0 0.0
    %737 = vmatprep.subr.mxu0 0.0
    %738 = vmatpush1.msra.mxu0 0.0
    %739 = vmatprep.mubr.f32.mxu0 0.0
    %v740 = vand.u32 %v103, 4294901760
    %741 = vmatmul.mubr.f32.gmra.mrb[0].mxu0 %v740
    %v742 = vpop.f32.mrb[0].mxu0
    %v743 = vadd.f32 %v656, %v742
    %v744 = vpop.f32.mrb[0].mxu0
    %745 = vdwg.mxu0
    %v748 = vrot.slane %v64, 7
    %v749 = vsel %vm102, %v748, %v63
    %v751 = vmul.f32 %v743, %v749
    %v754 = vrot.slane %v66, 7
    %v755 = vsel %vm102, %v754, %v65
    %757 = vmatprep.subr.mxu0 0.0
    %v758 = vand.u32 %v67, 4294901760
    %759 = vmatpush1.msra.mxu0 %v758
    %760 = vmatprep.subr.mxu0 0.0
    %v761 = vand.u32 %v68, 4294901760
    %762 = vmatpush1.msra.mxu0 %v761
    %763 = vmatprep.subr.mxu0 0.0
    %v764 = vand.u32 %v69, 4294901760
    %765 = vmatpush1.msra.mxu0 %v764
    %766 = vmatprep.subr.mxu0 0.0
    %v767 = vand.u32 %v70, 4294901760
    %768 = vmatpush1.msra.mxu0 %v767
    %769 = vmatprep.subr.mxu0 0.0
    %v770 = vand.u32 %v71, 4294901760
    %771 = vmatpush1.msra.mxu0 %v770
    %772 = vmatprep.subr.mxu0 0.0
    %v773 = vand.u32 %v72, 4294901760
    %774 = vmatpush1.msra.mxu0 %v773
    %775 = vmatprep.subr.mxu0 0.0
    %v776 = vand.u32 %v73, 4294901760
    %777 = vmatpush1.msra.mxu0 %v776
    %778 = vmatprep.subr.mxu0 0.0
    %v779 = vand.u32 %v74, 4294901760
    %780 = vmatpush1.msra.mxu0 %v779
    %781 = vmatprep.subr.mxu0 0.0
    %v782 = vand.u32 %v75, 4294901760
    %783 = vmatpush1.msra.mxu0 %v782
    %784 = vmatprep.subr.mxu0 0.0
    %v785 = vand.u32 %v76, 4294901760
    %786 = vmatpush1.msra.mxu0 %v785
    %787 = vmatprep.subr.mxu0 0.0
    %v788 = vand.u32 %v77, 4294901760
    %789 = vmatpush1.msra.mxu0 %v788
    %790 = vmatprep.subr.mxu0 0.0
    %v791 = vand.u32 %v78, 4294901760
    %792 = vmatpush1.msra.mxu0 %v791
    %793 = vmatprep.subr.mxu0 0.0
    %v794 = vand.u32 %v79, 4294901760
    %795 = vmatpush1.msra.mxu0 %v794
    %796 = vmatprep.subr.mxu0 0.0
    %v797 = vand.u32 %v80, 4294901760
    %798 = vmatpush1.msra.mxu0 %v797
    %799 = vmatprep.subr.mxu0 0.0
    %v800 = vand.u32 %v81, 4294901760
    %801 = vmatpush1.msra.mxu0 %v800
    %802 = vmatprep.subr.mxu0 0.0
    %v803 = vand.u32 %v82, 4294901760
    %804 = vmatpush1.msra.mxu0 %v803
    %805 = vmatprep.subr.mxu0 0.0
    %806 = vmatpush1.msra.mxu0 0.0
    %807 = vmatprep.subr.mxu0 0.0
    %808 = vmatpush1.msra.mxu0 0.0
    %809 = vmatprep.subr.mxu0 0.0
    %810 = vmatpush1.msra.mxu0 0.0
    %811 = vmatprep.subr.mxu0 0.0
    %812 = vmatpush1.msra.mxu0 0.0
    %813 = vmatprep.subr.mxu0 0.0
    %814 = vmatpush1.msra.mxu0 0.0
    %815 = vmatprep.subr.mxu0 0.0
    %816 = vmatpush1.msra.mxu0 0.0
    %817 = vmatprep.subr.mxu0 0.0
    %818 = vmatpush1.msra.mxu0 0.0
    %819 = vmatprep.subr.mxu0 0.0
    %820 = vmatpush1.msra.mxu0 0.0
    %821 = vmatprep.subr.mxu0 0.0
    %822 = vmatpush1.msra.mxu0 0.0
    %823 = vmatprep.subr.mxu0 0.0
    %824 = vmatpush1.msra.mxu0 0.0
    %825 = vmatprep.subr.mxu0 0.0
    %826 = vmatpush1.msra.mxu0 0.0
    %827 = vmatprep.subr.mxu0 0.0
    %828 = vmatpush1.msra.mxu0 0.0
    %829 = vmatprep.subr.mxu0 0.0
    %830 = vmatpush1.msra.mxu0 0.0
    %831 = vmatprep.subr.mxu0 0.0
    %832 = vmatpush1.msra.mxu0 0.0
    %833 = vmatprep.subr.mxu0 0.0
    %834 = vmatpush1.msra.mxu0 0.0
    %835 = vmatprep.subr.mxu0 0.0
    %836 = vmatpush1.msra.mxu0 0.0
    %837 = vmatprep.mubr.f32.mxu0 0.0
    %v838 = vand.u32 %v755, 4294901760
    %v839 = vsub.f32 %v755, %v838
    %v840 = vand.u32 %v839, 4294901760
    %v841 = vsub.f32 %v839, %v840
    %v842 = vand.u32 %v841, 4294901760
    %843 = vmatmul.mubr.f32.gmra.mrb[0].mxu0 %v842
    %v844 = vpop.f32.mrb[0].mxu0
    %v845 = vadd.f32 %v751, %v844
    %v846 = vpop.f32.mrb[0].mxu0
    %847 = vdwg.mxu0
    %848 = vmatprep.subr.mxu0 0.0
    %v849 = vand.u32 %v67, 4294901760
    %v850 = vsub.f32 %v67, %v849
    %v851 = vand.u32 %v850, 4294901760
    %v852 = vsub.f32 %v850, %v851
    %v853 = vand.u32 %v852, 4294901760
    %854 = vmatpush1.msra.mxu0 %v853
    %855 = vmatprep.subr.mxu0 0.0
    %v856 = vand.u32 %v68, 4294901760
    %v857 = vsub.f32 %v68, %v856
    %v858 = vand.u32 %v857, 4294901760
    %v859 = vsub.f32 %v857, %v858
    %v860 = vand.u32 %v859, 4294901760
    %861 = vmatpush1.msra.mxu0 %v860
    %862 = vmatprep.subr.mxu0 0.0
    %v863 = vand.u32 %v69, 4294901760
    %v864 = vsub.f32 %v69, %v863
    %v865 = vand.u32 %v864, 4294901760
    %v866 = vsub.f32 %v864, %v865
    %v867 = vand.u32 %v866, 4294901760
    %868 = vmatpush1.msra.mxu0 %v867
    %869 = vmatprep.subr.mxu0 0.0
    %v870 = vand.u32 %v70, 4294901760
    %v871 = vsub.f32 %v70, %v870
    %v872 = vand.u32 %v871, 4294901760
    %v873 = vsub.f32 %v871, %v872
    %v874 = vand.u32 %v873, 4294901760
    %875 = vmatpush1.msra.mxu0 %v874
    %876 = vmatprep.subr.mxu0 0.0
    %v877 = vand.u32 %v71, 4294901760
    %v878 = vsub.f32 %v71, %v877
    %v879 = vand.u32 %v878, 4294901760
    %v880 = vsub.f32 %v878, %v879
    %v881 = vand.u32 %v880, 4294901760
    %882 = vmatpush1.msra.mxu0 %v881
    %883 = vmatprep.subr.mxu0 0.0
    %v884 = vand.u32 %v72, 4294901760
    %v885 = vsub.f32 %v72, %v884
    %v886 = vand.u32 %v885, 4294901760
    %v887 = vsub.f32 %v885, %v886
    %v888 = vand.u32 %v887, 4294901760
    %889 = vmatpush1.msra.mxu0 %v888
    %890 = vmatprep.subr.mxu0 0.0
    %v891 = vand.u32 %v73, 4294901760
    %v892 = vsub.f32 %v73, %v891
    %v893 = vand.u32 %v892, 4294901760
    %v894 = vsub.f32 %v892, %v893
    %v895 = vand.u32 %v894, 4294901760
    %896 = vmatpush1.msra.mxu0 %v895
    %897 = vmatprep.subr.mxu0 0.0
    %v898 = vand.u32 %v74, 4294901760
    %v899 = vsub.f32 %v74, %v898
    %v900 = vand.u32 %v899, 4294901760
    %v901 = vsub.f32 %v899, %v900
    %v902 = vand.u32 %v901, 4294901760
    %903 = vmatpush1.msra.mxu0 %v902
    %904 = vmatprep.subr.mxu0 0.0
    %v905 = vand.u32 %v75, 4294901760
    %v906 = vsub.f32 %v75, %v905
    %v907 = vand.u32 %v906, 4294901760
    %v908 = vsub.f32 %v906, %v907
    %v909 = vand.u32 %v908, 4294901760
    %910 = vmatpush1.msra.mxu0 %v909
    %911 = vmatprep.subr.mxu0 0.0
    %v912 = vand.u32 %v76, 4294901760
    %v913 = vsub.f32 %v76, %v912
    %v914 = vand.u32 %v913, 4294901760
    %v915 = vsub.f32 %v913, %v914
    %v916 = vand.u32 %v915, 4294901760
    %917 = vmatpush1.msra.mxu0 %v916
    %918 = vmatprep.subr.mxu0 0.0
    %v919 = vand.u32 %v77, 4294901760
    %v920 = vsub.f32 %v77, %v919
    %v921 = vand.u32 %v920, 4294901760
    %v922 = vsub.f32 %v920, %v921
    %v923 = vand.u32 %v922, 4294901760
    %924 = vmatpush1.msra.mxu0 %v923
    %925 = vmatprep.subr.mxu0 0.0
    %v926 = vand.u32 %v78, 4294901760
    %v927 = vsub.f32 %v78, %v926
    %v928 = vand.u32 %v927, 4294901760
    %v929 = vsub.f32 %v927, %v928
    %v930 = vand.u32 %v929, 4294901760
    %931 = vmatpush1.msra.mxu0 %v930
    %932 = vmatprep.subr.mxu0 0.0
    %v933 = vand.u32 %v79, 4294901760
    %v934 = vsub.f32 %v79, %v933
    %v935 = vand.u32 %v934, 4294901760
    %v936 = vsub.f32 %v934, %v935
    %v937 = vand.u32 %v936, 4294901760
    %938 = vmatpush1.msra.mxu0 %v937
    %939 = vmatprep.subr.mxu0 0.0
    %v940 = vand.u32 %v80, 4294901760
    %v941 = vsub.f32 %v80, %v940
    %v942 = vand.u32 %v941, 4294901760
    %v943 = vsub.f32 %v941, %v942
    %v944 = vand.u32 %v943, 4294901760
    %945 = vmatpush1.msra.mxu0 %v944
    %946 = vmatprep.subr.mxu0 0.0
    %v947 = vand.u32 %v81, 4294901760
    %v948 = vsub.f32 %v81, %v947
    %v949 = vand.u32 %v948, 4294901760
    %v950 = vsub.f32 %v948, %v949
    %v951 = vand.u32 %v950, 4294901760
    %952 = vmatpush1.msra.mxu0 %v951
    %953 = vmatprep.subr.mxu0 0.0
    %v954 = vand.u32 %v82, 4294901760
    %v955 = vsub.f32 %v82, %v954
    %v956 = vand.u32 %v955, 4294901760
    %v957 = vsub.f32 %v955, %v956
    %v958 = vand.u32 %v957, 4294901760
    %959 = vmatpush1.msra.mxu0 %v958
    %960 = vmatprep.subr.mxu0 0.0
    %961 = vmatpush1.msra.mxu0 0.0
    %962 = vmatprep.subr.mxu0 0.0
    %963 = vmatpush1.msra.mxu0 0.0
    %964 = vmatprep.subr.mxu0 0.0
    %965 = vmatpush1.msra.mxu0 0.0
    %966 = vmatprep.subr.mxu0 0.0
    %967 = vmatpush1.msra.mxu0 0.0
    %968 = vmatprep.subr.mxu0 0.0
    %969 = vmatpush1.msra.mxu0 0.0
    %970 = vmatprep.subr.mxu0 0.0
    %971 = vmatpush1.msra.mxu0 0.0
    %972 = vmatprep.subr.mxu0 0.0
    %973 = vmatpush1.msra.mxu0 0.0
    %974 = vmatprep.subr.mxu0 0.0
    %975 = vmatpush1.msra.mxu0 0.0
    %976 = vmatprep.subr.mxu0 0.0
    %977 = vmatpush1.msra.mxu0 0.0
    %978 = vmatprep.subr.mxu0 0.0
    %979 = vmatpush1.msra.mxu0 0.0
    %980 = vmatprep.subr.mxu0 0.0
    %981 = vmatpush1.msra.mxu0 0.0
    %982 = vmatprep.subr.mxu0 0.0
    %983 = vmatpush1.msra.mxu0 0.0
    %984 = vmatprep.subr.mxu0 0.0
    %985 = vmatpush1.msra.mxu0 0.0
    %986 = vmatprep.subr.mxu0 0.0
    %987 = vmatpush1.msra.mxu0 0.0
    %988 = vmatprep.subr.mxu0 0.0
    %989 = vmatpush1.msra.mxu0 0.0
    %990 = vmatprep.subr.mxu0 0.0
    %991 = vmatpush1.msra.mxu0 0.0
    %992 = vmatprep.mubr.f32.mxu0 0.0
    %v993 = vand.u32 %v755, 4294901760
    %994 = vmatmul.mubr.f32.gmra.mrb[0].mxu0 %v993
    %v995 = vpop.f32.mrb[0].mxu0
    %v996 = vadd.f32 %v845, %v995
    %v997 = vpop.f32.mrb[0].mxu0
    %998 = vdwg.mxu0
    %999 = vmatprep.subr.mxu0 0.0
    %v1000 = vand.u32 %v67, 4294901760
    %v1001 = vsub.f32 %v67, %v1000
    %1002 = vmatpush1.msra.mxu0 %v1001
    %1003 = vmatprep.subr.mxu0 0.0
    %v1004 = vand.u32 %v68, 4294901760
    %v1005 = vsub.f32 %v68, %v1004
    %1006 = vmatpush1.msra.mxu0 %v1005
    %1007 = vmatprep.subr.mxu0 0.0
    %v1008 = vand.u32 %v69, 4294901760
    %v1009 = vsub.f32 %v69, %v1008
    %1010 = vmatpush1.msra.mxu0 %v1009
    %1011 = vmatprep.subr.mxu0 0.0
    %v1012 = vand.u32 %v70, 4294901760
    %v1013 = vsub.f32 %v70, %v1012
    %1014 = vmatpush1.msra.mxu0 %v1013
    %1015 = vmatprep.subr.mxu0 0.0
    %v1016 = vand.u32 %v71, 4294901760
    %v1017 = vsub.f32 %v71, %v1016
    %1018 = vmatpush1.msra.mxu0 %v1017
    %1019 = vmatprep.subr.mxu0 0.0
    %v1020 = vand.u32 %v72, 4294901760
    %v1021 = vsub.f32 %v72, %v1020
    %1022 = vmatpush1.msra.mxu0 %v1021
    %1023 = vmatprep.subr.mxu0 0.0
    %v1024 = vand.u32 %v73, 4294901760
    %v1025 = vsub.f32 %v73, %v1024
    %1026 = vmatpush1.msra.mxu0 %v1025
    %1027 = vmatprep.subr.mxu0 0.0
    %v1028 = vand.u32 %v74, 4294901760
    %v1029 = vsub.f32 %v74, %v1028
    %1030 = vmatpush1.msra.mxu0 %v1029
    %1031 = vmatprep.subr.mxu0 0.0
    %v1032 = vand.u32 %v75, 4294901760
    %v1033 = vsub.f32 %v75, %v1032
    %1034 = vmatpush1.msra.mxu0 %v1033
    %1035 = vmatprep.subr.mxu0 0.0
    %v1036 = vand.u32 %v76, 4294901760
    %v1037 = vsub.f32 %v76, %v1036
    %1038 = vmatpush1.msra.mxu0 %v1037
    %1039 = vmatprep.subr.mxu0 0.0
    %v1040 = vand.u32 %v77, 4294901760
    %v1041 = vsub.f32 %v77, %v1040
    %1042 = vmatpush1.msra.mxu0 %v1041
    %1043 = vmatprep.subr.mxu0 0.0
    %v1044 = vand.u32 %v78, 4294901760
    %v1045 = vsub.f32 %v78, %v1044
    %1046 = vmatpush1.msra.mxu0 %v1045
    %1047 = vmatprep.subr.mxu0 0.0
    %v1048 = vand.u32 %v79, 4294901760
    %v1049 = vsub.f32 %v79, %v1048
    %1050 = vmatpush1.msra.mxu0 %v1049
    %1051 = vmatprep.subr.mxu0 0.0
    %v1052 = vand.u32 %v80, 4294901760
    %v1053 = vsub.f32 %v80, %v1052
    %1054 = vmatpush1.msra.mxu0 %v1053
    %1055 = vmatprep.subr.mxu0 0.0
    %v1056 = vand.u32 %v81, 4294901760
    %v1057 = vsub.f32 %v81, %v1056
    %1058 = vmatpush1.msra.mxu0 %v1057
    %1059 = vmatprep.subr.mxu0 0.0
    %v1060 = vand.u32 %v82, 4294901760
    %v1061 = vsub.f32 %v82, %v1060
    %1062 = vmatpush1.msra.mxu0 %v1061
    %1063 = vmatprep.subr.mxu0 0.0
    %1064 = vmatpush1.msra.mxu0 0.0
    %1065 = vmatprep.subr.mxu0 0.0
    %1066 = vmatpush1.msra.mxu0 0.0
    %1067 = vmatprep.subr.mxu0 0.0
    %1068 = vmatpush1.msra.mxu0 0.0
    %1069 = vmatprep.subr.mxu0 0.0
    %1070 = vmatpush1.msra.mxu0 0.0
    %1071 = vmatprep.subr.mxu0 0.0
    %1072 = vmatpush1.msra.mxu0 0.0
    %1073 = vmatprep.subr.mxu0 0.0
    %1074 = vmatpush1.msra.mxu0 0.0
    %1075 = vmatprep.subr.mxu0 0.0
    %1076 = vmatpush1.msra.mxu0 0.0
    %1077 = vmatprep.subr.mxu0 0.0
    %1078 = vmatpush1.msra.mxu0 0.0
    %1079 = vmatprep.subr.mxu0 0.0
    %1080 = vmatpush1.msra.mxu0 0.0
    %1081 = vmatprep.subr.mxu0 0.0
    %1082 = vmatpush1.msra.mxu0 0.0
    %1083 = vmatprep.subr.mxu0 0.0
    %1084 = vmatpush1.msra.mxu0 0.0
    %1085 = vmatprep.subr.mxu0 0.0
    %1086 = vmatpush1.msra.mxu0 0.0
    %1087 = vmatprep.subr.mxu0 0.0
    %1088 = vmatpush1.msra.mxu0 0.0
    %1089 = vmatprep.subr.mxu0 0.0
    %1090 = vmatpush1.msra.mxu0 0.0
    %1091 = vmatprep.subr.mxu0 0.0
    %1092 = vmatpush1.msra.mxu0 0.0
    %1093 = vmatprep.subr.mxu0 0.0
    %1094 = vmatpush1.msra.mxu0 0.0
    %1095 = vmatprep.mubr.f32.mxu0 0.0
    %v1096 = vand.u32 %v755, 4294901760
    %v1097 = vsub.f32 %v755, %v1096
    %1098 = vmatmul.mubr.f32.gmra.mrb[0].mxu0 %v1097
    %v1099 = vpop.f32.mrb[0].mxu0
    %v1100 = vadd.f32 %v996, %v1099
    %v1101 = vpop.f32.mrb[0].mxu0
    %1102 = vdwg.mxu0
    %1103 = vmatprep.subr.mxu0 0.0
    %v1104 = vand.u32 %v67, 4294901760
    %1105 = vmatpush1.msra.mxu0 %v1104
    %1106 = vmatprep.subr.mxu0 0.0
    %v1107 = vand.u32 %v68, 4294901760
    %1108 = vmatpush1.msra.mxu0 %v1107
    %1109 = vmatprep.subr.mxu0 0.0
    %v1110 = vand.u32 %v69, 4294901760
    %1111 = vmatpush1.msra.mxu0 %v1110
    %1112 = vmatprep.subr.mxu0 0.0
    %v1113 = vand.u32 %v70, 4294901760
    %1114 = vmatpush1.msra.mxu0 %v1113
    %1115 = vmatprep.subr.mxu0 0.0
    %v1116 = vand.u32 %v71, 4294901760
    %1117 = vmatpush1.msra.mxu0 %v1116
    %1118 = vmatprep.subr.mxu0 0.0
    %v1119 = vand.u32 %v72, 4294901760
    %1120 = vmatpush1.msra.mxu0 %v1119
    %1121 = vmatprep.subr.mxu0 0.0
    %v1122 = vand.u32 %v73, 4294901760
    %1123 = vmatpush1.msra.mxu0 %v1122
    %1124 = vmatprep.subr.mxu0 0.0
    %v1125 = vand.u32 %v74, 4294901760
    %1126 = vmatpush1.msra.mxu0 %v1125
    %1127 = vmatprep.subr.mxu0 0.0
    %v1128 = vand.u32 %v75, 4294901760
    %1129 = vmatpush1.msra.mxu0 %v1128
    %1130 = vmatprep.subr.mxu0 0.0
    %v1131 = vand.u32 %v76, 4294901760
    %1132 = vmatpush1.msra.mxu0 %v1131
    %1133 = vmatprep.subr.mxu0 0.0
    %v1134 = vand.u32 %v77, 4294901760
    %1135 = vmatpush1.msra.mxu0 %v1134
    %1136 = vmatprep.subr.mxu0 0.0
    %v1137 = vand.u32 %v78, 4294901760
    %1138 = vmatpush1.msra.mxu0 %v1137
    %1139 = vmatprep.subr.mxu0 0.0
    %v1140 = vand.u32 %v79, 4294901760
    %1141 = vmatpush1.msra.mxu0 %v1140
    %1142 = vmatprep.subr.mxu0 0.0
    %v1143 = vand.u32 %v80, 4294901760
    %1144 = vmatpush1.msra.mxu0 %v1143
    %1145 = vmatprep.subr.mxu0 0.0
    %v1146 = vand.u32 %v81, 4294901760
    %1147 = vmatpush1.msra.mxu0 %v1146
    %1148 = vmatprep.subr.mxu0 0.0
    %v1149 = vand.u32 %v82, 4294901760
    %1150 = vmatpush1.msra.mxu0 %v1149
    %1151 = vmatprep.subr.mxu0 0.0
    %1152 = vmatpush1.msra.mxu0 0.0
    %1153 = vmatprep.subr.mxu0 0.0
    %1154 = vmatpush1.msra.mxu0 0.0
    %1155 = vmatprep.subr.mxu0 0.0
    %1156 = vmatpush1.msra.mxu0 0.0
    %1157 = vmatprep.subr.mxu0 0.0
    %1158 = vmatpush1.msra.mxu0 0.0
    %1159 = vmatprep.subr.mxu0 0.0
    %1160 = vmatpush1.msra.mxu0 0.0
    %1161 = vmatprep.subr.mxu0 0.0
    %1162 = vmatpush1.msra.mxu0 0.0
    %1163 = vmatprep.subr.mxu0 0.0
    %1164 = vmatpush1.msra.mxu0 0.0
    %1165 = vmatprep.subr.mxu0 0.0
    %1166 = vmatpush1.msra.mxu0 0.0
    %1167 = vmatprep.subr.mxu0 0.0
    %1168 = vmatpush1.msra.mxu0 0.0
    %1169 = vmatprep.subr.mxu0 0.0
    %1170 = vmatpush1.msra.mxu0 0.0
    %1171 = vmatprep.subr.mxu0 0.0
    %1172 = vmatpush1.msra.mxu0 0.0
    %1173 = vmatprep.subr.mxu0 0.0
    %1174 = vmatpush1.msra.mxu0 0.0
    %1175 = vmatprep.subr.mxu0 0.0
    %1176 = vmatpush1.msra.mxu0 0.0
    %1177 = vmatprep.subr.mxu0 0.0
    %1178 = vmatpush1.msra.mxu0 0.0
    %1179 = vmatprep.subr.mxu0 0.0
    %1180 = vmatpush1.msra.mxu0 0.0
    %1181 = vmatprep.subr.mxu0 0.0
    %1182 = vmatpush1.msra.mxu0 0.0
    %1183 = vmatprep.mubr.f32.mxu0 0.0
    %v1184 = vand.u32 %v755, 4294901760
    %v1185 = vsub.f32 %v755, %v1184
    %v1186 = vand.u32 %v1185, 4294901760
    %1187 = vmatmul.mubr.f32.gmra.mrb[0].mxu0 %v1186
    %v1188 = vpop.f32.mrb[0].mxu0
    %v1189 = vadd.f32 %v1100, %v1188
    %v1190 = vpop.f32.mrb[0].mxu0
    %1191 = vdwg.mxu0
    %1192 = vmatprep.subr.mxu0 0.0
    %v1193 = vand.u32 %v67, 4294901760
    %v1194 = vsub.f32 %v67, %v1193
    %v1195 = vand.u32 %v1194, 4294901760
    %1196 = vmatpush1.msra.mxu0 %v1195
    %1197 = vmatprep.subr.mxu0 0.0
    %v1198 = vand.u32 %v68, 4294901760
    %v1199 = vsub.f32 %v68, %v1198
    %v1200 = vand.u32 %v1199, 4294901760
    %1201 = vmatpush1.msra.mxu0 %v1200
    %1202 = vmatprep.subr.mxu0 0.0
    %v1203 = vand.u32 %v69, 4294901760
    %v1204 = vsub.f32 %v69, %v1203
    %v1205 = vand.u32 %v1204, 4294901760
    %1206 = vmatpush1.msra.mxu0 %v1205
    %1207 = vmatprep.subr.mxu0 0.0
    %v1208 = vand.u32 %v70, 4294901760
    %v1209 = vsub.f32 %v70, %v1208
    %v1210 = vand.u32 %v1209, 4294901760
    %1211 = vmatpush1.msra.mxu0 %v1210
    %1212 = vmatprep.subr.mxu0 0.0
    %v1213 = vand.u32 %v71, 4294901760
    %v1214 = vsub.f32 %v71, %v1213
    %v1215 = vand.u32 %v1214, 4294901760
    %1216 = vmatpush1.msra.mxu0 %v1215
    %1217 = vmatprep.subr.mxu0 0.0
    %v1218 = vand.u32 %v72, 4294901760
    %v1219 = vsub.f32 %v72, %v1218
    %v1220 = vand.u32 %v1219, 4294901760
    %1221 = vmatpush1.msra.mxu0 %v1220
    %1222 = vmatprep.subr.mxu0 0.0
    %v1223 = vand.u32 %v73, 4294901760
    %v1224 = vsub.f32 %v73, %v1223
    %v1225 = vand.u32 %v1224, 4294901760
    %1226 = vmatpush1.msra.mxu0 %v1225
    %1227 = vmatprep.subr.mxu0 0.0
    %v1228 = vand.u32 %v74, 4294901760
    %v1229 = vsub.f32 %v74, %v1228
    %v1230 = vand.u32 %v1229, 4294901760
    %1231 = vmatpush1.msra.mxu0 %v1230
    %1232 = vmatprep.subr.mxu0 0.0
    %v1233 = vand.u32 %v75, 4294901760
    %v1234 = vsub.f32 %v75, %v1233
    %v1235 = vand.u32 %v1234, 4294901760
    %1236 = vmatpush1.msra.mxu0 %v1235
    %1237 = vmatprep.subr.mxu0 0.0
    %v1238 = vand.u32 %v76, 4294901760
    %v1239 = vsub.f32 %v76, %v1238
    %v1240 = vand.u32 %v1239, 4294901760
    %1241 = vmatpush1.msra.mxu0 %v1240
    %1242 = vmatprep.subr.mxu0 0.0
    %v1243 = vand.u32 %v77, 4294901760
    %v1244 = vsub.f32 %v77, %v1243
    %v1245 = vand.u32 %v1244, 4294901760
    %1246 = vmatpush1.msra.mxu0 %v1245
    %1247 = vmatprep.subr.mxu0 0.0
    %v1248 = vand.u32 %v78, 4294901760
    %v1249 = vsub.f32 %v78, %v1248
    %v1250 = vand.u32 %v1249, 4294901760
    %1251 = vmatpush1.msra.mxu0 %v1250
    %1252 = vmatprep.subr.mxu0 0.0
    %v1253 = vand.u32 %v79, 4294901760
    %v1254 = vsub.f32 %v79, %v1253
    %v1255 = vand.u32 %v1254, 4294901760
    %1256 = vmatpush1.msra.mxu0 %v1255
    %1257 = vmatprep.subr.mxu0 0.0
    %v1258 = vand.u32 %v80, 4294901760
    %v1259 = vsub.f32 %v80, %v1258
    %v1260 = vand.u32 %v1259, 4294901760
    %1261 = vmatpush1.msra.mxu0 %v1260
    %1262 = vmatprep.subr.mxu0 0.0
    %v1263 = vand.u32 %v81, 4294901760
    %v1264 = vsub.f32 %v81, %v1263
    %v1265 = vand.u32 %v1264, 4294901760
    %1266 = vmatpush1.msra.mxu0 %v1265
    %1267 = vmatprep.subr.mxu0 0.0
    %v1268 = vand.u32 %v82, 4294901760
    %v1269 = vsub.f32 %v82, %v1268
    %v1270 = vand.u32 %v1269, 4294901760
    %1271 = vmatpush1.msra.mxu0 %v1270
    %1272 = vmatprep.subr.mxu0 0.0
    %1273 = vmatpush1.msra.mxu0 0.0
    %1274 = vmatprep.subr.mxu0 0.0
    %1275 = vmatpush1.msra.mxu0 0.0
    %1276 = vmatprep.subr.mxu0 0.0
    %1277 = vmatpush1.msra.mxu0 0.0
    %1278 = vmatprep.subr.mxu0 0.0
    %1279 = vmatpush1.msra.mxu0 0.0
    %1280 = vmatprep.subr.mxu0 0.0
    %1281 = vmatpush1.msra.mxu0 0.0
    %1282 = vmatprep.subr.mxu0 0.0
    %1283 = vmatpush1.msra.mxu0 0.0
    %1284 = vmatprep.subr.mxu0 0.0
    %1285 = vmatpush1.msra.mxu0 0.0
    %1286 = vmatprep.subr.mxu0 0.0
    %1287 = vmatpush1.msra.mxu0 0.0
    %1288 = vmatprep.subr.mxu0 0.0
    %1289 = vmatpush1.msra.mxu0 0.0
    %1290 = vmatprep.subr.mxu0 0.0
    %1291 = vmatpush1.msra.mxu0 0.0
    %1292 = vmatprep.subr.mxu0 0.0
    %1293 = vmatpush1.msra.mxu0 0.0
    %1294 = vmatprep.subr.mxu0 0.0
    %1295 = vmatpush1.msra.mxu0 0.0
    %1296 = vmatprep.subr.mxu0 0.0
    %1297 = vmatpush1.msra.mxu0 0.0
    %1298 = vmatprep.subr.mxu0 0.0
    %1299 = vmatpush1.msra.mxu0 0.0
    %1300 = vmatprep.subr.mxu0 0.0
    %1301 = vmatpush1.msra.mxu0 0.0
    %1302 = vmatprep.subr.mxu0 0.0
    %1303 = vmatpush1.msra.mxu0 0.0
    %1304 = vmatprep.mubr.f32.mxu0 0.0
    %v1305 = vand.u32 %v755, 4294901760
    %1306 = vmatmul.mubr.f32.gmra.mrb[0].mxu0 %v1305
    %v1307 = vpop.f32.mrb[0].mxu0
    %v1308 = vadd.f32 %v1189, %v1307
    %v1309 = vpop.f32.mrb[0].mxu0
    %1310 = vdwg.mxu0
    %1311 = vmatprep.subr.mxu0 0.0
    %v1312 = vand.u32 %v67, 4294901760
    %1313 = vmatpush1.msra.mxu0 %v1312
    %1314 = vmatprep.subr.mxu0 0.0
    %v1315 = vand.u32 %v68, 4294901760
    %1316 = vmatpush1.msra.mxu0 %v1315
    %1317 = vmatprep.subr.mxu0 0.0
    %v1318 = vand.u32 %v69, 4294901760
    %1319 = vmatpush1.msra.mxu0 %v1318
    %1320 = vmatprep.subr.mxu0 0.0
    %v1321 = vand.u32 %v70, 4294901760
    %1322 = vmatpush1.msra.mxu0 %v1321
    %1323 = vmatprep.subr.mxu0 0.0
    %v1324 = vand.u32 %v71, 4294901760
    %1325 = vmatpush1.msra.mxu0 %v1324
    %1326 = vmatprep.subr.mxu0 0.0
    %v1327 = vand.u32 %v72, 4294901760
    %1328 = vmatpush1.msra.mxu0 %v1327
    %1329 = vmatprep.subr.mxu0 0.0
    %v1330 = vand.u32 %v73, 4294901760
    %1331 = vmatpush1.msra.mxu0 %v1330
    %1332 = vmatprep.subr.mxu0 0.0
    %v1333 = vand.u32 %v74, 4294901760
    %1334 = vmatpush1.msra.mxu0 %v1333
    %1335 = vmatprep.subr.mxu0 0.0
    %v1336 = vand.u32 %v75, 4294901760
    %1337 = vmatpush1.msra.mxu0 %v1336
    %1338 = vmatprep.subr.mxu0 0.0
    %v1339 = vand.u32 %v76, 4294901760
    %1340 = vmatpush1.msra.mxu0 %v1339
    %1341 = vmatprep.subr.mxu0 0.0
    %v1342 = vand.u32 %v77, 4294901760
    %1343 = vmatpush1.msra.mxu0 %v1342
    %1344 = vmatprep.subr.mxu0 0.0
    %v1345 = vand.u32 %v78, 4294901760
    %1346 = vmatpush1.msra.mxu0 %v1345
    %1347 = vmatprep.subr.mxu0 0.0
    %v1348 = vand.u32 %v79, 4294901760
    %1349 = vmatpush1.msra.mxu0 %v1348
    %1350 = vmatprep.subr.mxu0 0.0
    %v1351 = vand.u32 %v80, 4294901760
    %1352 = vmatpush1.msra.mxu0 %v1351
    %1353 = vmatprep.subr.mxu0 0.0
    %v1354 = vand.u32 %v81, 4294901760
    %1355 = vmatpush1.msra.mxu0 %v1354
    %1356 = vmatprep.subr.mxu0 0.0
    %v1357 = vand.u32 %v82, 4294901760
    %1358 = vmatpush1.msra.mxu0 %v1357
    %1359 = vmatprep.subr.mxu0 0.0
    %1360 = vmatpush1.msra.mxu0 0.0
    %1361 = vmatprep.subr.mxu0 0.0
    %1362 = vmatpush1.msra.mxu0 0.0
    %1363 = vmatprep.subr.mxu0 0.0
    %1364 = vmatpush1.msra.mxu0 0.0
    %1365 = vmatprep.subr.mxu0 0.0
    %1366 = vmatpush1.msra.mxu0 0.0
    %1367 = vmatprep.subr.mxu0 0.0
    %1368 = vmatpush1.msra.mxu0 0.0
    %1369 = vmatprep.subr.mxu0 0.0
    %1370 = vmatpush1.msra.mxu0 0.0
    %1371 = vmatprep.subr.mxu0 0.0
    %1372 = vmatpush1.msra.mxu0 0.0
    %1373 = vmatprep.subr.mxu0 0.0
    %1374 = vmatpush1.msra.mxu0 0.0
    %1375 = vmatprep.subr.mxu0 0.0
    %1376 = vmatpush1.msra.mxu0 0.0
    %1377 = vmatprep.subr.mxu0 0.0
    %1378 = vmatpush1.msra.mxu0 0.0
    %1379 = vmatprep.subr.mxu0 0.0
    %1380 = vmatpush1.msra.mxu0 0.0
    %1381 = vmatprep.subr.mxu0 0.0
    %1382 = vmatpush1.msra.mxu0 0.0
    %1383 = vmatprep.subr.mxu0 0.0
    %1384 = vmatpush1.msra.mxu0 0.0
    %1385 = vmatprep.subr.mxu0 0.0
    %1386 = vmatpush1.msra.mxu0 0.0
    %1387 = vmatprep.subr.mxu0 0.0
    %1388 = vmatpush1.msra.mxu0 0.0
    %1389 = vmatprep.subr.mxu0 0.0
    %1390 = vmatpush1.msra.mxu0 0.0
    %1391 = vmatprep.mubr.f32.mxu0 0.0
    %v1392 = vand.u32 %v755, 4294901760
    %1393 = vmatmul.mubr.f32.gmra.mrb[0].mxu0 %v1392
    %v1394 = vpop.f32.mrb[0].mxu0
    %v1395 = vadd.f32 %v1308, %v1394
    %v1396 = vpop.f32.mrb[0].mxu0
    %1397 = vdwg.mxu0
    %v1400 = vunpack.c.l.s4 1966171168
    %v1401 = vunpack.c.0.s8 %v1400
    %v1402 = vlaneseq
    %v1403 = vshrl.u32 %v1402, 7
    %v1404 = vsub.s32 %v1401, %v1403
    %v1405 = vrot.slane %v1395, %v1404
    %v1406 = vcombine.high %v1405, %v1405
    %v1408 = vunpack.c.l.s4 1966171168
    %v1409 = vunpack.c.0.s8 %v1408
    %v1410 = vlaneseq
    %v1411 = vshrl.u32 %v1410, 7
    %v1412 = vsub.s32 %v1409, %v1411
    %v1413 = vrot.slane %v1405, %v1412
    %v1415 = vunpack.c.l.s4 1966171168
    %v1416 = vunpack.c.0.s8 %v1415
    %v1417 = vlaneseq
    %v1418 = vshrl.u32 %v1417, 7
    %v1419 = vsub.s32 %v1416, %v1418
    %v1420 = vrot.slane %v1406, %v1419
    %v1423 = vmul.f32 %v49, %v1413
    %v1424 = vmul.f32 %v50, %v1420
    %v1425 = vmul.f32 %v55, %v51
    %v1426 = vmul.f32 %v56, %v52
    %1427 = vst [vmem:[#allocation7] sm:$0x1] %v1423
    %1428 = vst [vmem:[#allocation7 + $0x4] sm:$0x1] %v1424
    %v1429 = vsub.f32 %v53, %v1423
    %v1430 = vsub.f32 %v54, %v1424
    %1431 = vst [vmem:[#allocation7 + $0x1] sm:$0x1] %v1429
    %1432 = vst [vmem:[#allocation7 + $0x5] sm:$0x1] %v1430
    %v1433 = vadd.f32 %v55, %v1423
    %v1434 = vadd.f32 %v56, %v1424
    %v1435 = vsub.f32 %v1433, %v1425
    %v1436 = vsub.f32 %v1434, %v1426
    %1437 = vst [vmem:[#allocation7 + $0x2] sm:$0x1] %v1435
    %1438 = vst [vmem:[#allocation7 + $0x6] sm:$0x1] %v1436
    %v1439 = vadd.f32 %v1425, %v57
    %v1440 = vadd.f32 %v1426, %v58
    %1441 = vst [vmem:[#allocation7 + $0x3] sm:$0x1] %v1439
    %1442 = vst [vmem:[#allocation7 + $0x7] sm:$0x1] %v1440
    // Predicated region
    $region30: #{tpu_custom_call.1} parent=1 // pred_check
      _
    $region31: #{tpu_custom_call.1} parent=1 // pred_check_branch
      %1444 = sbr.rel (0) target = $region33
    $region32: #{tpu_custom_call.1} parent=1 // pred_region
      %s1446 = ssub.s32 128, 128
      %1447 = vsyncadd [#allocation4], %s1446
      %s1448 = sshll.u32 [#allocation7], 4
      %s1449 = int_to_ptr.vmem [resolvable:$true] %s1448
      %1454 = dma.vmem_to_hbm [thread:$0]  %s1449, 128, %s5, [#allocation4], 64, 64, 4
    $region33: #{tpu_custom_call.1} parent=1 // pred_fallthru
      _
    // Predicated region
    $region34: #{tpu_custom_call.1} parent=1 // pred_check
      _
    $region35: #{tpu_custom_call.1} parent=1 // pred_check_branch
      %1456 = sbr.rel (0) target = $region37
    $region36: #{tpu_custom_call.1} parent=1 // pred_region
      %1457 = dma.done [#allocation4], 128
    $region37: #{tpu_custom_call.1} parent=1 // pred_fallthru
      _
    %1458 = vsyncpa [#allocation3], 1
    %1459 = vsyncpa [#allocation6], 1
    %1460 = vsyncpa [#allocation4], 1

</llo_original>
